<compile_context>
chip_gen: v7x
topology: tpu7x:2x2x1
jax: 0.10.0
libtpu: 0.0.40
codegen_flags: <defaults>
</compile_context>

<pallas_src>
import math

import jax
import jax.numpy as jnp
from jax.experimental import pallas as pl
from jax.experimental.pallas import tpu as pltpu


# ----------------------------- glue (static) -----------------------------

def _bilinear_1d_matrix(in_size: int, out_size: int) -> jnp.ndarray:
    """1-D bilinear resize (PyTorch align_corners=False) as an (out, in) matrix."""
    o = jnp.arange(out_size, dtype=jnp.float32)
    scale = in_size / out_size
    src = (o + 0.5) * scale - 0.5
    src = jnp.maximum(src, 0.0)
    i0 = jnp.floor(src)
    w1 = src - i0
    i0 = jnp.minimum(i0.astype(jnp.int32), in_size - 1)
    i1 = jnp.minimum(i0 + 1, in_size - 1)
    m = jnp.zeros((out_size, in_size), dtype=jnp.float32)
    rows = jnp.arange(out_size)
    m = m.at[rows, i0].add(1.0 - w1)
    m = m.at[rows, i1].add(w1)
    return m


def _resize_matrix(in_size: int, out_size: int) -> jnp.ndarray:
    """Dense 2-D bilinear resize matrix (used only by the reference check)."""
    m1d = _bilinear_1d_matrix(in_size, out_size)
    return jnp.kron(m1d, m1d)


# ----------------------------- fused Pallas kernel -----------------------------

def _make_fused_kernel(sizes, T, F):
    """Kernel for one batch element: 4 groups, folded weights, separable resize."""

    def kernel(x0_ref, x1_ref, x2_ref, x3_ref,
               w0_ref, w1_ref, w2_ref, w3_ref,
               m0_ref, m1_ref, m2_ref, m3_ref,
               bias_ref, out_ref):
        x_refs = (x0_ref, x1_ref, x2_ref, x3_ref)
        w_refs = (w0_ref, w1_ref, w2_ref, w3_ref)
        m_refs = (m0_ref, m1_ref, m2_ref, m3_ref)

        acc = jnp.zeros((T, T * F), jnp.float32)
        for g in range(4):                                   # static unroll (4 groups)
            s = sizes[g]
            x = x_refs[g][0].astype(jnp.bfloat16)            # (s*s, C_g)
            w = w_refs[g][...]                               # (C_g, F)  bf16 (folded)
            m = m_refs[g][...]                               # (T, s)    bf16

            # 1x1-conv projection + fuse 1x1 conv + BN scale, all folded into w.
            p = jnp.dot(x, w, preferred_element_type=jnp.float32)          # (s*s, F)

            # Separable bilinear resize: width (s2) via batched matmul, then
            # height (s1) via a plain matmul producing a lane-dense (T, T*F) slab.
            p3 = p.reshape(s, s, F).astype(jnp.bfloat16)                    # (s1, s2, F)
            mb = jnp.broadcast_to(m[None, :, :], (s, T, s))                 # (s1, T, s2)
            d = jnp.einsum("bts,bsf->btf", mb, p3,
                           preferred_element_type=jnp.float32)              # (s1, T, F)
            d2 = d.reshape(s, T * F).astype(jnp.bfloat16)                   # (s1, T*F)
            acc = acc + jnp.dot(m, d2, preferred_element_type=jnp.float32)  # (T, T*F)

        y = acc + bias_ref[...]                    # folded BatchNorm bias (eval mode)
        out_ref[0] = jnp.maximum(y, 0.0)           # ReLU

    return kernel


# ----------------------------- module wrapper -----------------------------

class UpsampleFeature:
    def __init__(self, feature_dim, feature_dims, hidden_dim=256, key=None):
        assert len(feature_dims) == 4, "only support 4 groups of features"
        # torch's final .view(B, C, T*T) only works when feature_dim == feature_dims[-1]
        self.feature_dim = feature_dim
        self.hidden_dim = hidden_dim
        self.feature_dims = tuple(feature_dims)
        key = jax.random.PRNGKey(0) if key is None else key
        keys = jax.random.split(key, 8)

        # --- original (unfolded) parameters, kept in f32 for the reference path ---
        self.proj_weights = []        # (C_i, H) channels-last, or None if no proj
        self.flag_list = []
        for i, dim in enumerate(self.feature_dims):
            if dim != hidden_dim:
                wc = jax.random.normal(keys[i], (hidden_dim, dim), jnp.float32)
                wc = wc * (1.0 / math.sqrt(dim))
                self.proj_weights.append(wc.T)               # (dim, hidden)
                self.flag_list.append(1)
            else:
                self.proj_weights.append(None)               # skip identity matmul
                self.flag_list.append(0)

        # fuse conv weight: (feature_dim, 4*hidden, 1, 1) -> (4*hidden, feature_dim)
        wf = jax.random.normal(keys[4], (feature_dim, 4 * hidden_dim), jnp.float32)
        self.fuse_weight = (wf * (1.0 / math.sqrt(4 * hidden_dim))).T

        # BatchNorm2d(feature_dim), eval mode, folded into per-channel scale/bias.
        gamma = 1.0 + 0.1 * jax.random.normal(keys[5], (feature_dim,), jnp.float32)
        beta = 0.1 * jax.random.normal(keys[6], (feature_dim,), jnp.float32)
        running_mean = 0.1 * jax.random.normal(keys[7], (feature_dim,), jnp.float32)
        running_var = jnp.ones((feature_dim,), jnp.float32)
        eps = 1e-5
        inv = gamma / jnp.sqrt(running_var + eps)
        self.bn_scale = inv                                   # (F,)
        self.bn_bias = beta - running_mean * inv              # (F,)

        # --- folded per-group weights: proj @ fuse-block, scaled by BN (bf16) ---
        H, F = hidden_dim, feature_dim
        self.w_folded = []                                    # each (C_i, F) bf16
        for i in range(4):
            wf_blk = self.fuse_weight[i * H:(i + 1) * H, :]   # (H, F)
            if self.flag_list[i]:
                w = self.proj_weights[i] @ wf_blk             # (C_i, F)
            else:
                w = wf_blk                                    # C_i == H, no projection
            self.w_folded.append((w * self.bn_scale[None, :]).astype(jnp.bfloat16))

    def __call__(self, feature_list):
        assert len(feature_list) == 4
        B = feature_list[0].shape[0]
        F = self.feature_dim
        L0 = feature_list[0].shape[1]
        T = int(math.sqrt(L0))
        assert T * T == L0, "token count of feature_list[0] must be a perfect square"

        sizes, m_list = [], []
        for g, feat in enumerate(feature_list):
            L, C = feat.shape[1], feat.shape[2]
            assert C == self.feature_dims[g]
            s = int(math.sqrt(L))
            assert s * s == L, "token counts must be perfect squares"
            sizes.append(s)
            # 1-D bilinear matrix; entries are exact in bf16 for power-of-two scales.
            m_list.append(_bilinear_1d_matrix(s, T).astype(jnp.bfloat16))
        sizes = tuple(sizes)

        bias_tiled = jnp.tile(self.bn_bias.reshape(1, F), (1, T))   # (1, T*F)

        in_specs = []
        for g in range(4):
            L = sizes[g] * sizes[g]
            C = self.feature_dims[g]
            in_specs.append(pl.BlockSpec((1, L, C), lambda b: (b, 0, 0)))
        for g in range(4):
            in_specs.append(pl.BlockSpec((self.feature_dims[g], F), lambda b: (0, 0)))
        for g in range(4):
            in_specs.append(pl.BlockSpec((T, sizes[g]), lambda b: (0, 0)))
        in_specs.append(pl.BlockSpec((1, T * F), lambda b: (0, 0)))

        out = pl.pallas_call(
            _make_fused_kernel(sizes, T, F),
            out_shape=jax.ShapeDtypeStruct((B, T, T * F), jnp.float32),
            grid=(B,),
            in_specs=in_specs,
            out_specs=pl.BlockSpec((1, T, T * F), lambda b: (b, 0, 0)),
            compiler_params=pltpu.CompilerParams(
                dimension_semantics=("parallel",)),
        )(*feature_list, *self.w_folded, *m_list, bias_tiled)

        # TODO(synk): nn.Dropout(0.1) is identity in eval mode; training-mode
        # stochastic dropout is not implemented here.
        # Lane-dense (B, T, T*F) slab -> (B, T*T, F), matching torch's
        # .view(B, C, T*T).permute(0, 2, 1).
        return out.reshape(B, T * T, F)


# ----------------------------- main -----------------------------

if __name__ == "__main__":
    key = jax.random.PRNGKey(0)
    B = 2
    hidden_dim = 32
    feature_dims = (16, 24, 32, 32)     # flags -> [1, 1, 0, 0]
    feature_dim = 32                    # == feature_dims[-1] (required by torch .view)
    sizes = (16, 8, 8, 4)               # spatial sizes; target = 16

    k_in, k_param = jax.random.split(key)
    in_keys = jax.random.split(k_in, 4)
    feature_list = [
        jax.random.normal(in_keys[i], (B, sizes[i] ** 2, feature_dims[i]), jnp.float32)
        for i in range(4)
    ]

    mod = UpsampleFeature(feature_dim, feature_dims, hidden_dim=hidden_dim, key=k_param)
    out = jax.block_until_ready(mod(feature_list))
    T = sizes[0]
    assert out.shape == (B, T * T, feature_dim), out.shape

    # Reference 1: same math path (folded bf16 weights, separable resize with the
    # same intermediate bf16 roundings) -> tight tolerance.
    def ref_matched(feats):
        acc = 0.0
        for g, feat in enumerate(feats):
            s = int(math.sqrt(feat.shape[1]))
            m = _bilinear_1d_matrix(s, T).astype(jnp.bfloat16)
            xb = feat.astype(jnp.bfloat16)
            w = mod.w_folded[g]
            p = jnp.einsum("blc,cf->blf", xb, w,
                           preferred_element_type=jnp.float32)
            p4 = p.reshape(B, s, s, feature_dim).astype(jnp.bfloat16)
            d = jnp.einsum("ts,bvsf->bvtf", m, p4,
                           preferred_element_type=jnp.float32)
            d = d.astype(jnp.bfloat16)
            o = jnp.einsum("us,bstf->butf", m, d,
                           preferred_element_type=jnp.float32)
            acc = acc + o
        y = acc + mod.bn_bias.reshape(1, 1, 1, -1)
        return jnp.maximum(y, 0.0).reshape(B, T * T, feature_dim)

    # Reference 2: independent f32 path with the ORIGINAL (unfolded) weights and
    # the dense Kronecker resize -> loose tolerance (bf16 slack), validates the
    # weight folding and the separable-resize derivation.
    def ref_unfolded(feats):
        parts = []
        for g, feat in enumerate(feats):
            s = int(math.sqrt(feat.shape[1]))
            x = feat
            if mod.flag_list[g]:
                x = jnp.einsum("blc,ch->blh", x, mod.proj_weights[g])
            r = _resize_matrix(s, T)
            parts.append(jnp.einsum("tl,blh->bth", r, x))
        z = jnp.concatenate(parts, axis=-1)                    # (B, T*T, 4H)
        y = jnp.einsum("btc,cf->btf", z, mod.fuse_weight)
        y = y * mod.bn_scale.reshape(1, 1, -1) + mod.bn_bias.reshape(1, 1, -1)
        return jnp.maximum(y, 0.0)

    ref1 = ref_matched(feature_list)
    ref2 = ref_unfolded(feature_list)
    err1 = float(jnp.max(jnp.abs(out - ref1)))
    err2 = float(jnp.max(jnp.abs(out - ref2)))
    assert jnp.allclose(out, ref1, atol=2e-3, rtol=2e-3), err1
    assert jnp.allclose(out, ref2, atol=1e-1, rtol=1e-1), err2
    print("KERNEL_OK")
</pallas_src>

<mosaic_0001>
module attributes {stable_mosaic.version = 11 : i64} {
  func.func @kernel(%arg0: i32, %arg1: memref<1x256x16xf32, #tpu.memory_space<vmem>>, %arg2: memref<1x64x24xf32, #tpu.memory_space<vmem>>, %arg3: memref<1x64x32xf32, #tpu.memory_space<vmem>>, %arg4: memref<1x16x32xf32, #tpu.memory_space<vmem>>, %arg5: memref<16x32xbf16, #tpu.memory_space<vmem>>, %arg6: memref<24x32xbf16, #tpu.memory_space<vmem>>, %arg7: memref<32x32xbf16, #tpu.memory_space<vmem>>, %arg8: memref<32x32xbf16, #tpu.memory_space<vmem>>, %arg9: memref<16x16xbf16, #tpu.memory_space<vmem>>, %arg10: memref<16x8xbf16, #tpu.memory_space<vmem>>, %arg11: memref<16x8xbf16, #tpu.memory_space<vmem>>, %arg12: memref<16x4xbf16, #tpu.memory_space<vmem>>, %arg13: memref<1x512xf32, #tpu.memory_space<vmem>>, %arg14: memref<1x16x512xf32, #tpu.memory_space<vmem>>) attributes {dimension_semantics = [#tpu.dimension_semantics<parallel>], iteration_bounds = array<i64: 2>, scalar_prefetch = 0 : i64, scratch_operands = 0 : i64, tpu.core_type = #tpu.core_type<tc>, window_params = [{transform_indices = @transform_0, window_bounds = array<i64: 1, 256, 16>}, {transform_indices = @transform_1, window_bounds = array<i64: 1, 64, 24>}, {transform_indices = @transform_2, window_bounds = array<i64: 1, 64, 32>}, {transform_indices = @transform_3, window_bounds = array<i64: 1, 16, 32>}, {pipeline_mode = #tpu.pipeline_mode<synchronous>, transform_indices = @transform_4, window_bounds = array<i64: 16, 32>}, {pipeline_mode = #tpu.pipeline_mode<synchronous>, transform_indices = @transform_5, window_bounds = array<i64: 24, 32>}, {pipeline_mode = #tpu.pipeline_mode<synchronous>, transform_indices = @transform_6, window_bounds = array<i64: 32, 32>}, {pipeline_mode = #tpu.pipeline_mode<synchronous>, transform_indices = @transform_7, window_bounds = array<i64: 32, 32>}, {pipeline_mode = #tpu.pipeline_mode<synchronous>, transform_indices = @transform_8, window_bounds = array<i64: 16, 16>}, {pipeline_mode = #tpu.pipeline_mode<synchronous>, transform_indices = @transform_9, window_bounds = array<i64: 16, 8>}, {pipeline_mode = #tpu.pipeline_mode<synchronous>, transform_indices = @transform_10, window_bounds = array<i64: 16, 8>}, {pipeline_mode = #tpu.pipeline_mode<synchronous>, transform_indices = @transform_11, window_bounds = array<i64: 16, 4>}, {pipeline_mode = #tpu.pipeline_mode<synchronous>, transform_indices = @transform_12, window_bounds = array<i64: 1, 512>}, {transform_indices = @transform_13, window_bounds = array<i64: 1, 16, 512>}]} {
    %cst = arith.constant 0.000000e+00 : f32
    %0 = vector.broadcast %cst : f32 to vector<16x512xf32>
    %c0 = arith.constant 0 : index
    %c0_0 = arith.constant 0 : index
    %c0_1 = arith.constant 0 : index
    %1 = vector.load %arg1[%c0, %c0_0, %c0_1] : memref<1x256x16xf32, #tpu.memory_space<vmem>>, vector<1x256x16xf32>
    %2 = vector.shape_cast %1 : vector<1x256x16xf32> to vector<256x16xf32>
    %3 = arith.truncf %2 : vector<256x16xf32> to vector<256x16xbf16>
    %c0_2 = arith.constant 0 : index
    %c0_3 = arith.constant 0 : index
    %4 = vector.load %arg5[%c0_2, %c0_3] : memref<16x32xbf16, #tpu.memory_space<vmem>>, vector<16x32xbf16>
    %c0_4 = arith.constant 0 : index
    %c0_5 = arith.constant 0 : index
    %5 = vector.load %arg9[%c0_4, %c0_5] : memref<16x16xbf16, #tpu.memory_space<vmem>>, vector<16x16xbf16>
    %cst_6 = arith.constant dense<0.000000e+00> : vector<256x32xf32>
    %6 = tpu.matmul %3, %4, %cst_6 {dimension_numbers = #tpu.dot_dimension_numbers<[1], [0], [0], [1], [0, 0, 1, 1], [], []>} : vector<256x16xbf16>, vector<16x32xbf16>, vector<256x32xf32> -> vector<256x32xf32>
    %7 = vector.shape_cast %6 : vector<256x32xf32> to vector<16x16x32xf32>
    %8 = arith.truncf %7 : vector<16x16x32xf32> to vector<16x16x32xbf16>
    %9 = vector.shape_cast %5 : vector<16x16xbf16> to vector<1x16x16xbf16>
    %10 = vector.shape_cast %9 : vector<1x16x16xbf16> to vector<1x16x16xbf16>
    %11 = vector.broadcast %10 : vector<1x16x16xbf16> to vector<16x16x16xbf16>
    "tpu.trace_start"() <{level = 10 : i32, message = "bts,bsf->btf"}> : () -> ()
    %cst_7 = arith.constant dense<0.000000e+00> : vector<16x16x32xf32>
    %12 = tpu.matmul %11, %8, %cst_7 {dimension_numbers = #tpu.dot_dimension_numbers<[2], [1], [1], [2], [0, 0, 0, 1, 1, 2], [0], [0]>} : vector<16x16x16xbf16>, vector<16x16x32xbf16>, vector<16x16x32xf32> -> vector<16x16x32xf32>
    "tpu.trace_stop"() : () -> ()
    %13 = vector.shape_cast %12 : vector<16x16x32xf32> to vector<16x512xf32>
    %14 = arith.truncf %13 : vector<16x512xf32> to vector<16x512xbf16>
    %cst_8 = arith.constant dense<0.000000e+00> : vector<16x512xf32>
    %15 = tpu.matmul %5, %14, %cst_8 {dimension_numbers = #tpu.dot_dimension_numbers<[1], [0], [0], [1], [0, 0, 1, 1], [], []>} : vector<16x16xbf16>, vector<16x512xbf16>, vector<16x512xf32> -> vector<16x512xf32>
    %16 = arith.addf %0, %15 : vector<16x512xf32>
    %c0_9 = arith.constant 0 : index
    %c0_10 = arith.constant 0 : index
    %c0_11 = arith.constant 0 : index
    %17 = vector.load %arg2[%c0_9, %c0_10, %c0_11] : memref<1x64x24xf32, #tpu.memory_space<vmem>>, vector<1x64x24xf32>
    %18 = vector.shape_cast %17 : vector<1x64x24xf32> to vector<64x24xf32>
    %19 = arith.truncf %18 : vector<64x24xf32> to vector<64x24xbf16>
    %c0_12 = arith.constant 0 : index
    %c0_13 = arith.constant 0 : index
    %20 = vector.load %arg6[%c0_12, %c0_13] : memref<24x32xbf16, #tpu.memory_space<vmem>>, vector<24x32xbf16>
    %c0_14 = arith.constant 0 : index
    %c0_15 = arith.constant 0 : index
    %21 = vector.load %arg10[%c0_14, %c0_15] : memref<16x8xbf16, #tpu.memory_space<vmem>>, vector<16x8xbf16>
    %cst_16 = arith.constant dense<0.000000e+00> : vector<64x32xf32>
    %22 = tpu.matmul %19, %20, %cst_16 {dimension_numbers = #tpu.dot_dimension_numbers<[1], [0], [0], [1], [0, 0, 1, 1], [], []>} : vector<64x24xbf16>, vector<24x32xbf16>, vector<64x32xf32> -> vector<64x32xf32>
    %23 = vector.shape_cast %22 : vector<64x32xf32> to vector<8x8x32xf32>
    %24 = arith.truncf %23 : vector<8x8x32xf32> to vector<8x8x32xbf16>
    %25 = vector.shape_cast %21 : vector<16x8xbf16> to vector<1x16x8xbf16>
    %26 = vector.shape_cast %25 : vector<1x16x8xbf16> to vector<1x16x8xbf16>
    %27 = vector.broadcast %26 : vector<1x16x8xbf16> to vector<8x16x8xbf16>
    "tpu.trace_start"() <{level = 10 : i32, message = "bts,bsf->btf"}> : () -> ()
    %cst_17 = arith.constant dense<0.000000e+00> : vector<8x16x32xf32>
    %28 = tpu.matmul %27, %24, %cst_17 {dimension_numbers = #tpu.dot_dimension_numbers<[2], [1], [1], [2], [0, 0, 0, 1, 1, 2], [0], [0]>} : vector<8x16x8xbf16>, vector<8x8x32xbf16>, vector<8x16x32xf32> -> vector<8x16x32xf32>
    "tpu.trace_stop"() : () -> ()
    %29 = vector.shape_cast %28 : vector<8x16x32xf32> to vector<8x512xf32>
    %30 = arith.truncf %29 : vector<8x512xf32> to vector<8x512xbf16>
    %cst_18 = arith.constant dense<0.000000e+00> : vector<16x512xf32>
    %31 = tpu.matmul %21, %30, %cst_18 {dimension_numbers = #tpu.dot_dimension_numbers<[1], [0], [0], [1], [0, 0, 1, 1], [], []>} : vector<16x8xbf16>, vector<8x512xbf16>, vector<16x512xf32> -> vector<16x512xf32>
    %32 = arith.addf %16, %31 : vector<16x512xf32>
    %c0_19 = arith.constant 0 : index
    %c0_20 = arith.constant 0 : index
    %c0_21 = arith.constant 0 : index
    %33 = vector.load %arg3[%c0_19, %c0_20, %c0_21] : memref<1x64x32xf32, #tpu.memory_space<vmem>>, vector<1x64x32xf32>
    %34 = vector.shape_cast %33 : vector<1x64x32xf32> to vector<64x32xf32>
    %35 = arith.truncf %34 : vector<64x32xf32> to vector<64x32xbf16>
    %c0_22 = arith.constant 0 : index
    %c0_23 = arith.constant 0 : index
    %36 = vector.load %arg7[%c0_22, %c0_23] : memref<32x32xbf16, #tpu.memory_space<vmem>>, vector<32x32xbf16>
    %c0_24 = arith.constant 0 : index
    %c0_25 = arith.constant 0 : index
    %37 = vector.load %arg11[%c0_24, %c0_25] : memref<16x8xbf16, #tpu.memory_space<vmem>>, vector<16x8xbf16>
    %cst_26 = arith.constant dense<0.000000e+00> : vector<64x32xf32>
    %38 = tpu.matmul %35, %36, %cst_26 {dimension_numbers = #tpu.dot_dimension_numbers<[1], [0], [0], [1], [0, 0, 1, 1], [], []>} : vector<64x32xbf16>, vector<32x32xbf16>, vector<64x32xf32> -> vector<64x32xf32>
    %39 = vector.shape_cast %38 : vector<64x32xf32> to vector<8x8x32xf32>
    %40 = arith.truncf %39 : vector<8x8x32xf32> to vector<8x8x32xbf16>
    %41 = vector.shape_cast %37 : vector<16x8xbf16> to vector<1x16x8xbf16>
    %42 = vector.shape_cast %41 : vector<1x16x8xbf16> to vector<1x16x8xbf16>
    %43 = vector.broadcast %42 : vector<1x16x8xbf16> to vector<8x16x8xbf16>
    "tpu.trace_start"() <{level = 10 : i32, message = "bts,bsf->btf"}> : () -> ()
    %cst_27 = arith.constant dense<0.000000e+00> : vector<8x16x32xf32>
    %44 = tpu.matmul %43, %40, %cst_27 {dimension_numbers = #tpu.dot_dimension_numbers<[2], [1], [1], [2], [0, 0, 0, 1, 1, 2], [0], [0]>} : vector<8x16x8xbf16>, vector<8x8x32xbf16>, vector<8x16x32xf32> -> vector<8x16x32xf32>
    "tpu.trace_stop"() : () -> ()
    %45 = vector.shape_cast %44 : vector<8x16x32xf32> to vector<8x512xf32>
    %46 = arith.truncf %45 : vector<8x512xf32> to vector<8x512xbf16>
    %cst_28 = arith.constant dense<0.000000e+00> : vector<16x512xf32>
    %47 = tpu.matmul %37, %46, %cst_28 {dimension_numbers = #tpu.dot_dimension_numbers<[1], [0], [0], [1], [0, 0, 1, 1], [], []>} : vector<16x8xbf16>, vector<8x512xbf16>, vector<16x512xf32> -> vector<16x512xf32>
    %48 = arith.addf %32, %47 : vector<16x512xf32>
    %c0_29 = arith.constant 0 : index
    %c0_30 = arith.constant 0 : index
    %c0_31 = arith.constant 0 : index
    %49 = vector.load %arg4[%c0_29, %c0_30, %c0_31] : memref<1x16x32xf32, #tpu.memory_space<vmem>>, vector<1x16x32xf32>
    %50 = vector.shape_cast %49 : vector<1x16x32xf32> to vector<16x32xf32>
    %51 = arith.truncf %50 : vector<16x32xf32> to vector<16x32xbf16>
    %c0_32 = arith.constant 0 : index
    %c0_33 = arith.constant 0 : index
    %52 = vector.load %arg8[%c0_32, %c0_33] : memref<32x32xbf16, #tpu.memory_space<vmem>>, vector<32x32xbf16>
    %c0_34 = arith.constant 0 : index
    %c0_35 = arith.constant 0 : index
    %53 = vector.load %arg12[%c0_34, %c0_35] : memref<16x4xbf16, #tpu.memory_space<vmem>>, vector<16x4xbf16>
    %cst_36 = arith.constant dense<0.000000e+00> : vector<16x32xf32>
    %54 = tpu.matmul %51, %52, %cst_36 {dimension_numbers = #tpu.dot_dimension_numbers<[1], [0], [0], [1], [0, 0, 1, 1], [], []>} : vector<16x32xbf16>, vector<32x32xbf16>, vector<16x32xf32> -> vector<16x32xf32>
    %55 = vector.shape_cast %54 : vector<16x32xf32> to vector<4x4x32xf32>
    %56 = arith.truncf %55 : vector<4x4x32xf32> to vector<4x4x32xbf16>
    %57 = vector.shape_cast %53 : vector<16x4xbf16> to vector<1x16x4xbf16>
    %58 = vector.shape_cast %57 : vector<1x16x4xbf16> to vector<1x16x4xbf16>
    %59 = vector.broadcast %58 : vector<1x16x4xbf16> to vector<4x16x4xbf16>
    "tpu.trace_start"() <{level = 10 : i32, message = "bts,bsf->btf"}> : () -> ()
    %cst_37 = arith.constant dense<0.000000e+00> : vector<4x16x32xf32>
    %60 = tpu.matmul %59, %56, %cst_37 {dimension_numbers = #tpu.dot_dimension_numbers<[2], [1], [1], [2], [0, 0, 0, 1, 1, 2], [0], [0]>} : vector<4x16x4xbf16>, vector<4x4x32xbf16>, vector<4x16x32xf32> -> vector<4x16x32xf32>
    "tpu.trace_stop"() : () -> ()
    %61 = vector.shape_cast %60 : vector<4x16x32xf32> to vector<4x512xf32>
    %62 = arith.truncf %61 : vector<4x512xf32> to vector<4x512xbf16>
    %cst_38 = arith.constant dense<0.000000e+00> : vector<16x512xf32>
    %63 = tpu.matmul %53, %62, %cst_38 {dimension_numbers = #tpu.dot_dimension_numbers<[1], [0], [0], [1], [0, 0, 1, 1], [], []>} : vector<16x4xbf16>, vector<4x512xbf16>, vector<16x512xf32> -> vector<16x512xf32>
    %64 = arith.addf %48, %63 : vector<16x512xf32>
    %c0_39 = arith.constant 0 : index
    %c0_40 = arith.constant 0 : index
    %65 = vector.load %arg13[%c0_39, %c0_40] : memref<1x512xf32, #tpu.memory_space<vmem>>, vector<1x512xf32>
    %66 = vector.broadcast %65 : vector<1x512xf32> to vector<16x512xf32>
    %67 = arith.addf %64, %66 : vector<16x512xf32>
    %cst_41 = arith.constant 0.000000e+00 : f32
    %68 = vector.broadcast %cst_41 : f32 to vector<16x512xf32>
    %69 = arith.maximumf %67, %68 : vector<16x512xf32>
    %c0_42 = arith.constant 0 : index
    %c0_43 = arith.constant 0 : index
    %c0_44 = arith.constant 0 : index
    %70 = vector.load %arg14[%c0_42, %c0_43, %c0_44] : memref<1x16x512xf32, #tpu.memory_space<vmem>>, vector<1x16x512xf32>
    %71 = vector.shape_cast %70 : vector<1x16x512xf32> to vector<16x512xf32>
    %72 = vector.shape_cast %69 : vector<16x512xf32> to vector<1x16x512xf32>
    tpu.vector_store %arg14[%c0_42, %c0_43, %c0_44], %72 {strides = array<i32>} : memref<1x16x512xf32, #tpu.memory_space<vmem>>, vector<1x16x512xf32>,
    return
  }
  func.func @transform_0(%arg0: i32) -> (i32, i32, i32) {
    %c0_i32 = arith.constant 0 : i32
    %c0_i32_0 = arith.constant 0 : i32
    %c0_i32_1 = arith.constant 0 : i32
    return %arg0, %c0_i32, %c0_i32_0 : i32, i32, i32
  }
  func.func @transform_1(%arg0: i32) -> (i32, i32, i32) {
    %c0_i32 = arith.constant 0 : i32
    %c0_i32_0 = arith.constant 0 : i32
    %c0_i32_1 = arith.constant 0 : i32
    return %arg0, %c0_i32, %c0_i32_0 : i32, i32, i32
  }
  func.func @transform_2(%arg0: i32) -> (i32, i32, i32) {
    %c0_i32 = arith.constant 0 : i32
    %c0_i32_0 = arith.constant 0 : i32
    %c0_i32_1 = arith.constant 0 : i32
    return %arg0, %c0_i32, %c0_i32_0 : i32, i32, i32
  }
  func.func @transform_3(%arg0: i32) -> (i32, i32, i32) {
    %c0_i32 = arith.constant 0 : i32
    %c0_i32_0 = arith.constant 0 : i32
    %c0_i32_1 = arith.constant 0 : i32
    return %arg0, %c0_i32, %c0_i32_0 : i32, i32, i32
  }
  func.func @transform_4(%arg0: i32) -> (i32, i32) {
    %c0_i32 = arith.constant 0 : i32
    %c0_i32_0 = arith.constant 0 : i32
    %c0_i32_1 = arith.constant 0 : i32
    return %c0_i32, %c0_i32_0 : i32, i32
  }
  func.func @transform_5(%arg0: i32) -> (i32, i32) {
    %c0_i32 = arith.constant 0 : i32
    %c0_i32_0 = arith.constant 0 : i32
    %c0_i32_1 = arith.constant 0 : i32
    return %c0_i32, %c0_i32_0 : i32, i32
  }
  func.func @transform_6(%arg0: i32) -> (i32, i32) {
    %c0_i32 = arith.constant 0 : i32
    %c0_i32_0 = arith.constant 0 : i32
    %c0_i32_1 = arith.constant 0 : i32
    return %c0_i32, %c0_i32_0 : i32, i32
  }
  func.func @transform_7(%arg0: i32) -> (i32, i32) {
    %c0_i32 = arith.constant 0 : i32
    %c0_i32_0 = arith.constant 0 : i32
    %c0_i32_1 = arith.constant 0 : i32
    return %c0_i32, %c0_i32_0 : i32, i32
  }
  func.func @transform_8(%arg0: i32) -> (i32, i32) {
    %c0_i32 = arith.constant 0 : i32
    %c0_i32_0 = arith.constant 0 : i32
    %c0_i32_1 = arith.constant 0 : i32
    return %c0_i32, %c0_i32_0 : i32, i32
  }
  func.func @transform_9(%arg0: i32) -> (i32, i32) {
    %c0_i32 = arith.constant 0 : i32
    %c0_i32_0 = arith.constant 0 : i32
    %c0_i32_1 = arith.constant 0 : i32
    return %c0_i32, %c0_i32_0 : i32, i32
  }
  func.func @transform_10(%arg0: i32) -> (i32, i32) {
    %c0_i32 = arith.constant 0 : i32
    %c0_i32_0 = arith.constant 0 : i32
    %c0_i32_1 = arith.constant 0 : i32
    return %c0_i32, %c0_i32_0 : i32, i32
  }
  func.func @transform_11(%arg0: i32) -> (i32, i32) {
    %c0_i32 = arith.constant 0 : i32
    %c0_i32_0 = arith.constant 0 : i32
    %c0_i32_1 = arith.constant 0 : i32
    return %c0_i32, %c0_i32_0 : i32, i32
  }
  func.func @transform_12(%arg0: i32) -> (i32, i32) {
    %c0_i32 = arith.constant 0 : i32
    %c0_i32_0 = arith.constant 0 : i32
    %c0_i32_1 = arith.constant 0 : i32
    return %c0_i32, %c0_i32_0 : i32, i32
  }
  func.func @transform_13(%arg0: i32) -> (i32, i32, i32) {
    %c0_i32 = arith.constant 0 : i32
    %c0_i32_0 = arith.constant 0 : i32
    %c0_i32_1 = arith.constant 0 : i32
    return %arg0, %c0_i32, %c0_i32_0 : i32, i32, i32
  }
}

</mosaic_0001>

<llo_original>
// kernel: tpu_custom_call.1
$region0: #{tpu_custom_call.1}
  #allocation0 [shape = 'u32[]', space=smem, size = 0x4, offset = 0x4, fixed_abs, tag = 'smem constant byte address 0x4 - core index']
  #allocation1 [shape = 'u32[144,128]{1,0:T(1,128)}', space=vmem, size = 0x12000, scoped, tag = 'internal scratch']
  %s0 = inlined_call_operand.vmem [shape: f32[2,256,16], index: 0, kind: input, shape index: {}]
  %s1 = inlined_call_operand.vmem [shape: f32[2,64,24], index: 1, kind: input, shape index: {}]
  %s2 = inlined_call_operand.vmem [shape: f32[2,64,32], index: 2, kind: input, shape index: {}]
  %s3 = inlined_call_operand.vmem [shape: f32[2,16,32], index: 3, kind: input, shape index: {}]
  %s4 = inlined_call_operand.vmem [shape: bf16[16,32], index: 4, kind: input, shape index: {}]
  %s5 = inlined_call_operand.vmem [shape: bf16[24,32], index: 5, kind: input, shape index: {}]
  %s6 = inlined_call_operand.vmem [shape: bf16[32,32], index: 6, kind: input, shape index: {}]
  %s7 = inlined_call_operand.vmem [shape: bf16[32,32], index: 7, kind: input, shape index: {}]
  %s8 = inlined_call_operand.vmem [shape: bf16[16,16], index: 8, kind: input, shape index: {}]
  %s9 = inlined_call_operand.vmem [shape: bf16[16,8], index: 9, kind: input, shape index: {}]
  %s10 = inlined_call_operand.vmem [shape: bf16[16,8], index: 10, kind: input, shape index: {}]
  %s11 = inlined_call_operand.vmem [shape: bf16[16,4], index: 11, kind: input, shape index: {}]
  %s12 = inlined_call_operand.vmem [shape: f32[1,512], index: 12, kind: input, shape index: {}]
  %s13 = inlined_call_operand.hbm [shape: f32[2,16,512], index: 13, kind: output, shape index: {}]
  %s14 = sld [smem:[#allocation0]]
  $region85: #{tpu_custom_call.1} parent=0
    _
  %s16 = ssub.s32 1, %s14
  %s17 = scalar_select 0, %s16, %s14
  $region1: #{tpu_custom_call.1} parent=0
    #allocation2 [shape = 'u8[65536]{0}', space=vmem, size = 0x10000, scoped, tag = 'output window, operand 0']
    #allocation3 [shape = 's32[2]{0}', space=sflag, size = 0x8, scoped, tag = 'scoped memory for tpu_custom_call.1']
    %18 = vsyncpa [#allocation3], 0
    %s19 = scalar_lea.sflag [#allocation3], 1
    %20 = vsyncpa %s19, 0
    loop: start=0, step=1, limit=4
    $region2: #{tpu_custom_call.1} parent=1 // loop_pre_header
      _
    $region3: #{tpu_custom_call.1} parent=1 // loop_header
      %s22 = sphi 0, %s26
      %p23 = scmp.ge.s32.totalorder %s22, 4
      %s32 = sphi 0, %s34
      %s35 = sphi 0, %s32
      %s36 = sphi 0, %s35
      %s52 = sphi 0, %s36
      %s58 = sphi 0, %s60
      %s61 = sphi 0, %s58
      %s62 = sphi 0, %s61
      %s78 = sphi 0, %s62
      %s84 = sphi 0, %s86
      %s87 = sphi 0, %s84
      %s88 = sphi 0, %s87
      %s104 = sphi 0, %s88
      %s110 = sphi 0, %s112
      %s113 = sphi 0, %s110
      %s114 = sphi 0, %s113
      %s130 = sphi 0, %s114
      %s134 = sphi 0, %s134
      %s136 = sphi 0, %s134
      %s137 = sphi 0, %s136
      %s151 = sphi 0, %s137
      %s155 = sphi 0, %s155
      %s157 = sphi 0, %s155
      %s158 = sphi 0, %s157
      %s172 = sphi 0, %s158
      %s176 = sphi 0, %s176
      %s178 = sphi 0, %s176
      %s179 = sphi 0, %s178
      %s193 = sphi 0, %s179
      %s197 = sphi 0, %s197
      %s199 = sphi 0, %s197
      %s200 = sphi 0, %s199
      %s214 = sphi 0, %s200
      %s218 = sphi 0, %s218
      %s220 = sphi 0, %s218
      %s221 = sphi 0, %s220
      %s235 = sphi 0, %s221
      %s239 = sphi 0, %s239
      %s241 = sphi 0, %s239
      %s242 = sphi 0, %s241
      %s256 = sphi 0, %s242
      %s260 = sphi 0, %s260
      %s262 = sphi 0, %s260
      %s263 = sphi 0, %s262
      %s277 = sphi 0, %s263
      %s281 = sphi 0, %s281
      %s283 = sphi 0, %s281
      %s284 = sphi 0, %s283
      %s298 = sphi 0, %s284
      %s302 = sphi 0, %s302
      %s304 = sphi 0, %s302
      %s305 = sphi 0, %s304
      %s319 = sphi 0, %s305
      %s325 = sphi 0, %s327
      %s328 = sphi 0, %s325
      %s329 = sphi 0, %s328
      %s345 = sphi 0, %s329
    $region4: #{tpu_custom_call.1} parent=1 // loop_header_branch
      %25 = sbr.rel (%p23) target = $region8
    $region5: #{tpu_custom_call.1} parent=1 // loop_body
      %s27 = ssub.s32 %s22, 1
      %s28 = ssub.s32 %s22, 2
      %s29 = sadd.s32 %s22, 1
      %s30 = ssub.s32 %s22, %s29
      %p31 = scmp.eq.s32.totalorder %s30, 0
      %s33 = sadd.s32 %s32, 1
      %s34 = scalar_select %p31, %s32, %s33
      %p37 = pneg %p31
      %p38 = scmp.eq.s32.totalorder %s22, 1
      %p39 = por %p37, %p38
      %p40 = scmp.ne.s32.totalorder %s32, %s35
      %p41 = scmp.eq.s32.totalorder %s22, 0
      %p42 = por %p40, %p41
      %p43 = scmp.ne.s32.totalorder %s32, %s35
      %p44 = scmp.eq.s32.totalorder %s27, 1
      %p45 = por %p43, %p44
      %p46 = scmp.ne.s32.totalorder %s35, %s36
      %p47 = scmp.eq.s32.totalorder %s27, 0
      %p48 = por %p46, %p47
      %p49 = scmp.ne.s32.totalorder %s35, %s36
      %p50 = scmp.eq.s32.totalorder %s28, 1
      %p51 = por %p49, %p50
      %p53 = scmp.ne.s32.totalorder %s36, %s52
      %p54 = scmp.eq.s32.totalorder %s28, 0
      %p55 = por %p53, %p54
      %s56 = ssub.s32 %s22, %s29
      %p57 = scmp.eq.s32.totalorder %s56, 0
      %s59 = sadd.s32 %s58, 1
      %s60 = scalar_select %p57, %s58, %s59
      %p63 = pneg %p57
      %p64 = scmp.eq.s32.totalorder %s22, 1
      %p65 = por %p63, %p64
      %p66 = scmp.ne.s32.totalorder %s58, %s61
      %p67 = scmp.eq.s32.totalorder %s22, 0
      %p68 = por %p66, %p67
      %p69 = scmp.ne.s32.totalorder %s58, %s61
      %p70 = scmp.eq.s32.totalorder %s27, 1
      %p71 = por %p69, %p70
      %p72 = scmp.ne.s32.totalorder %s61, %s62
      %p73 = scmp.eq.s32.totalorder %s27, 0
      %p74 = por %p72, %p73
      %p75 = scmp.ne.s32.totalorder %s61, %s62
      %p76 = scmp.eq.s32.totalorder %s28, 1
      %p77 = por %p75, %p76
      %p79 = scmp.ne.s32.totalorder %s62, %s78
      %p80 = scmp.eq.s32.totalorder %s28, 0
      %p81 = por %p79, %p80
      %s82 = ssub.s32 %s22, %s29
      %p83 = scmp.eq.s32.totalorder %s82, 0
      %s85 = sadd.s32 %s84, 1
      %s86 = scalar_select %p83, %s84, %s85
      %p89 = pneg %p83
      %p90 = scmp.eq.s32.totalorder %s22, 1
      %p91 = por %p89, %p90
      %p92 = scmp.ne.s32.totalorder %s84, %s87
      %p93 = scmp.eq.s32.totalorder %s22, 0
      %p94 = por %p92, %p93
      %p95 = scmp.ne.s32.totalorder %s84, %s87
      %p96 = scmp.eq.s32.totalorder %s27, 1
      %p97 = por %p95, %p96
      %p98 = scmp.ne.s32.totalorder %s87, %s88
      %p99 = scmp.eq.s32.totalorder %s27, 0
      %p100 = por %p98, %p99
      %p101 = scmp.ne.s32.totalorder %s87, %s88
      %p102 = scmp.eq.s32.totalorder %s28, 1
      %p103 = por %p101, %p102
      %p105 = scmp.ne.s32.totalorder %s88, %s104
      %p106 = scmp.eq.s32.totalorder %s28, 0
      %p107 = por %p105, %p106
      %s108 = ssub.s32 %s22, %s29
      %p109 = scmp.eq.s32.totalorder %s108, 0
      %s111 = sadd.s32 %s110, 1
      %s112 = scalar_select %p109, %s110, %s111
      %p115 = pneg %p109
      %p116 = scmp.eq.s32.totalorder %s22, 1
      %p117 = por %p115, %p116
      %p118 = scmp.ne.s32.totalorder %s110, %s113
      %p119 = scmp.eq.s32.totalorder %s22, 0
      %p120 = por %p118, %p119
      %p121 = scmp.ne.s32.totalorder %s110, %s113
      %p122 = scmp.eq.s32.totalorder %s27, 1
      %p123 = por %p121, %p122
      %p124 = scmp.ne.s32.totalorder %s113, %s114
      %p125 = scmp.eq.s32.totalorder %s27, 0
      %p126 = por %p124, %p125
      %p127 = scmp.ne.s32.totalorder %s113, %s114
      %p128 = scmp.eq.s32.totalorder %s28, 1
      %p129 = por %p127, %p128
      %p131 = scmp.ne.s32.totalorder %s114, %s130
      %p132 = scmp.eq.s32.totalorder %s28, 0
      %p133 = por %p131, %p132
      %s135 = sadd.s32 %s134, 1
      %p138 = scmp.eq.s32.totalorder %s22, 1
      %p139 = scmp.ne.s32.totalorder %s134, %s136
      %p140 = scmp.eq.s32.totalorder %s22, 0
      %p141 = por %p139, %p140
      %p142 = scmp.ne.s32.totalorder %s134, %s136
      %p143 = scmp.eq.s32.totalorder %s27, 1
      %p144 = por %p142, %p143
      %p145 = scmp.ne.s32.totalorder %s136, %s137
      %p146 = scmp.eq.s32.totalorder %s27, 0
      %p147 = por %p145, %p146
      %p148 = scmp.ne.s32.totalorder %s136, %s137
      %p149 = scmp.eq.s32.totalorder %s28, 1
      %p150 = por %p148, %p149
      %p152 = scmp.ne.s32.totalorder %s137, %s151
      %p153 = scmp.eq.s32.totalorder %s28, 0
      %p154 = por %p152, %p153
      %s156 = sadd.s32 %s155, 1
      %p159 = scmp.eq.s32.totalorder %s22, 1
      %p160 = scmp.ne.s32.totalorder %s155, %s157
      %p161 = scmp.eq.s32.totalorder %s22, 0
      %p162 = por %p160, %p161
      %p163 = scmp.ne.s32.totalorder %s155, %s157
      %p164 = scmp.eq.s32.totalorder %s27, 1
      %p165 = por %p163, %p164
      %p166 = scmp.ne.s32.totalorder %s157, %s158
      %p167 = scmp.eq.s32.totalorder %s27, 0
      %p168 = por %p166, %p167
      %p169 = scmp.ne.s32.totalorder %s157, %s158
      %p170 = scmp.eq.s32.totalorder %s28, 1
      %p171 = por %p169, %p170
      %p173 = scmp.ne.s32.totalorder %s158, %s172
      %p174 = scmp.eq.s32.totalorder %s28, 0
      %p175 = por %p173, %p174
      %s177 = sadd.s32 %s176, 1
      %p180 = scmp.eq.s32.totalorder %s22, 1
      %p181 = scmp.ne.s32.totalorder %s176, %s178
      %p182 = scmp.eq.s32.totalorder %s22, 0
      %p183 = por %p181, %p182
      %p184 = scmp.ne.s32.totalorder %s176, %s178
      %p185 = scmp.eq.s32.totalorder %s27, 1
      %p186 = por %p184, %p185
      %p187 = scmp.ne.s32.totalorder %s178, %s179
      %p188 = scmp.eq.s32.totalorder %s27, 0
      %p189 = por %p187, %p188
      %p190 = scmp.ne.s32.totalorder %s178, %s179
      %p191 = scmp.eq.s32.totalorder %s28, 1
      %p192 = por %p190, %p191
      %p194 = scmp.ne.s32.totalorder %s179, %s193
      %p195 = scmp.eq.s32.totalorder %s28, 0
      %p196 = por %p194, %p195
      %s198 = sadd.s32 %s197, 1
      %p201 = scmp.eq.s32.totalorder %s22, 1
      %p202 = scmp.ne.s32.totalorder %s197, %s199
      %p203 = scmp.eq.s32.totalorder %s22, 0
      %p204 = por %p202, %p203
      %p205 = scmp.ne.s32.totalorder %s197, %s199
      %p206 = scmp.eq.s32.totalorder %s27, 1
      %p207 = por %p205, %p206
      %p208 = scmp.ne.s32.totalorder %s199, %s200
      %p209 = scmp.eq.s32.totalorder %s27, 0
      %p210 = por %p208, %p209
      %p211 = scmp.ne.s32.totalorder %s199, %s200
      %p212 = scmp.eq.s32.totalorder %s28, 1
      %p213 = por %p211, %p212
      %p215 = scmp.ne.s32.totalorder %s200, %s214
      %p216 = scmp.eq.s32.totalorder %s28, 0
      %p217 = por %p215, %p216
      %s219 = sadd.s32 %s218, 1
      %p222 = scmp.eq.s32.totalorder %s22, 1
      %p223 = scmp.ne.s32.totalorder %s218, %s220
      %p224 = scmp.eq.s32.totalorder %s22, 0
      %p225 = por %p223, %p224
      %p226 = scmp.ne.s32.totalorder %s218, %s220
      %p227 = scmp.eq.s32.totalorder %s27, 1
      %p228 = por %p226, %p227
      %p229 = scmp.ne.s32.totalorder %s220, %s221
      %p230 = scmp.eq.s32.totalorder %s27, 0
      %p231 = por %p229, %p230
      %p232 = scmp.ne.s32.totalorder %s220, %s221
      %p233 = scmp.eq.s32.totalorder %s28, 1
      %p234 = por %p232, %p233
      %p236 = scmp.ne.s32.totalorder %s221, %s235
      %p237 = scmp.eq.s32.totalorder %s28, 0
      %p238 = por %p236, %p237
      %s240 = sadd.s32 %s239, 1
      %p243 = scmp.eq.s32.totalorder %s22, 1
      %p244 = scmp.ne.s32.totalorder %s239, %s241
      %p245 = scmp.eq.s32.totalorder %s22, 0
      %p246 = por %p244, %p245
      %p247 = scmp.ne.s32.totalorder %s239, %s241
      %p248 = scmp.eq.s32.totalorder %s27, 1
      %p249 = por %p247, %p248
      %p250 = scmp.ne.s32.totalorder %s241, %s242
      %p251 = scmp.eq.s32.totalorder %s27, 0
      %p252 = por %p250, %p251
      %p253 = scmp.ne.s32.totalorder %s241, %s242
      %p254 = scmp.eq.s32.totalorder %s28, 1
      %p255 = por %p253, %p254
      %p257 = scmp.ne.s32.totalorder %s242, %s256
      %p258 = scmp.eq.s32.totalorder %s28, 0
      %p259 = por %p257, %p258
      %s261 = sadd.s32 %s260, 1
      %p264 = scmp.eq.s32.totalorder %s22, 1
      %p265 = scmp.ne.s32.totalorder %s260, %s262
      %p266 = scmp.eq.s32.totalorder %s22, 0
      %p267 = por %p265, %p266
      %p268 = scmp.ne.s32.totalorder %s260, %s262
      %p269 = scmp.eq.s32.totalorder %s27, 1
      %p270 = por %p268, %p269
      %p271 = scmp.ne.s32.totalorder %s262, %s263
      %p272 = scmp.eq.s32.totalorder %s27, 0
      %p273 = por %p271, %p272
      %p274 = scmp.ne.s32.totalorder %s262, %s263
      %p275 = scmp.eq.s32.totalorder %s28, 1
      %p276 = por %p274, %p275
      %p278 = scmp.ne.s32.totalorder %s263, %s277
      %p279 = scmp.eq.s32.totalorder %s28, 0
      %p280 = por %p278, %p279
      %s282 = sadd.s32 %s281, 1
      %p285 = scmp.eq.s32.totalorder %s22, 1
      %p286 = scmp.ne.s32.totalorder %s281, %s283
      %p287 = scmp.eq.s32.totalorder %s22, 0
      %p288 = por %p286, %p287
      %p289 = scmp.ne.s32.totalorder %s281, %s283
      %p290 = scmp.eq.s32.totalorder %s27, 1
      %p291 = por %p289, %p290
      %p292 = scmp.ne.s32.totalorder %s283, %s284
      %p293 = scmp.eq.s32.totalorder %s27, 0
      %p294 = por %p292, %p293
      %p295 = scmp.ne.s32.totalorder %s283, %s284
      %p296 = scmp.eq.s32.totalorder %s28, 1
      %p297 = por %p295, %p296
      %p299 = scmp.ne.s32.totalorder %s284, %s298
      %p300 = scmp.eq.s32.totalorder %s28, 0
      %p301 = por %p299, %p300
      %s303 = sadd.s32 %s302, 1
      %p306 = scmp.eq.s32.totalorder %s22, 1
      %p307 = scmp.ne.s32.totalorder %s302, %s304
      %p308 = scmp.eq.s32.totalorder %s22, 0
      %p309 = por %p307, %p308
      %p310 = scmp.ne.s32.totalorder %s302, %s304
      %p311 = scmp.eq.s32.totalorder %s27, 1
      %p312 = por %p310, %p311
      %p313 = scmp.ne.s32.totalorder %s304, %s305
      %p314 = scmp.eq.s32.totalorder %s27, 0
      %p315 = por %p313, %p314
      %p316 = scmp.ne.s32.totalorder %s304, %s305
      %p317 = scmp.eq.s32.totalorder %s28, 1
      %p318 = por %p316, %p317
      %p320 = scmp.ne.s32.totalorder %s305, %s319
      %p321 = scmp.eq.s32.totalorder %s28, 0
      %p322 = por %p320, %p321
      %s323 = ssub.s32 %s22, %s29
      %p324 = scmp.eq.s32.totalorder %s323, 0
      %s326 = sadd.s32 %s325, 1
      %s327 = scalar_select %p324, %s325, %s326
      %p330 = pneg %p324
      %p331 = scmp.eq.s32.totalorder %s22, 1
      %p332 = por %p330, %p331
      %p333 = scmp.ne.s32.totalorder %s325, %s328
      %p334 = scmp.eq.s32.totalorder %s22, 0
      %p335 = por %p333, %p334
      %p336 = scmp.ne.s32.totalorder %s325, %s328
      %p337 = scmp.eq.s32.totalorder %s27, 1
      %p338 = por %p336, %p337
      %p339 = scmp.ne.s32.totalorder %s328, %s329
      %p340 = scmp.eq.s32.totalorder %s27, 0
      %p341 = por %p339, %p340
      %p342 = scmp.ne.s32.totalorder %s328, %s329
      %p343 = scmp.eq.s32.totalorder %s28, 1
      %p344 = por %p342, %p343
      %p346 = scmp.ne.s32.totalorder %s329, %s345
      %p347 = scmp.eq.s32.totalorder %s28, 0
      %p348 = por %p346, %p347
      %p349 = scmp.le.s32.totalorder 1, %s22
      %p350 = scmp.lt.s32.totalorder %s22, 3
      %p351 = pnand %p349, %p350
      %p352 = pneg %p351
      // Predicated region
      $region9: #{tpu_custom_call.1} parent=5 // pred_check
        _
      $region10: #{tpu_custom_call.1} parent=5 // pred_check_branch
        %354 = sbr.rel (%p351) target = $region12
      $region11: #{tpu_custom_call.1} parent=5 // pred_region
        %s355 = ssub.s32 %s22, 1
        // Predicated region
        $region13: #{tpu_custom_call.1} parent=11 // pred_check
          %p356 = pneg %p147
        $region14: #{tpu_custom_call.1} parent=11 // pred_check_branch
          %358 = sbr.rel (%p356) target = $region16
        $region15: #{tpu_custom_call.1} parent=11 // pred_region
          _
        $region16: #{tpu_custom_call.1} parent=11 // pred_fallthru
          _
        // Predicated region
        $region17: #{tpu_custom_call.1} parent=11 // pred_check
          %p359 = pneg %p168
        $region18: #{tpu_custom_call.1} parent=11 // pred_check_branch
          %361 = sbr.rel (%p359) target = $region20
        $region19: #{tpu_custom_call.1} parent=11 // pred_region
          _
        $region20: #{tpu_custom_call.1} parent=11 // pred_fallthru
          _
        // Predicated region
        $region21: #{tpu_custom_call.1} parent=11 // pred_check
          %p362 = pneg %p189
        $region22: #{tpu_custom_call.1} parent=11 // pred_check_branch
          %364 = sbr.rel (%p362) target = $region24
        $region23: #{tpu_custom_call.1} parent=11 // pred_region
          _
        $region24: #{tpu_custom_call.1} parent=11 // pred_fallthru
          _
        // Predicated region
        $region25: #{tpu_custom_call.1} parent=11 // pred_check
          %p365 = pneg %p210
        $region26: #{tpu_custom_call.1} parent=11 // pred_check_branch
          %367 = sbr.rel (%p365) target = $region28
        $region27: #{tpu_custom_call.1} parent=11 // pred_region
          _
        $region28: #{tpu_custom_call.1} parent=11 // pred_fallthru
          _
        // Predicated region
        $region29: #{tpu_custom_call.1} parent=11 // pred_check
          %p368 = pneg %p231
        $region30: #{tpu_custom_call.1} parent=11 // pred_check_branch
          %370 = sbr.rel (%p368) target = $region32
        $region31: #{tpu_custom_call.1} parent=11 // pred_region
          _
        $region32: #{tpu_custom_call.1} parent=11 // pred_fallthru
          _
        // Predicated region
        $region33: #{tpu_custom_call.1} parent=11 // pred_check
          %p371 = pneg %p252
        $region34: #{tpu_custom_call.1} parent=11 // pred_check_branch
          %373 = sbr.rel (%p371) target = $region36
        $region35: #{tpu_custom_call.1} parent=11 // pred_region
          _
        $region36: #{tpu_custom_call.1} parent=11 // pred_fallthru
          _
        // Predicated region
        $region37: #{tpu_custom_call.1} parent=11 // pred_check
          %p374 = pneg %p273
        $region38: #{tpu_custom_call.1} parent=11 // pred_check_branch
          %376 = sbr.rel (%p374) target = $region40
        $region39: #{tpu_custom_call.1} parent=11 // pred_region
          _
        $region40: #{tpu_custom_call.1} parent=11 // pred_fallthru
          _
        // Predicated region
        $region41: #{tpu_custom_call.1} parent=11 // pred_check
          %p377 = pneg %p294
        $region42: #{tpu_custom_call.1} parent=11 // pred_check_branch
          %379 = sbr.rel (%p377) target = $region44
        $region43: #{tpu_custom_call.1} parent=11 // pred_region
          _
        $region44: #{tpu_custom_call.1} parent=11 // pred_fallthru
          _
        // Predicated region
        $region45: #{tpu_custom_call.1} parent=11 // pred_check
          %p380 = pneg %p315
        $region46: #{tpu_custom_call.1} parent=11 // pred_check_branch
          %382 = sbr.rel (%p380) target = $region48
        $region47: #{tpu_custom_call.1} parent=11 // pred_region
          _
        $region48: #{tpu_custom_call.1} parent=11 // pred_fallthru
          _
      $region12: #{tpu_custom_call.1} parent=5 // pred_fallthru
        _
      %p383 = scmp.lt.s32.totalorder %s22, 2
      // Predicated region
      $region49: #{tpu_custom_call.1} parent=5 // pred_check
        %p384 = pneg %p383
      $region50: #{tpu_custom_call.1} parent=5 // pred_check_branch
        %386 = sbr.rel (%p384) target = $region52
      $region51: #{tpu_custom_call.1} parent=5 // pred_region
        // Predicated region
        $region53: #{tpu_custom_call.1} parent=51 // pred_check
          %p387 = pneg %p42
        $region54: #{tpu_custom_call.1} parent=51 // pred_check_branch
          %389 = sbr.rel (%p387) target = $region56
        $region55: #{tpu_custom_call.1} parent=51 // pred_region
          %p390 = scmp.lt.s32.totalorder %s22, 1
          %s391 = scalar_select %p390, %s22, 1
          %s392 = smul.addr %s391, 32
          %s393 = smul.addr %s392, 8
          %s394 = scalar_lea.vmem %s0, %s393
        $region56: #{tpu_custom_call.1} parent=51 // pred_fallthru
          _
        // Predicated region
        $region57: #{tpu_custom_call.1} parent=51 // pred_check
          %p395 = pneg %p68
        $region58: #{tpu_custom_call.1} parent=51 // pred_check_branch
          %397 = sbr.rel (%p395) target = $region60
        $region59: #{tpu_custom_call.1} parent=51 // pred_region
          %p398 = scmp.lt.s32.totalorder %s22, 1
          %s399 = scalar_select %p398, %s22, 1
          %s400 = smul.addr %s399, 8
          %s401 = smul.addr %s400, 8
          %s402 = scalar_lea.vmem %s1, %s401
        $region60: #{tpu_custom_call.1} parent=51 // pred_fallthru
          _
        // Predicated region
        $region61: #{tpu_custom_call.1} parent=51 // pred_check
          %p403 = pneg %p94
        $region62: #{tpu_custom_call.1} parent=51 // pred_check_branch
          %405 = sbr.rel (%p403) target = $region64
        $region63: #{tpu_custom_call.1} parent=51 // pred_region
          %p406 = scmp.lt.s32.totalorder %s22, 1
          %s407 = scalar_select %p406, %s22, 1
          %s408 = smul.addr %s407, 8
          %s409 = smul.addr %s408, 8
          %s410 = scalar_lea.vmem %s2, %s409
        $region64: #{tpu_custom_call.1} parent=51 // pred_fallthru
          _
        // Predicated region
        $region65: #{tpu_custom_call.1} parent=51 // pred_check
          %p411 = pneg %p120
        $region66: #{tpu_custom_call.1} parent=51 // pred_check_branch
          %413 = sbr.rel (%p411) target = $region68
        $region67: #{tpu_custom_call.1} parent=51 // pred_region
          %p414 = scmp.lt.s32.totalorder %s22, 1
          %s415 = scalar_select %p414, %s22, 1
          %s416 = smul.addr %s415, 2
          %s417 = smul.addr %s416, 8
          %s418 = scalar_lea.vmem %s3, %s417
        $region68: #{tpu_custom_call.1} parent=51 // pred_fallthru
          _
      $region52: #{tpu_custom_call.1} parent=5 // pred_fallthru
        _
      %p419 = scmp.le.s32.totalorder 1, %s22
      %p420 = scmp.lt.s32.totalorder %s22, 3
      %p421 = pnand %p419, %p420
      %p422 = pneg %p421
      // Predicated region
      $region69: #{tpu_custom_call.1} parent=5 // pred_check
        _
      $region70: #{tpu_custom_call.1} parent=5 // pred_check_branch
        %424 = sbr.rel (%p421) target = $region72
      $region71: #{tpu_custom_call.1} parent=5 // pred_region
        %s425 = ssub.s32 %s22, 1
        %p426 = scmp.lt.s32.totalorder %s27, 1
        %s427 = scalar_select %p426, %s27, 1
        %s428 = smul.addr %s427, 32
        %s429 = smul.addr %s428, 8
        %s430 = scalar_lea.vmem %s0, %s429
        %p431 = pneg %p48
        %p432 = pneg %p45
        %p433 = scmp.lt.s32.totalorder %s27, 1
        %s434 = scalar_select %p433, %s27, 1
        %s435 = smul.addr %s434, 8
        %s436 = smul.addr %s435, 8
        %s437 = scalar_lea.vmem %s1, %s436
        %p438 = pneg %p74
        %p439 = pneg %p71
        %p440 = scmp.lt.s32.totalorder %s27, 1
        %s441 = scalar_select %p440, %s27, 1
        %s442 = smul.addr %s441, 8
        %s443 = smul.addr %s442, 8
        %s444 = scalar_lea.vmem %s2, %s443
        %p445 = pneg %p100
        %p446 = pneg %p97
        %p447 = scmp.lt.s32.totalorder %s27, 1
        %s448 = scalar_select %p447, %s27, 1
        %s449 = smul.addr %s448, 2
        %s450 = smul.addr %s449, 8
        %s451 = scalar_lea.vmem %s3, %s450
        %p452 = pneg %p126
        %p453 = pneg %p123
        %p454 = pneg %p147
        %p455 = pneg %p144
        %p456 = pneg %p168
        %p457 = pneg %p165
        %p458 = pneg %p189
        %p459 = pneg %p186
        %p460 = pneg %p210
        %p461 = pneg %p207
        %p462 = pneg %p231
        %p463 = pneg %p228
        %p464 = pneg %p252
        %p465 = pneg %p249
        %p466 = pneg %p273
        %p467 = pneg %p270
        %p468 = pneg %p294
        %p469 = pneg %p291
        %p470 = pneg %p315
        %p471 = pneg %p312
        %p472 = pneg %p341
        %p473 = pneg %p338
        %s474 = sand.u32 %s328, 1
        %s475 = scalar_lea.sflag [#allocation3], %s474
        %s476 = sand.u32 %s328, 1
        %s477 = smul.addr %s476, 64
        %s478 = scalar_lea.vmem [#allocation2], %s477
        %p479 = scmp.lt.s32.totalorder %s27, 1
        %s480 = scalar_select %p479, %s27, 1
        %s481 = smul.addr %s480, 32
        %s482 = smul.addr %s481, 8
        %s483 = scalar_lea.vmem %s0, %s482
        %p484 = scmp.lt.s32.totalorder %s27, 1
        %s485 = scalar_select %p484, %s27, 1
        %s486 = smul.addr %s485, 8
        %s487 = smul.addr %s486, 8
        %s488 = scalar_lea.vmem %s1, %s487
        %p489 = scmp.lt.s32.totalorder %s27, 1
        %s490 = scalar_select %p489, %s27, 1
        %s491 = smul.addr %s490, 8
        %s492 = smul.addr %s491, 8
        %s493 = scalar_lea.vmem %s2, %s492
        %p494 = scmp.lt.s32.totalorder %s27, 1
        %s495 = scalar_select %p494, %s27, 1
        %s496 = smul.addr %s495, 2
        %s497 = smul.addr %s496, 8
        %s498 = scalar_lea.vmem %s3, %s497
        %v500 = vld [vmem:[%s483] sm:$0xff]
        %v501 = vld [vmem:[%s483 + $0x8] sm:$0xff]
        %v502 = vld [vmem:[%s483 + $0x10] sm:$0xff]
        %v503 = vld [vmem:[%s483 + $0x18] sm:$0xff]
        %v504 = vld [vmem:[%s483 + $0x20] sm:$0xff]
        %v505 = vld [vmem:[%s483 + $0x28] sm:$0xff]
        %v506 = vld [vmem:[%s483 + $0x30] sm:$0xff]
        %v507 = vld [vmem:[%s483 + $0x38] sm:$0xff]
        %v508 = vld [vmem:[%s483 + $0x40] sm:$0xff]
        %v509 = vld [vmem:[%s483 + $0x48] sm:$0xff]
        %v510 = vld [vmem:[%s483 + $0x50] sm:$0xff]
        %v511 = vld [vmem:[%s483 + $0x58] sm:$0xff]
        %v512 = vld [vmem:[%s483 + $0x60] sm:$0xff]
        %v513 = vld [vmem:[%s483 + $0x68] sm:$0xff]
        %v514 = vld [vmem:[%s483 + $0x70] sm:$0xff]
        %v515 = vld [vmem:[%s483 + $0x78] sm:$0xff]
        %v516 = vld [vmem:[%s483 + $0x80] sm:$0xff]
        %v517 = vld [vmem:[%s483 + $0x88] sm:$0xff]
        %v518 = vld [vmem:[%s483 + $0x90] sm:$0xff]
        %v519 = vld [vmem:[%s483 + $0x98] sm:$0xff]
        %v520 = vld [vmem:[%s483 + $0xa0] sm:$0xff]
        %v521 = vld [vmem:[%s483 + $0xa8] sm:$0xff]
        %v522 = vld [vmem:[%s483 + $0xb0] sm:$0xff]
        %v523 = vld [vmem:[%s483 + $0xb8] sm:$0xff]
        %v524 = vld [vmem:[%s483 + $0xc0] sm:$0xff]
        %v525 = vld [vmem:[%s483 + $0xc8] sm:$0xff]
        %v526 = vld [vmem:[%s483 + $0xd0] sm:$0xff]
        %v527 = vld [vmem:[%s483 + $0xd8] sm:$0xff]
        %v528 = vld [vmem:[%s483 + $0xe0] sm:$0xff]
        %v529 = vld [vmem:[%s483 + $0xe8] sm:$0xff]
        %v530 = vld [vmem:[%s483 + $0xf0] sm:$0xff]
        %v531 = vld [vmem:[%s483 + $0xf8] sm:$0xff]
        %v532 = vpack.c.bf16 %v501, %v500
        %v533 = vpack.c.bf16 %v503, %v502
        %v534 = vpack.c.bf16 %v505, %v504
        %v535 = vpack.c.bf16 %v507, %v506
        %v536 = vpack.c.bf16 %v509, %v508
        %v537 = vpack.c.bf16 %v511, %v510
        %v538 = vpack.c.bf16 %v513, %v512
        %v539 = vpack.c.bf16 %v515, %v514
        %v540 = vpack.c.bf16 %v517, %v516
        %v541 = vpack.c.bf16 %v519, %v518
        %v542 = vpack.c.bf16 %v521, %v520
        %v543 = vpack.c.bf16 %v523, %v522
        %v544 = vpack.c.bf16 %v525, %v524
        %v545 = vpack.c.bf16 %v527, %v526
        %v546 = vpack.c.bf16 %v529, %v528
        %v547 = vpack.c.bf16 %v531, %v530
        %v548 = vld [vmem:[%s4] sm:$0xf]
        %v549 = vld [vmem:[%s4 + $0x4] sm:$0xf]
        %v550 = vld [vmem:[%s8] sm:$0xf]
        %v551 = vld [vmem:[%s8 + $0x4] sm:$0xf]
        %v554 = vunpack.c.l.b16 %v548
        %v555 = vunpack.c.l.b16 %v549
        %v556 = vpack.c.b16 %v555, %v554
        %vm558 = vcmask 130048
        %v560 = vsel %vm558, %v532, 0
        %v563 = vsel %vm558, %v533, 0
        %v566 = vsel %vm558, %v534, 0
        %v569 = vsel %vm558, %v535, 0
        %v572 = vsel %vm558, %v536, 0
        %v575 = vsel %vm558, %v537, 0
        %v578 = vsel %vm558, %v538, 0
        %v581 = vsel %vm558, %v539, 0
        %v584 = vsel %vm558, %v540, 0
        %v587 = vsel %vm558, %v541, 0
        %v590 = vsel %vm558, %v542, 0
        %v593 = vsel %vm558, %v543, 0
        %v596 = vsel %vm558, %v544, 0
        %v599 = vsel %vm558, %v545, 0
        %v602 = vsel %vm558, %v546, 0
        %v605 = vsel %vm558, %v547, 0
        %607 = vmatprep.subr.bf16.mxu0 0
        %608 = vmatpush1.bf16.msra.mxu0 %v556
        %609 = vmatprep.subr.bf16.mxu0 0
        %610 = vmatpush1.bf16.msra.mxu0 0
        %611 = vmatprep.subr.bf16.mxu0 0
        %612 = vmatpush1.bf16.msra.mxu0 0
        %613 = vmatprep.subr.bf16.mxu0 0
        %614 = vmatpush1.bf16.msra.mxu0 0
        %615 = vmatprep.subr.bf16.mxu0 0
        %616 = vmatpush1.bf16.msra.mxu0 0
        %617 = vmatprep.subr.bf16.mxu0 0
        %618 = vmatpush1.bf16.msra.mxu0 0
        %619 = vmatprep.subr.bf16.mxu0 0
        %620 = vmatpush1.bf16.msra.mxu0 0
        %621 = vmatprep.subr.bf16.mxu0 0
        %622 = vmatpush1.bf16.msra.mxu0 0
        %623 = vmatprep.subr.bf16.mxu0 0
        %624 = vmatpush1.bf16.msra.mxu0 0
        %625 = vmatprep.subr.bf16.mxu0 0
        %626 = vmatpush1.bf16.msra.mxu0 0
        %627 = vmatprep.subr.bf16.mxu0 0
        %628 = vmatpush1.bf16.msra.mxu0 0
        %629 = vmatprep.subr.bf16.mxu0 0
        %630 = vmatpush1.bf16.msra.mxu0 0
        %631 = vmatprep.subr.bf16.mxu0 0
        %632 = vmatpush1.bf16.msra.mxu0 0
        %633 = vmatprep.subr.bf16.mxu0 0
        %634 = vmatpush1.bf16.msra.mxu0 0
        %635 = vmatprep.subr.bf16.mxu0 0
        %636 = vmatpush1.bf16.msra.mxu0 0
        %637 = vmatprep.subr.bf16.mxu0 0
        %638 = vmatpush1.bf16.msra.mxu0 0
        %639 = vmatprep.mubr.bf16.mxu0 0
        %640 = vmatmul.mubr.bf16.gmra.mrb[0].mxu0 %v560
        %v641 = vpop.f32.mrb[0].mxu0
        %v642 = vadd.f32 0.0, %v641
        %v643 = vpop.f32.mrb[0].mxu0
        %v644 = vpop.f32.mrb[0].mxu0
        %v645 = vadd.f32 0.0, %v644
        %v646 = vpop.f32.mrb[0].mxu0
        %647 = vmatprep.mubr.bf16.mxu0 0
        %648 = vmatmul.mubr.bf16.gmra.mrb[0].mxu0 %v563
        %v649 = vpop.f32.mrb[0].mxu0
        %v650 = vadd.f32 0.0, %v649
        %v651 = vpop.f32.mrb[0].mxu0
        %v652 = vpop.f32.mrb[0].mxu0
        %v653 = vadd.f32 0.0, %v652
        %v654 = vpop.f32.mrb[0].mxu0
        %655 = vmatprep.mubr.bf16.mxu0 0
        %656 = vmatmul.mubr.bf16.gmra.mrb[0].mxu0 %v566
        %v657 = vpop.f32.mrb[0].mxu0
        %v658 = vadd.f32 0.0, %v657
        %v659 = vpop.f32.mrb[0].mxu0
        %v660 = vpop.f32.mrb[0].mxu0
        %v661 = vadd.f32 0.0, %v660
        %v662 = vpop.f32.mrb[0].mxu0
        %663 = vmatprep.mubr.bf16.mxu0 0
        %664 = vmatmul.mubr.bf16.gmra.mrb[0].mxu0 %v569
        %v665 = vpop.f32.mrb[0].mxu0
        %v666 = vadd.f32 0.0, %v665
        %v667 = vpop.f32.mrb[0].mxu0
        %v668 = vpop.f32.mrb[0].mxu0
        %v669 = vadd.f32 0.0, %v668
        %v670 = vpop.f32.mrb[0].mxu0
        %671 = vmatprep.mubr.bf16.mxu0 0
        %672 = vmatmul.mubr.bf16.gmra.mrb[0].mxu0 %v572
        %v673 = vpop.f32.mrb[0].mxu0
        %v674 = vadd.f32 0.0, %v673
        %v675 = vpop.f32.mrb[0].mxu0
        %v676 = vpop.f32.mrb[0].mxu0
        %v677 = vadd.f32 0.0, %v676
        %v678 = vpop.f32.mrb[0].mxu0
        %679 = vmatprep.mubr.bf16.mxu0 0
        %680 = vmatmul.mubr.bf16.gmra.mrb[0].mxu0 %v575
        %v681 = vpop.f32.mrb[0].mxu0
        %v682 = vadd.f32 0.0, %v681
        %v683 = vpop.f32.mrb[0].mxu0
        %v684 = vpop.f32.mrb[0].mxu0
        %v685 = vadd.f32 0.0, %v684
        %v686 = vpop.f32.mrb[0].mxu0
        %687 = vmatprep.mubr.bf16.mxu0 0
        %688 = vmatmul.mubr.bf16.gmra.mrb[0].mxu0 %v578
        %v689 = vpop.f32.mrb[0].mxu0
        %v690 = vadd.f32 0.0, %v689
        %v691 = vpop.f32.mrb[0].mxu0
        %v692 = vpop.f32.mrb[0].mxu0
        %v693 = vadd.f32 0.0, %v692
        %v694 = vpop.f32.mrb[0].mxu0
        %695 = vmatprep.mubr.bf16.mxu0 0
        %696 = vmatmul.mubr.bf16.gmra.mrb[0].mxu0 %v581
        %v697 = vpop.f32.mrb[0].mxu0
        %v698 = vadd.f32 0.0, %v697
        %v699 = vpop.f32.mrb[0].mxu0
        %v700 = vpop.f32.mrb[0].mxu0
        %v701 = vadd.f32 0.0, %v700
        %v702 = vpop.f32.mrb[0].mxu0
        %703 = vmatprep.mubr.bf16.mxu0 0
        %704 = vmatmul.mubr.bf16.gmra.mrb[0].mxu0 %v584
        %v705 = vpop.f32.mrb[0].mxu0
        %v706 = vadd.f32 0.0, %v705
        %v707 = vpop.f32.mrb[0].mxu0
        %v708 = vpop.f32.mrb[0].mxu0
        %v709 = vadd.f32 0.0, %v708
        %v710 = vpop.f32.mrb[0].mxu0
        %711 = vmatprep.mubr.bf16.mxu0 0
        %712 = vmatmul.mubr.bf16.gmra.mrb[0].mxu0 %v587
        %v713 = vpop.f32.mrb[0].mxu0
        %v714 = vadd.f32 0.0, %v713
        %v715 = vpop.f32.mrb[0].mxu0
        %v716 = vpop.f32.mrb[0].mxu0
        %v717 = vadd.f32 0.0, %v716
        %v718 = vpop.f32.mrb[0].mxu0
        %719 = vmatprep.mubr.bf16.mxu0 0
        %720 = vmatmul.mubr.bf16.gmra.mrb[0].mxu0 %v590
        %v721 = vpop.f32.mrb[0].mxu0
        %v722 = vadd.f32 0.0, %v721
        %v723 = vpop.f32.mrb[0].mxu0
        %v724 = vpop.f32.mrb[0].mxu0
        %v725 = vadd.f32 0.0, %v724
        %v726 = vpop.f32.mrb[0].mxu0
        %727 = vmatprep.mubr.bf16.mxu0 0
        %728 = vmatmul.mubr.bf16.gmra.mrb[0].mxu0 %v593
        %v729 = vpop.f32.mrb[0].mxu0
        %v730 = vadd.f32 0.0, %v729
        %v731 = vpop.f32.mrb[0].mxu0
        %v732 = vpop.f32.mrb[0].mxu0
        %v733 = vadd.f32 0.0, %v732
        %v734 = vpop.f32.mrb[0].mxu0
        %735 = vmatprep.mubr.bf16.mxu0 0
        %736 = vmatmul.mubr.bf16.gmra.mrb[0].mxu0 %v596
        %v737 = vpop.f32.mrb[0].mxu0
        %v738 = vadd.f32 0.0, %v737
        %v739 = vpop.f32.mrb[0].mxu0
        %v740 = vpop.f32.mrb[0].mxu0
        %v741 = vadd.f32 0.0, %v740
        %v742 = vpop.f32.mrb[0].mxu0
        %743 = vmatprep.mubr.bf16.mxu0 0
        %744 = vmatmul.mubr.bf16.gmra.mrb[0].mxu0 %v599
        %v745 = vpop.f32.mrb[0].mxu0
        %v746 = vadd.f32 0.0, %v745
        %v747 = vpop.f32.mrb[0].mxu0
        %v748 = vpop.f32.mrb[0].mxu0
        %v749 = vadd.f32 0.0, %v748
        %v750 = vpop.f32.mrb[0].mxu0
        %751 = vmatprep.mubr.bf16.mxu0 0
        %752 = vmatmul.mubr.bf16.gmra.mrb[0].mxu0 %v602
        %v753 = vpop.f32.mrb[0].mxu0
        %v754 = vadd.f32 0.0, %v753
        %v755 = vpop.f32.mrb[0].mxu0
        %v756 = vpop.f32.mrb[0].mxu0
        %v757 = vadd.f32 0.0, %v756
        %v758 = vpop.f32.mrb[0].mxu0
        %759 = vmatprep.mubr.bf16.mxu0 0
        %760 = vmatmul.mubr.bf16.gmra.mrb[0].mxu0 %v605
        %v761 = vpop.f32.mrb[0].mxu0
        %v762 = vadd.f32 0.0, %v761
        %v763 = vpop.f32.mrb[0].mxu0
        %v764 = vpop.f32.mrb[0].mxu0
        %v765 = vadd.f32 0.0, %v764
        %v766 = vpop.f32.mrb[0].mxu0
        %767 = vdwg.mxu0
        %v768 = vpack.c.bf16 %v645, %v642
        %v769 = vpack.c.bf16 %v653, %v650
        %v770 = vpack.c.bf16 %v661, %v658
        %v771 = vpack.c.bf16 %v669, %v666
        %v772 = vpack.c.bf16 %v677, %v674
        %v773 = vpack.c.bf16 %v685, %v682
        %v774 = vpack.c.bf16 %v693, %v690
        %v775 = vpack.c.bf16 %v701, %v698
        %v776 = vpack.c.bf16 %v709, %v706
        %v777 = vpack.c.bf16 %v717, %v714
        %v778 = vpack.c.bf16 %v725, %v722
        %v779 = vpack.c.bf16 %v733, %v730
        %v780 = vpack.c.bf16 %v741, %v738
        %v781 = vpack.c.bf16 %v749, %v746
        %v782 = vpack.c.bf16 %v757, %v754
        %v783 = vpack.c.bf16 %v765, %v762
        %v786 = vunpack.c.l.b16 %v550
        %v787 = vunpack.c.l.b16 %v551
        %v788 = vpack.c.b16 %v787, %v786
        %v790 = vsel %vm558, %v788, 0
        %792 = vmatprep.subr.bf16.mxu0 0
        %793 = vmatpush1.bf16.msra.mxu0 %v768
        %794 = vmatprep.subr.bf16.mxu0 0
        %795 = vmatpush1.bf16.msra.mxu0 0
        %796 = vmatprep.subr.bf16.mxu0 0
        %797 = vmatpush1.bf16.msra.mxu0 0
        %798 = vmatprep.subr.bf16.mxu0 0
        %799 = vmatpush1.bf16.msra.mxu0 0
        %800 = vmatprep.subr.bf16.mxu0 0
        %801 = vmatpush1.bf16.msra.mxu0 0
        %802 = vmatprep.subr.bf16.mxu0 0
        %803 = vmatpush1.bf16.msra.mxu0 0
        %804 = vmatprep.subr.bf16.mxu0 0
        %805 = vmatpush1.bf16.msra.mxu0 0
        %806 = vmatprep.subr.bf16.mxu0 0
        %807 = vmatpush1.bf16.msra.mxu0 0
        %808 = vmatprep.subr.bf16.mxu0 0
        %809 = vmatpush1.bf16.msra.mxu0 0
        %810 = vmatprep.subr.bf16.mxu0 0
        %811 = vmatpush1.bf16.msra.mxu0 0
        %812 = vmatprep.subr.bf16.mxu0 0
        %813 = vmatpush1.bf16.msra.mxu0 0
        %814 = vmatprep.subr.bf16.mxu0 0
        %815 = vmatpush1.bf16.msra.mxu0 0
        %816 = vmatprep.subr.bf16.mxu0 0
        %817 = vmatpush1.bf16.msra.mxu0 0
        %818 = vmatprep.subr.bf16.mxu0 0
        %819 = vmatpush1.bf16.msra.mxu0 0
        %820 = vmatprep.subr.bf16.mxu0 0
        %821 = vmatpush1.bf16.msra.mxu0 0
        %822 = vmatprep.subr.bf16.mxu0 0
        %823 = vmatpush1.bf16.msra.mxu0 0
        %824 = vmatprep.mubr.bf16.mxu0 0
        %825 = vmatmul.mubr.bf16.gmra.mrb[0].mxu0 %v790
        %v826 = vpop.f32.mrb[0].mxu0
        %v827 = vadd.f32 0.0, %v826
        %v828 = vpop.f32.mrb[0].mxu0
        %v829 = vpop.f32.mrb[0].mxu0
        %v830 = vadd.f32 0.0, %v829
        %v831 = vpop.f32.mrb[0].mxu0
        %832 = vdwg.mxu0
        %833 = vmatprep.subr.bf16.mxu0 0
        %834 = vmatpush1.bf16.msra.mxu0 %v769
        %835 = vmatprep.subr.bf16.mxu0 0
        %836 = vmatpush1.bf16.msra.mxu0 0
        %837 = vmatprep.subr.bf16.mxu0 0
        %838 = vmatpush1.bf16.msra.mxu0 0
        %839 = vmatprep.subr.bf16.mxu0 0
        %840 = vmatpush1.bf16.msra.mxu0 0
        %841 = vmatprep.subr.bf16.mxu0 0
        %842 = vmatpush1.bf16.msra.mxu0 0
        %843 = vmatprep.subr.bf16.mxu0 0
        %844 = vmatpush1.bf16.msra.mxu0 0
        %845 = vmatprep.subr.bf16.mxu0 0
        %846 = vmatpush1.bf16.msra.mxu0 0
        %847 = vmatprep.subr.bf16.mxu0 0
        %848 = vmatpush1.bf16.msra.mxu0 0
        %849 = vmatprep.subr.bf16.mxu0 0
        %850 = vmatpush1.bf16.msra.mxu0 0
        %851 = vmatprep.subr.bf16.mxu0 0
        %852 = vmatpush1.bf16.msra.mxu0 0
        %853 = vmatprep.subr.bf16.mxu0 0
        %854 = vmatpush1.bf16.msra.mxu0 0
        %855 = vmatprep.subr.bf16.mxu0 0
        %856 = vmatpush1.bf16.msra.mxu0 0
        %857 = vmatprep.subr.bf16.mxu0 0
        %858 = vmatpush1.bf16.msra.mxu0 0
        %859 = vmatprep.subr.bf16.mxu0 0
        %860 = vmatpush1.bf16.msra.mxu0 0
        %861 = vmatprep.subr.bf16.mxu0 0
        %862 = vmatpush1.bf16.msra.mxu0 0
        %863 = vmatprep.subr.bf16.mxu0 0
        %864 = vmatpush1.bf16.msra.mxu0 0
        %865 = vmatprep.mubr.bf16.mxu0 0
        %866 = vmatmul.mubr.bf16.gmra.mrb[0].mxu0 %v790
        %v867 = vpop.f32.mrb[0].mxu0
        %v868 = vadd.f32 0.0, %v867
        %v869 = vpop.f32.mrb[0].mxu0
        %v870 = vpop.f32.mrb[0].mxu0
        %v871 = vadd.f32 0.0, %v870
        %v872 = vpop.f32.mrb[0].mxu0
        %873 = vdwg.mxu0
        %874 = vmatprep.subr.bf16.mxu0 0
        %875 = vmatpush1.bf16.msra.mxu0 %v770
        %876 = vmatprep.subr.bf16.mxu0 0
        %877 = vmatpush1.bf16.msra.mxu0 0
        %878 = vmatprep.subr.bf16.mxu0 0
        %879 = vmatpush1.bf16.msra.mxu0 0
        %880 = vmatprep.subr.bf16.mxu0 0
        %881 = vmatpush1.bf16.msra.mxu0 0
        %882 = vmatprep.subr.bf16.mxu0 0
        %883 = vmatpush1.bf16.msra.mxu0 0
        %884 = vmatprep.subr.bf16.mxu0 0
        %885 = vmatpush1.bf16.msra.mxu0 0
        %886 = vmatprep.subr.bf16.mxu0 0
        %887 = vmatpush1.bf16.msra.mxu0 0
        %888 = vmatprep.subr.bf16.mxu0 0
        %889 = vmatpush1.bf16.msra.mxu0 0
        %890 = vmatprep.subr.bf16.mxu0 0
        %891 = vmatpush1.bf16.msra.mxu0 0
        %892 = vmatprep.subr.bf16.mxu0 0
        %893 = vmatpush1.bf16.msra.mxu0 0
        %894 = vmatprep.subr.bf16.mxu0 0
        %895 = vmatpush1.bf16.msra.mxu0 0
        %896 = vmatprep.subr.bf16.mxu0 0
        %897 = vmatpush1.bf16.msra.mxu0 0
        %898 = vmatprep.subr.bf16.mxu0 0
        %899 = vmatpush1.bf16.msra.mxu0 0
        %900 = vmatprep.subr.bf16.mxu0 0
        %901 = vmatpush1.bf16.msra.mxu0 0
        %902 = vmatprep.subr.bf16.mxu0 0
        %903 = vmatpush1.bf16.msra.mxu0 0
        %904 = vmatprep.subr.bf16.mxu0 0
        %905 = vmatpush1.bf16.msra.mxu0 0
        %906 = vmatprep.mubr.bf16.mxu0 0
        %907 = vmatmul.mubr.bf16.gmra.mrb[0].mxu0 %v790
        %v908 = vpop.f32.mrb[0].mxu0
        %v909 = vadd.f32 0.0, %v908
        %v910 = vpop.f32.mrb[0].mxu0
        %v911 = vpop.f32.mrb[0].mxu0
        %v912 = vadd.f32 0.0, %v911
        %v913 = vpop.f32.mrb[0].mxu0
        %914 = vdwg.mxu0
        %915 = vmatprep.subr.bf16.mxu0 0
        %916 = vmatpush1.bf16.msra.mxu0 %v771
        %917 = vmatprep.subr.bf16.mxu0 0
        %918 = vmatpush1.bf16.msra.mxu0 0
        %919 = vmatprep.subr.bf16.mxu0 0
        %920 = vmatpush1.bf16.msra.mxu0 0
        %921 = vmatprep.subr.bf16.mxu0 0
        %922 = vmatpush1.bf16.msra.mxu0 0
        %923 = vmatprep.subr.bf16.mxu0 0
        %924 = vmatpush1.bf16.msra.mxu0 0
        %925 = vmatprep.subr.bf16.mxu0 0
        %926 = vmatpush1.bf16.msra.mxu0 0
        %927 = vmatprep.subr.bf16.mxu0 0
        %928 = vmatpush1.bf16.msra.mxu0 0
        %929 = vmatprep.subr.bf16.mxu0 0
        %930 = vmatpush1.bf16.msra.mxu0 0
        %931 = vmatprep.subr.bf16.mxu0 0
        %932 = vmatpush1.bf16.msra.mxu0 0
        %933 = vmatprep.subr.bf16.mxu0 0
        %934 = vmatpush1.bf16.msra.mxu0 0
        %935 = vmatprep.subr.bf16.mxu0 0
        %936 = vmatpush1.bf16.msra.mxu0 0
        %937 = vmatprep.subr.bf16.mxu0 0
        %938 = vmatpush1.bf16.msra.mxu0 0
        %939 = vmatprep.subr.bf16.mxu0 0
        %940 = vmatpush1.bf16.msra.mxu0 0
        %941 = vmatprep.subr.bf16.mxu0 0
        %942 = vmatpush1.bf16.msra.mxu0 0
        %943 = vmatprep.subr.bf16.mxu0 0
        %944 = vmatpush1.bf16.msra.mxu0 0
        %945 = vmatprep.subr.bf16.mxu0 0
        %946 = vmatpush1.bf16.msra.mxu0 0
        %947 = vmatprep.mubr.bf16.mxu0 0
        %948 = vmatmul.mubr.bf16.gmra.mrb[0].mxu0 %v790
        %v949 = vpop.f32.mrb[0].mxu0
        %v950 = vadd.f32 0.0, %v949
        %v951 = vpop.f32.mrb[0].mxu0
        %v952 = vpop.f32.mrb[0].mxu0
        %v953 = vadd.f32 0.0, %v952
        %v954 = vpop.f32.mrb[0].mxu0
        %955 = vdwg.mxu0
        %956 = vmatprep.subr.bf16.mxu0 0
        %957 = vmatpush1.bf16.msra.mxu0 %v772
        %958 = vmatprep.subr.bf16.mxu0 0
        %959 = vmatpush1.bf16.msra.mxu0 0
        %960 = vmatprep.subr.bf16.mxu0 0
        %961 = vmatpush1.bf16.msra.mxu0 0
        %962 = vmatprep.subr.bf16.mxu0 0
        %963 = vmatpush1.bf16.msra.mxu0 0
        %964 = vmatprep.subr.bf16.mxu0 0
        %965 = vmatpush1.bf16.msra.mxu0 0
        %966 = vmatprep.subr.bf16.mxu0 0
        %967 = vmatpush1.bf16.msra.mxu0 0
        %968 = vmatprep.subr.bf16.mxu0 0
        %969 = vmatpush1.bf16.msra.mxu0 0
        %970 = vmatprep.subr.bf16.mxu0 0
        %971 = vmatpush1.bf16.msra.mxu0 0
        %972 = vmatprep.subr.bf16.mxu0 0
        %973 = vmatpush1.bf16.msra.mxu0 0
        %974 = vmatprep.subr.bf16.mxu0 0
        %975 = vmatpush1.bf16.msra.mxu0 0
        %976 = vmatprep.subr.bf16.mxu0 0
        %977 = vmatpush1.bf16.msra.mxu0 0
        %978 = vmatprep.subr.bf16.mxu0 0
        %979 = vmatpush1.bf16.msra.mxu0 0
        %980 = vmatprep.subr.bf16.mxu0 0
        %981 = vmatpush1.bf16.msra.mxu0 0
        %982 = vmatprep.subr.bf16.mxu0 0
        %983 = vmatpush1.bf16.msra.mxu0 0
        %984 = vmatprep.subr.bf16.mxu0 0
        %985 = vmatpush1.bf16.msra.mxu0 0
        %986 = vmatprep.subr.bf16.mxu0 0
        %987 = vmatpush1.bf16.msra.mxu0 0
        %988 = vmatprep.mubr.bf16.mxu0 0
        %989 = vmatmul.mubr.bf16.gmra.mrb[0].mxu0 %v790
        %v990 = vpop.f32.mrb[0].mxu0
        %v991 = vadd.f32 0.0, %v990
        %v992 = vpop.f32.mrb[0].mxu0
        %v993 = vpop.f32.mrb[0].mxu0
        %v994 = vadd.f32 0.0, %v993
        %v995 = vpop.f32.mrb[0].mxu0
        %996 = vdwg.mxu0
        %997 = vmatprep.subr.bf16.mxu0 0
        %998 = vmatpush1.bf16.msra.mxu0 %v773
        %999 = vmatprep.subr.bf16.mxu0 0
        %1000 = vmatpush1.bf16.msra.mxu0 0
        %1001 = vmatprep.subr.bf16.mxu0 0
        %1002 = vmatpush1.bf16.msra.mxu0 0
        %1003 = vmatprep.subr.bf16.mxu0 0
        %1004 = vmatpush1.bf16.msra.mxu0 0
        %1005 = vmatprep.subr.bf16.mxu0 0
        %1006 = vmatpush1.bf16.msra.mxu0 0
        %1007 = vmatprep.subr.bf16.mxu0 0
        %1008 = vmatpush1.bf16.msra.mxu0 0
        %1009 = vmatprep.subr.bf16.mxu0 0
        %1010 = vmatpush1.bf16.msra.mxu0 0
        %1011 = vmatprep.subr.bf16.mxu0 0
        %1012 = vmatpush1.bf16.msra.mxu0 0
        %1013 = vmatprep.subr.bf16.mxu0 0
        %1014 = vmatpush1.bf16.msra.mxu0 0
        %1015 = vmatprep.subr.bf16.mxu0 0
        %1016 = vmatpush1.bf16.msra.mxu0 0
        %1017 = vmatprep.subr.bf16.mxu0 0
        %1018 = vmatpush1.bf16.msra.mxu0 0
        %1019 = vmatprep.subr.bf16.mxu0 0
        %1020 = vmatpush1.bf16.msra.mxu0 0
        %1021 = vmatprep.subr.bf16.mxu0 0
        %1022 = vmatpush1.bf16.msra.mxu0 0
        %1023 = vmatprep.subr.bf16.mxu0 0
        %1024 = vmatpush1.bf16.msra.mxu0 0
        %1025 = vmatprep.subr.bf16.mxu0 0
        %1026 = vmatpush1.bf16.msra.mxu0 0
        %1027 = vmatprep.subr.bf16.mxu0 0
        %1028 = vmatpush1.bf16.msra.mxu0 0
        %1029 = vmatprep.mubr.bf16.mxu0 0
        %1030 = vmatmul.mubr.bf16.gmra.mrb[0].mxu0 %v790
        %v1031 = vpop.f32.mrb[0].mxu0
        %v1032 = vadd.f32 0.0, %v1031
        %v1033 = vpop.f32.mrb[0].mxu0
        %v1034 = vpop.f32.mrb[0].mxu0
        %v1035 = vadd.f32 0.0, %v1034
        %v1036 = vpop.f32.mrb[0].mxu0
        %1037 = vdwg.mxu0
        %1038 = vmatprep.subr.bf16.mxu0 0
        %1039 = vmatpush1.bf16.msra.mxu0 %v774
        %1040 = vmatprep.subr.bf16.mxu0 0
        %1041 = vmatpush1.bf16.msra.mxu0 0
        %1042 = vmatprep.subr.bf16.mxu0 0
        %1043 = vmatpush1.bf16.msra.mxu0 0
        %1044 = vmatprep.subr.bf16.mxu0 0
        %1045 = vmatpush1.bf16.msra.mxu0 0
        %1046 = vmatprep.subr.bf16.mxu0 0
        %1047 = vmatpush1.bf16.msra.mxu0 0
        %1048 = vmatprep.subr.bf16.mxu0 0
        %1049 = vmatpush1.bf16.msra.mxu0 0
        %1050 = vmatprep.subr.bf16.mxu0 0
        %1051 = vmatpush1.bf16.msra.mxu0 0
        %1052 = vmatprep.subr.bf16.mxu0 0
        %1053 = vmatpush1.bf16.msra.mxu0 0
        %1054 = vmatprep.subr.bf16.mxu0 0
        %1055 = vmatpush1.bf16.msra.mxu0 0
        %1056 = vmatprep.subr.bf16.mxu0 0
        %1057 = vmatpush1.bf16.msra.mxu0 0
        %1058 = vmatprep.subr.bf16.mxu0 0
        %1059 = vmatpush1.bf16.msra.mxu0 0
        %1060 = vmatprep.subr.bf16.mxu0 0
        %1061 = vmatpush1.bf16.msra.mxu0 0
        %1062 = vmatprep.subr.bf16.mxu0 0
        %1063 = vmatpush1.bf16.msra.mxu0 0
        %1064 = vmatprep.subr.bf16.mxu0 0
        %1065 = vmatpush1.bf16.msra.mxu0 0
        %1066 = vmatprep.subr.bf16.mxu0 0
        %1067 = vmatpush1.bf16.msra.mxu0 0
        %1068 = vmatprep.subr.bf16.mxu0 0
        %1069 = vmatpush1.bf16.msra.mxu0 0
        %1070 = vmatprep.mubr.bf16.mxu0 0
        %1071 = vmatmul.mubr.bf16.gmra.mrb[0].mxu0 %v790
        %v1072 = vpop.f32.mrb[0].mxu0
        %v1073 = vadd.f32 0.0, %v1072
        %v1074 = vpop.f32.mrb[0].mxu0
        %v1075 = vpop.f32.mrb[0].mxu0
        %v1076 = vadd.f32 0.0, %v1075
        %v1077 = vpop.f32.mrb[0].mxu0
        %1078 = vdwg.mxu0
        %1079 = vmatprep.subr.bf16.mxu0 0
        %1080 = vmatpush1.bf16.msra.mxu0 %v775
        %1081 = vmatprep.subr.bf16.mxu0 0
        %1082 = vmatpush1.bf16.msra.mxu0 0
        %1083 = vmatprep.subr.bf16.mxu0 0
        %1084 = vmatpush1.bf16.msra.mxu0 0
        %1085 = vmatprep.subr.bf16.mxu0 0
        %1086 = vmatpush1.bf16.msra.mxu0 0
        %1087 = vmatprep.subr.bf16.mxu0 0
        %1088 = vmatpush1.bf16.msra.mxu0 0
        %1089 = vmatprep.subr.bf16.mxu0 0
        %1090 = vmatpush1.bf16.msra.mxu0 0
        %1091 = vmatprep.subr.bf16.mxu0 0
        %1092 = vmatpush1.bf16.msra.mxu0 0
        %1093 = vmatprep.subr.bf16.mxu0 0
        %1094 = vmatpush1.bf16.msra.mxu0 0
        %1095 = vmatprep.subr.bf16.mxu0 0
        %1096 = vmatpush1.bf16.msra.mxu0 0
        %1097 = vmatprep.subr.bf16.mxu0 0
        %1098 = vmatpush1.bf16.msra.mxu0 0
        %1099 = vmatprep.subr.bf16.mxu0 0
        %1100 = vmatpush1.bf16.msra.mxu0 0
        %1101 = vmatprep.subr.bf16.mxu0 0
        %1102 = vmatpush1.bf16.msra.mxu0 0
        %1103 = vmatprep.subr.bf16.mxu0 0
        %1104 = vmatpush1.bf16.msra.mxu0 0
        %1105 = vmatprep.subr.bf16.mxu0 0
        %1106 = vmatpush1.bf16.msra.mxu0 0
        %1107 = vmatprep.subr.bf16.mxu0 0
        %1108 = vmatpush1.bf16.msra.mxu0 0
        %1109 = vmatprep.subr.bf16.mxu0 0
        %1110 = vmatpush1.bf16.msra.mxu0 0
        %1111 = vmatprep.mubr.bf16.mxu0 0
        %1112 = vmatmul.mubr.bf16.gmra.mrb[0].mxu0 %v790
        %v1113 = vpop.f32.mrb[0].mxu0
        %v1114 = vadd.f32 0.0, %v1113
        %v1115 = vpop.f32.mrb[0].mxu0
        %v1116 = vpop.f32.mrb[0].mxu0
        %v1117 = vadd.f32 0.0, %v1116
        %v1118 = vpop.f32.mrb[0].mxu0
        %1119 = vdwg.mxu0
        %1120 = vmatprep.subr.bf16.mxu0 0
        %1121 = vmatpush1.bf16.msra.mxu0 %v776
        %1122 = vmatprep.subr.bf16.mxu0 0
        %1123 = vmatpush1.bf16.msra.mxu0 0
        %1124 = vmatprep.subr.bf16.mxu0 0
        %1125 = vmatpush1.bf16.msra.mxu0 0
        %1126 = vmatprep.subr.bf16.mxu0 0
        %1127 = vmatpush1.bf16.msra.mxu0 0
        %1128 = vmatprep.subr.bf16.mxu0 0
        %1129 = vmatpush1.bf16.msra.mxu0 0
        %1130 = vmatprep.subr.bf16.mxu0 0
        %1131 = vmatpush1.bf16.msra.mxu0 0
        %1132 = vmatprep.subr.bf16.mxu0 0
        %1133 = vmatpush1.bf16.msra.mxu0 0
        %1134 = vmatprep.subr.bf16.mxu0 0
        %1135 = vmatpush1.bf16.msra.mxu0 0
        %1136 = vmatprep.subr.bf16.mxu0 0
        %1137 = vmatpush1.bf16.msra.mxu0 0
        %1138 = vmatprep.subr.bf16.mxu0 0
        %1139 = vmatpush1.bf16.msra.mxu0 0
        %1140 = vmatprep.subr.bf16.mxu0 0
        %1141 = vmatpush1.bf16.msra.mxu0 0
        %1142 = vmatprep.subr.bf16.mxu0 0
        %1143 = vmatpush1.bf16.msra.mxu0 0
        %1144 = vmatprep.subr.bf16.mxu0 0
        %1145 = vmatpush1.bf16.msra.mxu0 0
        %1146 = vmatprep.subr.bf16.mxu0 0
        %1147 = vmatpush1.bf16.msra.mxu0 0
        %1148 = vmatprep.subr.bf16.mxu0 0
        %1149 = vmatpush1.bf16.msra.mxu0 0
        %1150 = vmatprep.subr.bf16.mxu0 0
        %1151 = vmatpush1.bf16.msra.mxu0 0
        %1152 = vmatprep.mubr.bf16.mxu0 0
        %1153 = vmatmul.mubr.bf16.gmra.mrb[0].mxu0 %v790
        %v1154 = vpop.f32.mrb[0].mxu0
        %v1155 = vadd.f32 0.0, %v1154
        %v1156 = vpop.f32.mrb[0].mxu0
        %v1157 = vpop.f32.mrb[0].mxu0
        %v1158 = vadd.f32 0.0, %v1157
        %v1159 = vpop.f32.mrb[0].mxu0
        %1160 = vdwg.mxu0
        %1161 = vmatprep.subr.bf16.mxu0 0
        %1162 = vmatpush1.bf16.msra.mxu0 %v777
        %1163 = vmatprep.subr.bf16.mxu0 0
        %1164 = vmatpush1.bf16.msra.mxu0 0
        %1165 = vmatprep.subr.bf16.mxu0 0
        %1166 = vmatpush1.bf16.msra.mxu0 0
        %1167 = vmatprep.subr.bf16.mxu0 0
        %1168 = vmatpush1.bf16.msra.mxu0 0
        %1169 = vmatprep.subr.bf16.mxu0 0
        %1170 = vmatpush1.bf16.msra.mxu0 0
        %1171 = vmatprep.subr.bf16.mxu0 0
        %1172 = vmatpush1.bf16.msra.mxu0 0
        %1173 = vmatprep.subr.bf16.mxu0 0
        %1174 = vmatpush1.bf16.msra.mxu0 0
        %1175 = vmatprep.subr.bf16.mxu0 0
        %1176 = vmatpush1.bf16.msra.mxu0 0
        %1177 = vmatprep.subr.bf16.mxu0 0
        %1178 = vmatpush1.bf16.msra.mxu0 0
        %1179 = vmatprep.subr.bf16.mxu0 0
        %1180 = vmatpush1.bf16.msra.mxu0 0
        %1181 = vmatprep.subr.bf16.mxu0 0
        %1182 = vmatpush1.bf16.msra.mxu0 0
        %1183 = vmatprep.subr.bf16.mxu0 0
        %1184 = vmatpush1.bf16.msra.mxu0 0
        %1185 = vmatprep.subr.bf16.mxu0 0
        %1186 = vmatpush1.bf16.msra.mxu0 0
        %1187 = vmatprep.subr.bf16.mxu0 0
        %1188 = vmatpush1.bf16.msra.mxu0 0
        %1189 = vmatprep.subr.bf16.mxu0 0
        %1190 = vmatpush1.bf16.msra.mxu0 0
        %1191 = vmatprep.subr.bf16.mxu0 0
        %1192 = vmatpush1.bf16.msra.mxu0 0
        %1193 = vmatprep.mubr.bf16.mxu0 0
        %1194 = vmatmul.mubr.bf16.gmra.mrb[0].mxu0 %v790
        %v1195 = vpop.f32.mrb[0].mxu0
        %v1196 = vadd.f32 0.0, %v1195
        %v1197 = vpop.f32.mrb[0].mxu0
        %v1198 = vpop.f32.mrb[0].mxu0
        %v1199 = vadd.f32 0.0, %v1198
        %v1200 = vpop.f32.mrb[0].mxu0
        %1201 = vdwg.mxu0
        %1202 = vmatprep.subr.bf16.mxu0 0
        %1203 = vmatpush1.bf16.msra.mxu0 %v778
        %1204 = vmatprep.subr.bf16.mxu0 0
        %1205 = vmatpush1.bf16.msra.mxu0 0
        %1206 = vmatprep.subr.bf16.mxu0 0
        %1207 = vmatpush1.bf16.msra.mxu0 0
        %1208 = vmatprep.subr.bf16.mxu0 0
        %1209 = vmatpush1.bf16.msra.mxu0 0
        %1210 = vmatprep.subr.bf16.mxu0 0
        %1211 = vmatpush1.bf16.msra.mxu0 0
        %1212 = vmatprep.subr.bf16.mxu0 0
        %1213 = vmatpush1.bf16.msra.mxu0 0
        %1214 = vmatprep.subr.bf16.mxu0 0
        %1215 = vmatpush1.bf16.msra.mxu0 0
        %1216 = vmatprep.subr.bf16.mxu0 0
        %1217 = vmatpush1.bf16.msra.mxu0 0
        %1218 = vmatprep.subr.bf16.mxu0 0
        %1219 = vmatpush1.bf16.msra.mxu0 0
        %1220 = vmatprep.subr.bf16.mxu0 0
        %1221 = vmatpush1.bf16.msra.mxu0 0
        %1222 = vmatprep.subr.bf16.mxu0 0
        %1223 = vmatpush1.bf16.msra.mxu0 0
        %1224 = vmatprep.subr.bf16.mxu0 0
        %1225 = vmatpush1.bf16.msra.mxu0 0
        %1226 = vmatprep.subr.bf16.mxu0 0
        %1227 = vmatpush1.bf16.msra.mxu0 0
        %1228 = vmatprep.subr.bf16.mxu0 0
        %1229 = vmatpush1.bf16.msra.mxu0 0
        %1230 = vmatprep.subr.bf16.mxu0 0
        %1231 = vmatpush1.bf16.msra.mxu0 0
        %1232 = vmatprep.subr.bf16.mxu0 0
        %1233 = vmatpush1.bf16.msra.mxu0 0
        %1234 = vmatprep.mubr.bf16.mxu0 0
        %1235 = vmatmul.mubr.bf16.gmra.mrb[0].mxu0 %v790
        %v1236 = vpop.f32.mrb[0].mxu0
        %v1237 = vadd.f32 0.0, %v1236
        %v1238 = vpop.f32.mrb[0].mxu0
        %v1239 = vpop.f32.mrb[0].mxu0
        %v1240 = vadd.f32 0.0, %v1239
        %v1241 = vpop.f32.mrb[0].mxu0
        %1242 = vdwg.mxu0
        %1243 = vmatprep.subr.bf16.mxu0 0
        %1244 = vmatpush1.bf16.msra.mxu0 %v779
        %1245 = vmatprep.subr.bf16.mxu0 0
        %1246 = vmatpush1.bf16.msra.mxu0 0
        %1247 = vmatprep.subr.bf16.mxu0 0
        %1248 = vmatpush1.bf16.msra.mxu0 0
        %1249 = vmatprep.subr.bf16.mxu0 0
        %1250 = vmatpush1.bf16.msra.mxu0 0
        %1251 = vmatprep.subr.bf16.mxu0 0
        %1252 = vmatpush1.bf16.msra.mxu0 0
        %1253 = vmatprep.subr.bf16.mxu0 0
        %1254 = vmatpush1.bf16.msra.mxu0 0
        %1255 = vmatprep.subr.bf16.mxu0 0
        %1256 = vmatpush1.bf16.msra.mxu0 0
        %1257 = vmatprep.subr.bf16.mxu0 0
        %1258 = vmatpush1.bf16.msra.mxu0 0
        %1259 = vmatprep.subr.bf16.mxu0 0
        %1260 = vmatpush1.bf16.msra.mxu0 0
        %1261 = vmatprep.subr.bf16.mxu0 0
        %1262 = vmatpush1.bf16.msra.mxu0 0
        %1263 = vmatprep.subr.bf16.mxu0 0
        %1264 = vmatpush1.bf16.msra.mxu0 0
        %1265 = vmatprep.subr.bf16.mxu0 0
        %1266 = vmatpush1.bf16.msra.mxu0 0
        %1267 = vmatprep.subr.bf16.mxu0 0
        %1268 = vmatpush1.bf16.msra.mxu0 0
        %1269 = vmatprep.subr.bf16.mxu0 0
        %1270 = vmatpush1.bf16.msra.mxu0 0
        %1271 = vmatprep.subr.bf16.mxu0 0
        %1272 = vmatpush1.bf16.msra.mxu0 0
        %1273 = vmatprep.subr.bf16.mxu0 0
        %1274 = vmatpush1.bf16.msra.mxu0 0
        %1275 = vmatprep.mubr.bf16.mxu0 0
        %1276 = vmatmul.mubr.bf16.gmra.mrb[0].mxu0 %v790
        %v1277 = vpop.f32.mrb[0].mxu0
        %v1278 = vadd.f32 0.0, %v1277
        %v1279 = vpop.f32.mrb[0].mxu0
        %v1280 = vpop.f32.mrb[0].mxu0
        %v1281 = vadd.f32 0.0, %v1280
        %v1282 = vpop.f32.mrb[0].mxu0
        %1283 = vdwg.mxu0
        %1284 = vmatprep.subr.bf16.mxu0 0
        %1285 = vmatpush1.bf16.msra.mxu0 %v780
        %1286 = vmatprep.subr.bf16.mxu0 0
        %1287 = vmatpush1.bf16.msra.mxu0 0
        %1288 = vmatprep.subr.bf16.mxu0 0
        %1289 = vmatpush1.bf16.msra.mxu0 0
        %1290 = vmatprep.subr.bf16.mxu0 0
        %1291 = vmatpush1.bf16.msra.mxu0 0
        %1292 = vmatprep.subr.bf16.mxu0 0
        %1293 = vmatpush1.bf16.msra.mxu0 0
        %1294 = vmatprep.subr.bf16.mxu0 0
        %1295 = vmatpush1.bf16.msra.mxu0 0
        %1296 = vmatprep.subr.bf16.mxu0 0
        %1297 = vmatpush1.bf16.msra.mxu0 0
        %1298 = vmatprep.subr.bf16.mxu0 0
        %1299 = vmatpush1.bf16.msra.mxu0 0
        %1300 = vmatprep.subr.bf16.mxu0 0
        %1301 = vmatpush1.bf16.msra.mxu0 0
        %1302 = vmatprep.subr.bf16.mxu0 0
        %1303 = vmatpush1.bf16.msra.mxu0 0
        %1304 = vmatprep.subr.bf16.mxu0 0
        %1305 = vmatpush1.bf16.msra.mxu0 0
        %1306 = vmatprep.subr.bf16.mxu0 0
        %1307 = vmatpush1.bf16.msra.mxu0 0
        %1308 = vmatprep.subr.bf16.mxu0 0
        %1309 = vmatpush1.bf16.msra.mxu0 0
        %1310 = vmatprep.subr.bf16.mxu0 0
        %1311 = vmatpush1.bf16.msra.mxu0 0
        %1312 = vmatprep.subr.bf16.mxu0 0
        %1313 = vmatpush1.bf16.msra.mxu0 0
        %1314 = vmatprep.subr.bf16.mxu0 0
        %1315 = vmatpush1.bf16.msra.mxu0 0
        %1316 = vmatprep.mubr.bf16.mxu0 0
        %1317 = vmatmul.mubr.bf16.gmra.mrb[0].mxu0 %v790
        %v1318 = vpop.f32.mrb[0].mxu0
        %v1319 = vadd.f32 0.0, %v1318
        %v1320 = vpop.f32.mrb[0].mxu0
        %v1321 = vpop.f32.mrb[0].mxu0
        %v1322 = vadd.f32 0.0, %v1321
        %v1323 = vpop.f32.mrb[0].mxu0
        %1324 = vdwg.mxu0
        %1325 = vmatprep.subr.bf16.mxu0 0
        %1326 = vmatpush1.bf16.msra.mxu0 %v781
        %1327 = vmatprep.subr.bf16.mxu0 0
        %1328 = vmatpush1.bf16.msra.mxu0 0
        %1329 = vmatprep.subr.bf16.mxu0 0
        %1330 = vmatpush1.bf16.msra.mxu0 0
        %1331 = vmatprep.subr.bf16.mxu0 0
        %1332 = vmatpush1.bf16.msra.mxu0 0
        %1333 = vmatprep.subr.bf16.mxu0 0
        %1334 = vmatpush1.bf16.msra.mxu0 0
        %1335 = vmatprep.subr.bf16.mxu0 0
        %1336 = vmatpush1.bf16.msra.mxu0 0
        %1337 = vmatprep.subr.bf16.mxu0 0
        %1338 = vmatpush1.bf16.msra.mxu0 0
        %1339 = vmatprep.subr.bf16.mxu0 0
        %1340 = vmatpush1.bf16.msra.mxu0 0
        %1341 = vmatprep.subr.bf16.mxu0 0
        %1342 = vmatpush1.bf16.msra.mxu0 0
        %1343 = vmatprep.subr.bf16.mxu0 0
        %1344 = vmatpush1.bf16.msra.mxu0 0
        %1345 = vmatprep.subr.bf16.mxu0 0
        %1346 = vmatpush1.bf16.msra.mxu0 0
        %1347 = vmatprep.subr.bf16.mxu0 0
        %1348 = vmatpush1.bf16.msra.mxu0 0
        %1349 = vmatprep.subr.bf16.mxu0 0
        %1350 = vmatpush1.bf16.msra.mxu0 0
        %1351 = vmatprep.subr.bf16.mxu0 0
        %1352 = vmatpush1.bf16.msra.mxu0 0
        %1353 = vmatprep.subr.bf16.mxu0 0
        %1354 = vmatpush1.bf16.msra.mxu0 0
        %1355 = vmatprep.subr.bf16.mxu0 0
        %1356 = vmatpush1.bf16.msra.mxu0 0
        %1357 = vmatprep.mubr.bf16.mxu0 0
        %1358 = vmatmul.mubr.bf16.gmra.mrb[0].mxu0 %v790
        %v1359 = vpop.f32.mrb[0].mxu0
        %v1360 = vadd.f32 0.0, %v1359
        %v1361 = vpop.f32.mrb[0].mxu0
        %v1362 = vpop.f32.mrb[0].mxu0
        %v1363 = vadd.f32 0.0, %v1362
        %v1364 = vpop.f32.mrb[0].mxu0
        %1365 = vdwg.mxu0
        %1366 = vmatprep.subr.bf16.mxu0 0
        %1367 = vmatpush1.bf16.msra.mxu0 %v782
        %1368 = vmatprep.subr.bf16.mxu0 0
        %1369 = vmatpush1.bf16.msra.mxu0 0
        %1370 = vmatprep.subr.bf16.mxu0 0
        %1371 = vmatpush1.bf16.msra.mxu0 0
        %1372 = vmatprep.subr.bf16.mxu0 0
        %1373 = vmatpush1.bf16.msra.mxu0 0
        %1374 = vmatprep.subr.bf16.mxu0 0
        %1375 = vmatpush1.bf16.msra.mxu0 0
        %1376 = vmatprep.subr.bf16.mxu0 0
        %1377 = vmatpush1.bf16.msra.mxu0 0
        %1378 = vmatprep.subr.bf16.mxu0 0
        %1379 = vmatpush1.bf16.msra.mxu0 0
        %1380 = vmatprep.subr.bf16.mxu0 0
        %1381 = vmatpush1.bf16.msra.mxu0 0
        %1382 = vmatprep.subr.bf16.mxu0 0
        %1383 = vmatpush1.bf16.msra.mxu0 0
        %1384 = vmatprep.subr.bf16.mxu0 0
        %1385 = vmatpush1.bf16.msra.mxu0 0
        %1386 = vmatprep.subr.bf16.mxu0 0
        %1387 = vmatpush1.bf16.msra.mxu0 0
        %1388 = vmatprep.subr.bf16.mxu0 0
        %1389 = vmatpush1.bf16.msra.mxu0 0
        %1390 = vmatprep.subr.bf16.mxu0 0
        %1391 = vmatpush1.bf16.msra.mxu0 0
        %1392 = vmatprep.subr.bf16.mxu0 0
        %1393 = vmatpush1.bf16.msra.mxu0 0
        %1394 = vmatprep.subr.bf16.mxu0 0
        %1395 = vmatpush1.bf16.msra.mxu0 0
        %1396 = vmatprep.subr.bf16.mxu0 0
        %1397 = vmatpush1.bf16.msra.mxu0 0
        %1398 = vmatprep.mubr.bf16.mxu0 0
        %1399 = vmatmul.mubr.bf16.gmra.mrb[0].mxu0 %v790
        %v1400 = vpop.f32.mrb[0].mxu0
        %v1401 = vadd.f32 0.0, %v1400
        %v1402 = vpop.f32.mrb[0].mxu0
        %v1403 = vpop.f32.mrb[0].mxu0
        %v1404 = vadd.f32 0.0, %v1403
        %v1405 = vpop.f32.mrb[0].mxu0
        %1406 = vdwg.mxu0
        %1407 = vmatprep.subr.bf16.mxu0 0
        %1408 = vmatpush1.bf16.msra.mxu0 %v783
        %1409 = vmatprep.subr.bf16.mxu0 0
        %1410 = vmatpush1.bf16.msra.mxu0 0
        %1411 = vmatprep.subr.bf16.mxu0 0
        %1412 = vmatpush1.bf16.msra.mxu0 0
        %1413 = vmatprep.subr.bf16.mxu0 0
        %1414 = vmatpush1.bf16.msra.mxu0 0
        %1415 = vmatprep.subr.bf16.mxu0 0
        %1416 = vmatpush1.bf16.msra.mxu0 0
        %1417 = vmatprep.subr.bf16.mxu0 0
        %1418 = vmatpush1.bf16.msra.mxu0 0
        %1419 = vmatprep.subr.bf16.mxu0 0
        %1420 = vmatpush1.bf16.msra.mxu0 0
        %1421 = vmatprep.subr.bf16.mxu0 0
        %1422 = vmatpush1.bf16.msra.mxu0 0
        %1423 = vmatprep.subr.bf16.mxu0 0
        %1424 = vmatpush1.bf16.msra.mxu0 0
        %1425 = vmatprep.subr.bf16.mxu0 0
        %1426 = vmatpush1.bf16.msra.mxu0 0
        %1427 = vmatprep.subr.bf16.mxu0 0
        %1428 = vmatpush1.bf16.msra.mxu0 0
        %1429 = vmatprep.subr.bf16.mxu0 0
        %1430 = vmatpush1.bf16.msra.mxu0 0
        %1431 = vmatprep.subr.bf16.mxu0 0
        %1432 = vmatpush1.bf16.msra.mxu0 0
        %1433 = vmatprep.subr.bf16.mxu0 0
        %1434 = vmatpush1.bf16.msra.mxu0 0
        %1435 = vmatprep.subr.bf16.mxu0 0
        %1436 = vmatpush1.bf16.msra.mxu0 0
        %1437 = vmatprep.subr.bf16.mxu0 0
        %1438 = vmatpush1.bf16.msra.mxu0 0
        %1439 = vmatprep.mubr.bf16.mxu0 0
        %1440 = vmatmul.mubr.bf16.gmra.mrb[0].mxu0 %v790
        %v1441 = vpop.f32.mrb[0].mxu0
        %v1442 = vadd.f32 0.0, %v1441
        %v1443 = vpop.f32.mrb[0].mxu0
        %v1444 = vpop.f32.mrb[0].mxu0
        %v1445 = vadd.f32 0.0, %v1444
        %v1446 = vpop.f32.mrb[0].mxu0
        %1447 = vdwg.mxu0
        %v1448 = vcombine.low %v827, %v909
        %v1449 = vcombine.high %v827, %v909
        %v1451 = vunpack.c.l.s4 1983009808
        %v1452 = vunpack.c.0.s8 %v1451
        %v1453 = vlaneseq
        %v1454 = vshrl.u32 %v1453, 7
        %v1455 = vsub.s32 %v1452, %v1454
        %v1456 = vrot.slane %v1448, %v1455
        %v1458 = vunpack.c.l.s4 1983009808
        %v1459 = vunpack.c.0.s8 %v1458
        %v1460 = vlaneseq
        %v1461 = vshrl.u32 %v1460, 7
        %v1462 = vsub.s32 %v1459, %v1461
        %v1463 = vrot.slane %v1449, %v1462
        %v1464 = vcombine.low %v868, %v950
        %v1465 = vcombine.high %v868, %v950
        %v1467 = vunpack.c.l.s4 1983009808
        %v1468 = vunpack.c.0.s8 %v1467
        %v1469 = vlaneseq
        %v1470 = vshrl.u32 %v1469, 7
        %v1471 = vsub.s32 %v1468, %v1470
        %v1472 = vrot.slane %v1464, %v1471
        %v1474 = vunpack.c.l.s4 1983009808
        %v1475 = vunpack.c.0.s8 %v1474
        %v1476 = vlaneseq
        %v1477 = vshrl.u32 %v1476, 7
        %v1478 = vsub.s32 %v1475, %v1477
        %v1479 = vrot.slane %v1465, %v1478
        %v1480 = vcombine.low %v991, %v1073
        %v1481 = vcombine.high %v991, %v1073
        %v1483 = vunpack.c.l.s4 1983009808
        %v1484 = vunpack.c.0.s8 %v1483
        %v1485 = vlaneseq
        %v1486 = vshrl.u32 %v1485, 7
        %v1487 = vsub.s32 %v1484, %v1486
        %v1488 = vrot.slane %v1480, %v1487
        %v1490 = vunpack.c.l.s4 1983009808
        %v1491 = vunpack.c.0.s8 %v1490
        %v1492 = vlaneseq
        %v1493 = vshrl.u32 %v1492, 7
        %v1494 = vsub.s32 %v1491, %v1493
        %v1495 = vrot.slane %v1481, %v1494
        %v1496 = vcombine.low %v1032, %v1114
        %v1497 = vcombine.high %v1032, %v1114
        %v1499 = vunpack.c.l.s4 1983009808
        %v1500 = vunpack.c.0.s8 %v1499
        %v1501 = vlaneseq
        %v1502 = vshrl.u32 %v1501, 7
        %v1503 = vsub.s32 %v1500, %v1502
        %v1504 = vrot.slane %v1496, %v1503
        %v1506 = vunpack.c.l.s4 1983009808
        %v1507 = vunpack.c.0.s8 %v1506
        %v1508 = vlaneseq
        %v1509 = vshrl.u32 %v1508, 7
        %v1510 = vsub.s32 %v1507, %v1509
        %v1511 = vrot.slane %v1497, %v1510
        %v1512 = vcombine.low %v1456, %v1472
        %v1513 = vcombine.high %v1456, %v1472
        %v1515 = vunpack.c.l.s4 1934713408
        %v1516 = vunpack.c.0.s8 %v1515
        %v1517 = vlaneseq
        %v1518 = vshrl.u32 %v1517, 7
        %v1519 = vsub.s32 %v1516, %v1518
        %v1520 = vrot.slane %v1512, %v1519
        %v1522 = vunpack.c.l.s4 1934713408
        %v1523 = vunpack.c.0.s8 %v1522
        %v1524 = vlaneseq
        %v1525 = vshrl.u32 %v1524, 7
        %v1526 = vsub.s32 %v1523, %v1525
        %v1527 = vrot.slane %v1513, %v1526
        %v1528 = vcombine.low %v1463, %v1479
        %v1529 = vcombine.high %v1463, %v1479
        %v1531 = vunpack.c.l.s4 1934713408
        %v1532 = vunpack.c.0.s8 %v1531
        %v1533 = vlaneseq
        %v1534 = vshrl.u32 %v1533, 7
        %v1535 = vsub.s32 %v1532, %v1534
        %v1536 = vrot.slane %v1528, %v1535
        %v1538 = vunpack.c.l.s4 1934713408
        %v1539 = vunpack.c.0.s8 %v1538
        %v1540 = vlaneseq
        %v1541 = vshrl.u32 %v1540, 7
        %v1542 = vsub.s32 %v1539, %v1541
        %v1543 = vrot.slane %v1529, %v1542
        %v1544 = vcombine.low %v1488, %v1504
        %v1545 = vcombine.high %v1488, %v1504
        %v1547 = vunpack.c.l.s4 1934713408
        %v1548 = vunpack.c.0.s8 %v1547
        %v1549 = vlaneseq
        %v1550 = vshrl.u32 %v1549, 7
        %v1551 = vsub.s32 %v1548, %v1550
        %v1552 = vrot.slane %v1544, %v1551
        %v1554 = vunpack.c.l.s4 1934713408
        %v1555 = vunpack.c.0.s8 %v1554
        %v1556 = vlaneseq
        %v1557 = vshrl.u32 %v1556, 7
        %v1558 = vsub.s32 %v1555, %v1557
        %v1559 = vrot.slane %v1545, %v1558
        %v1560 = vcombine.low %v1495, %v1511
        %v1561 = vcombine.high %v1495, %v1511
        %v1563 = vunpack.c.l.s4 1934713408
        %v1564 = vunpack.c.0.s8 %v1563
        %v1565 = vlaneseq
        %v1566 = vshrl.u32 %v1565, 7
        %v1567 = vsub.s32 %v1564, %v1566
        %v1568 = vrot.slane %v1560, %v1567
        %v1570 = vunpack.c.l.s4 1934713408
        %v1571 = vunpack.c.0.s8 %v1570
        %v1572 = vlaneseq
        %v1573 = vshrl.u32 %v1572, 7
        %v1574 = vsub.s32 %v1571, %v1573
        %v1575 = vrot.slane %v1561, %v1574
        %v1576 = vcombine.low %v1520, %v1552
        %v1577 = vcombine.high %v1520, %v1552
        %v1578 = vcombine.low %v1527, %v1559
        %v1579 = vcombine.high %v1527, %v1559
        %v1580 = vcombine.low %v1536, %v1568
        %v1581 = vcombine.high %v1536, %v1568
        %v1582 = vcombine.low %v1543, %v1575
        %v1583 = vcombine.high %v1543, %v1575
        %v1584 = vcombine.low %v1155, %v1237
        %v1585 = vcombine.high %v1155, %v1237
        %v1587 = vunpack.c.l.s4 1983009808
        %v1588 = vunpack.c.0.s8 %v1587
        %v1589 = vlaneseq
        %v1590 = vshrl.u32 %v1589, 7
        %v1591 = vsub.s32 %v1588, %v1590
        %v1592 = vrot.slane %v1584, %v1591
        %v1594 = vunpack.c.l.s4 1983009808
        %v1595 = vunpack.c.0.s8 %v1594
        %v1596 = vlaneseq
        %v1597 = vshrl.u32 %v1596, 7
        %v1598 = vsub.s32 %v1595, %v1597
        %v1599 = vrot.slane %v1585, %v1598
        %v1600 = vcombine.low %v1196, %v1278
        %v1601 = vcombine.high %v1196, %v1278
        %v1603 = vunpack.c.l.s4 1983009808
        %v1604 = vunpack.c.0.s8 %v1603
        %v1605 = vlaneseq
        %v1606 = vshrl.u32 %v1605, 7
        %v1607 = vsub.s32 %v1604, %v1606
        %v1608 = vrot.slane %v1600, %v1607
        %v1610 = vunpack.c.l.s4 1983009808
        %v1611 = vunpack.c.0.s8 %v1610
        %v1612 = vlaneseq
        %v1613 = vshrl.u32 %v1612, 7
        %v1614 = vsub.s32 %v1611, %v1613
        %v1615 = vrot.slane %v1601, %v1614
        %v1616 = vcombine.low %v1319, %v1401
        %v1617 = vcombine.high %v1319, %v1401
        %v1619 = vunpack.c.l.s4 1983009808
        %v1620 = vunpack.c.0.s8 %v1619
        %v1621 = vlaneseq
        %v1622 = vshrl.u32 %v1621, 7
        %v1623 = vsub.s32 %v1620, %v1622
        %v1624 = vrot.slane %v1616, %v1623
        %v1626 = vunpack.c.l.s4 1983009808
        %v1627 = vunpack.c.0.s8 %v1626
        %v1628 = vlaneseq
        %v1629 = vshrl.u32 %v1628, 7
        %v1630 = vsub.s32 %v1627, %v1629
        %v1631 = vrot.slane %v1617, %v1630
        %v1632 = vcombine.low %v1360, %v1442
        %v1633 = vcombine.high %v1360, %v1442
        %v1635 = vunpack.c.l.s4 1983009808
        %v1636 = vunpack.c.0.s8 %v1635
        %v1637 = vlaneseq
        %v1638 = vshrl.u32 %v1637, 7
        %v1639 = vsub.s32 %v1636, %v1638
        %v1640 = vrot.slane %v1632, %v1639
        %v1642 = vunpack.c.l.s4 1983009808
        %v1643 = vunpack.c.0.s8 %v1642
        %v1644 = vlaneseq
        %v1645 = vshrl.u32 %v1644, 7
        %v1646 = vsub.s32 %v1643, %v1645
        %v1647 = vrot.slane %v1633, %v1646
        %v1648 = vcombine.low %v1592, %v1608
        %v1649 = vcombine.high %v1592, %v1608
        %v1651 = vunpack.c.l.s4 1934713408
        %v1652 = vunpack.c.0.s8 %v1651
        %v1653 = vlaneseq
        %v1654 = vshrl.u32 %v1653, 7
        %v1655 = vsub.s32 %v1652, %v1654
        %v1656 = vrot.slane %v1648, %v1655
        %v1658 = vunpack.c.l.s4 1934713408
        %v1659 = vunpack.c.0.s8 %v1658
        %v1660 = vlaneseq
        %v1661 = vshrl.u32 %v1660, 7
        %v1662 = vsub.s32 %v1659, %v1661
        %v1663 = vrot.slane %v1649, %v1662
        %v1664 = vcombine.low %v1599, %v1615
        %v1665 = vcombine.high %v1599, %v1615
        %v1667 = vunpack.c.l.s4 1934713408
        %v1668 = vunpack.c.0.s8 %v1667
        %v1669 = vlaneseq
        %v1670 = vshrl.u32 %v1669, 7
        %v1671 = vsub.s32 %v1668, %v1670
        %v1672 = vrot.slane %v1664, %v1671
        %v1674 = vunpack.c.l.s4 1934713408
        %v1675 = vunpack.c.0.s8 %v1674
        %v1676 = vlaneseq
        %v1677 = vshrl.u32 %v1676, 7
        %v1678 = vsub.s32 %v1675, %v1677
        %v1679 = vrot.slane %v1665, %v1678
        %v1680 = vcombine.low %v1624, %v1640
        %v1681 = vcombine.high %v1624, %v1640
        %v1683 = vunpack.c.l.s4 1934713408
        %v1684 = vunpack.c.0.s8 %v1683
        %v1685 = vlaneseq
        %v1686 = vshrl.u32 %v1685, 7
        %v1687 = vsub.s32 %v1684, %v1686
        %v1688 = vrot.slane %v1680, %v1687
        %v1690 = vunpack.c.l.s4 1934713408
        %v1691 = vunpack.c.0.s8 %v1690
        %v1692 = vlaneseq
        %v1693 = vshrl.u32 %v1692, 7
        %v1694 = vsub.s32 %v1691, %v1693
        %v1695 = vrot.slane %v1681, %v1694
        %v1696 = vcombine.low %v1631, %v1647
        %v1697 = vcombine.high %v1631, %v1647
        %v1699 = vunpack.c.l.s4 1934713408
        %v1700 = vunpack.c.0.s8 %v1699
        %v1701 = vlaneseq
        %v1702 = vshrl.u32 %v1701, 7
        %v1703 = vsub.s32 %v1700, %v1702
        %v1704 = vrot.slane %v1696, %v1703
        %v1706 = vunpack.c.l.s4 1934713408
        %v1707 = vunpack.c.0.s8 %v1706
        %v1708 = vlaneseq
        %v1709 = vshrl.u32 %v1708, 7
        %v1710 = vsub.s32 %v1707, %v1709
        %v1711 = vrot.slane %v1697, %v1710
        %v1712 = vcombine.low %v1656, %v1688
        %v1713 = vcombine.high %v1656, %v1688
        %v1714 = vcombine.low %v1663, %v1695
        %v1715 = vcombine.high %v1663, %v1695
        %v1716 = vcombine.low %v1672, %v1704
        %v1717 = vcombine.high %v1672, %v1704
        %v1718 = vcombine.low %v1679, %v1711
        %v1719 = vcombine.high %v1679, %v1711
        %v1720 = vcombine.low %v830, %v912
        %v1721 = vcombine.high %v830, %v912
        %v1723 = vunpack.c.l.s4 1983009808
        %v1724 = vunpack.c.0.s8 %v1723
        %v1725 = vlaneseq
        %v1726 = vshrl.u32 %v1725, 7
        %v1727 = vsub.s32 %v1724, %v1726
        %v1728 = vrot.slane %v1720, %v1727
        %v1730 = vunpack.c.l.s4 1983009808
        %v1731 = vunpack.c.0.s8 %v1730
        %v1732 = vlaneseq
        %v1733 = vshrl.u32 %v1732, 7
        %v1734 = vsub.s32 %v1731, %v1733
        %v1735 = vrot.slane %v1721, %v1734
        %v1736 = vcombine.low %v871, %v953
        %v1737 = vcombine.high %v871, %v953
        %v1739 = vunpack.c.l.s4 1983009808
        %v1740 = vunpack.c.0.s8 %v1739
        %v1741 = vlaneseq
        %v1742 = vshrl.u32 %v1741, 7
        %v1743 = vsub.s32 %v1740, %v1742
        %v1744 = vrot.slane %v1736, %v1743
        %v1746 = vunpack.c.l.s4 1983009808
        %v1747 = vunpack.c.0.s8 %v1746
        %v1748 = vlaneseq
        %v1749 = vshrl.u32 %v1748, 7
        %v1750 = vsub.s32 %v1747, %v1749
        %v1751 = vrot.slane %v1737, %v1750
        %v1752 = vcombine.low %v994, %v1076
        %v1753 = vcombine.high %v994, %v1076
        %v1755 = vunpack.c.l.s4 1983009808
        %v1756 = vunpack.c.0.s8 %v1755
        %v1757 = vlaneseq
        %v1758 = vshrl.u32 %v1757, 7
        %v1759 = vsub.s32 %v1756, %v1758
        %v1760 = vrot.slane %v1752, %v1759
        %v1762 = vunpack.c.l.s4 1983009808
        %v1763 = vunpack.c.0.s8 %v1762
        %v1764 = vlaneseq
        %v1765 = vshrl.u32 %v1764, 7
        %v1766 = vsub.s32 %v1763, %v1765
        %v1767 = vrot.slane %v1753, %v1766
        %v1768 = vcombine.low %v1035, %v1117
        %v1769 = vcombine.high %v1035, %v1117
        %v1771 = vunpack.c.l.s4 1983009808
        %v1772 = vunpack.c.0.s8 %v1771
        %v1773 = vlaneseq
        %v1774 = vshrl.u32 %v1773, 7
        %v1775 = vsub.s32 %v1772, %v1774
        %v1776 = vrot.slane %v1768, %v1775
        %v1778 = vunpack.c.l.s4 1983009808
        %v1779 = vunpack.c.0.s8 %v1778
        %v1780 = vlaneseq
        %v1781 = vshrl.u32 %v1780, 7
        %v1782 = vsub.s32 %v1779, %v1781
        %v1783 = vrot.slane %v1769, %v1782
        %v1784 = vcombine.low %v1728, %v1744
        %v1785 = vcombine.high %v1728, %v1744
        %v1787 = vunpack.c.l.s4 1934713408
        %v1788 = vunpack.c.0.s8 %v1787
        %v1789 = vlaneseq
        %v1790 = vshrl.u32 %v1789, 7
        %v1791 = vsub.s32 %v1788, %v1790
        %v1792 = vrot.slane %v1784, %v1791
        %v1794 = vunpack.c.l.s4 1934713408
        %v1795 = vunpack.c.0.s8 %v1794
        %v1796 = vlaneseq
        %v1797 = vshrl.u32 %v1796, 7
        %v1798 = vsub.s32 %v1795, %v1797
        %v1799 = vrot.slane %v1785, %v1798
        %v1800 = vcombine.low %v1735, %v1751
        %v1801 = vcombine.high %v1735, %v1751
        %v1803 = vunpack.c.l.s4 1934713408
        %v1804 = vunpack.c.0.s8 %v1803
        %v1805 = vlaneseq
        %v1806 = vshrl.u32 %v1805, 7
        %v1807 = vsub.s32 %v1804, %v1806
        %v1808 = vrot.slane %v1800, %v1807
        %v1810 = vunpack.c.l.s4 1934713408
        %v1811 = vunpack.c.0.s8 %v1810
        %v1812 = vlaneseq
        %v1813 = vshrl.u32 %v1812, 7
        %v1814 = vsub.s32 %v1811, %v1813
        %v1815 = vrot.slane %v1801, %v1814
        %v1816 = vcombine.low %v1760, %v1776
        %v1817 = vcombine.high %v1760, %v1776
        %v1819 = vunpack.c.l.s4 1934713408
        %v1820 = vunpack.c.0.s8 %v1819
        %v1821 = vlaneseq
        %v1822 = vshrl.u32 %v1821, 7
        %v1823 = vsub.s32 %v1820, %v1822
        %v1824 = vrot.slane %v1816, %v1823
        %v1826 = vunpack.c.l.s4 1934713408
        %v1827 = vunpack.c.0.s8 %v1826
        %v1828 = vlaneseq
        %v1829 = vshrl.u32 %v1828, 7
        %v1830 = vsub.s32 %v1827, %v1829
        %v1831 = vrot.slane %v1817, %v1830
        %v1832 = vcombine.low %v1767, %v1783
        %v1833 = vcombine.high %v1767, %v1783
        %v1835 = vunpack.c.l.s4 1934713408
        %v1836 = vunpack.c.0.s8 %v1835
        %v1837 = vlaneseq
        %v1838 = vshrl.u32 %v1837, 7
        %v1839 = vsub.s32 %v1836, %v1838
        %v1840 = vrot.slane %v1832, %v1839
        %v1842 = vunpack.c.l.s4 1934713408
        %v1843 = vunpack.c.0.s8 %v1842
        %v1844 = vlaneseq
        %v1845 = vshrl.u32 %v1844, 7
        %v1846 = vsub.s32 %v1843, %v1845
        %v1847 = vrot.slane %v1833, %v1846
        %v1848 = vcombine.low %v1792, %v1824
        %v1849 = vcombine.high %v1792, %v1824
        %v1850 = vcombine.low %v1799, %v1831
        %v1851 = vcombine.high %v1799, %v1831
        %v1852 = vcombine.low %v1808, %v1840
        %v1853 = vcombine.high %v1808, %v1840
        %v1854 = vcombine.low %v1815, %v1847
        %v1855 = vcombine.high %v1815, %v1847
        %v1856 = vcombine.low %v1158, %v1240
        %v1857 = vcombine.high %v1158, %v1240
        %v1859 = vunpack.c.l.s4 1983009808
        %v1860 = vunpack.c.0.s8 %v1859
        %v1861 = vlaneseq
        %v1862 = vshrl.u32 %v1861, 7
        %v1863 = vsub.s32 %v1860, %v1862
        %v1864 = vrot.slane %v1856, %v1863
        %v1866 = vunpack.c.l.s4 1983009808
        %v1867 = vunpack.c.0.s8 %v1866
        %v1868 = vlaneseq
        %v1869 = vshrl.u32 %v1868, 7
        %v1870 = vsub.s32 %v1867, %v1869
        %v1871 = vrot.slane %v1857, %v1870
        %v1872 = vcombine.low %v1199, %v1281
        %v1873 = vcombine.high %v1199, %v1281
        %v1875 = vunpack.c.l.s4 1983009808
        %v1876 = vunpack.c.0.s8 %v1875
        %v1877 = vlaneseq
        %v1878 = vshrl.u32 %v1877, 7
        %v1879 = vsub.s32 %v1876, %v1878
        %v1880 = vrot.slane %v1872, %v1879
        %v1882 = vunpack.c.l.s4 1983009808
        %v1883 = vunpack.c.0.s8 %v1882
        %v1884 = vlaneseq
        %v1885 = vshrl.u32 %v1884, 7
        %v1886 = vsub.s32 %v1883, %v1885
        %v1887 = vrot.slane %v1873, %v1886
        %v1888 = vcombine.low %v1322, %v1404
        %v1889 = vcombine.high %v1322, %v1404
        %v1891 = vunpack.c.l.s4 1983009808
        %v1892 = vunpack.c.0.s8 %v1891
        %v1893 = vlaneseq
        %v1894 = vshrl.u32 %v1893, 7
        %v1895 = vsub.s32 %v1892, %v1894
        %v1896 = vrot.slane %v1888, %v1895
        %v1898 = vunpack.c.l.s4 1983009808
        %v1899 = vunpack.c.0.s8 %v1898
        %v1900 = vlaneseq
        %v1901 = vshrl.u32 %v1900, 7
        %v1902 = vsub.s32 %v1899, %v1901
        %v1903 = vrot.slane %v1889, %v1902
        %v1904 = vcombine.low %v1363, %v1445
        %v1905 = vcombine.high %v1363, %v1445
        %v1907 = vunpack.c.l.s4 1983009808
        %v1908 = vunpack.c.0.s8 %v1907
        %v1909 = vlaneseq
        %v1910 = vshrl.u32 %v1909, 7
        %v1911 = vsub.s32 %v1908, %v1910
        %v1912 = vrot.slane %v1904, %v1911
        %v1914 = vunpack.c.l.s4 1983009808
        %v1915 = vunpack.c.0.s8 %v1914
        %v1916 = vlaneseq
        %v1917 = vshrl.u32 %v1916, 7
        %v1918 = vsub.s32 %v1915, %v1917
        %v1919 = vrot.slane %v1905, %v1918
        %v1920 = vcombine.low %v1864, %v1880
        %v1921 = vcombine.high %v1864, %v1880
        %v1923 = vunpack.c.l.s4 1934713408
        %v1924 = vunpack.c.0.s8 %v1923
        %v1925 = vlaneseq
        %v1926 = vshrl.u32 %v1925, 7
        %v1927 = vsub.s32 %v1924, %v1926
        %v1928 = vrot.slane %v1920, %v1927
        %v1930 = vunpack.c.l.s4 1934713408
        %v1931 = vunpack.c.0.s8 %v1930
        %v1932 = vlaneseq
        %v1933 = vshrl.u32 %v1932, 7
        %v1934 = vsub.s32 %v1931, %v1933
        %v1935 = vrot.slane %v1921, %v1934
        %v1936 = vcombine.low %v1871, %v1887
        %v1937 = vcombine.high %v1871, %v1887
        %v1939 = vunpack.c.l.s4 1934713408
        %v1940 = vunpack.c.0.s8 %v1939
        %v1941 = vlaneseq
        %v1942 = vshrl.u32 %v1941, 7
        %v1943 = vsub.s32 %v1940, %v1942
        %v1944 = vrot.slane %v1936, %v1943
        %v1946 = vunpack.c.l.s4 1934713408
        %v1947 = vunpack.c.0.s8 %v1946
        %v1948 = vlaneseq
        %v1949 = vshrl.u32 %v1948, 7
        %v1950 = vsub.s32 %v1947, %v1949
        %v1951 = vrot.slane %v1937, %v1950
        %v1952 = vcombine.low %v1896, %v1912
        %v1953 = vcombine.high %v1896, %v1912
        %v1955 = vunpack.c.l.s4 1934713408
        %v1956 = vunpack.c.0.s8 %v1955
        %v1957 = vlaneseq
        %v1958 = vshrl.u32 %v1957, 7
        %v1959 = vsub.s32 %v1956, %v1958
        %v1960 = vrot.slane %v1952, %v1959
        %v1962 = vunpack.c.l.s4 1934713408
        %v1963 = vunpack.c.0.s8 %v1962
        %v1964 = vlaneseq
        %v1965 = vshrl.u32 %v1964, 7
        %v1966 = vsub.s32 %v1963, %v1965
        %v1967 = vrot.slane %v1953, %v1966
        %v1968 = vcombine.low %v1903, %v1919
        %v1969 = vcombine.high %v1903, %v1919
        %v1971 = vunpack.c.l.s4 1934713408
        %v1972 = vunpack.c.0.s8 %v1971
        %v1973 = vlaneseq
        %v1974 = vshrl.u32 %v1973, 7
        %v1975 = vsub.s32 %v1972, %v1974
        %v1976 = vrot.slane %v1968, %v1975
        %v1978 = vunpack.c.l.s4 1934713408
        %v1979 = vunpack.c.0.s8 %v1978
        %v1980 = vlaneseq
        %v1981 = vshrl.u32 %v1980, 7
        %v1982 = vsub.s32 %v1979, %v1981
        %v1983 = vrot.slane %v1969, %v1982
        %v1984 = vcombine.low %v1928, %v1960
        %v1985 = vcombine.high %v1928, %v1960
        %v1986 = vcombine.low %v1935, %v1967
        %v1987 = vcombine.high %v1935, %v1967
        %v1988 = vcombine.low %v1944, %v1976
        %v1989 = vcombine.high %v1944, %v1976
        %v1990 = vcombine.low %v1951, %v1983
        %v1991 = vcombine.high %v1951, %v1983
        %1994 = vrot.lane.b32.xlu0 %v1577, 32
        %v1995 = vpop.permute.xlu0 %1994
        %1996 = vrot.lane.b32.xlu0 %v1713, 32
        %v1997 = vpop.permute.xlu0 %1996
        %2002 = vrot.lane.b32.xlu0 %v1578, 64
        %v2003 = vpop.permute.xlu0 %2002
        %2004 = vrot.lane.b32.xlu0 %v1714, 64
        %v2005 = vpop.permute.xlu0 %2004
        %2010 = vrot.lane.b32.xlu0 %v1579, 96
        %v2011 = vpop.permute.xlu0 %2010
        %2012 = vrot.lane.b32.xlu0 %v1715, 96
        %v2013 = vpop.permute.xlu0 %2012
        %2018 = vrot.lane.b32.xlu0 %v1581, 32
        %v2019 = vpop.permute.xlu0 %2018
        %2020 = vrot.lane.b32.xlu0 %v1717, 32
        %v2021 = vpop.permute.xlu0 %2020
        %2026 = vrot.lane.b32.xlu0 %v1582, 64
        %v2027 = vpop.permute.xlu0 %2026
        %2028 = vrot.lane.b32.xlu0 %v1718, 64
        %v2029 = vpop.permute.xlu0 %2028
        %2034 = vrot.lane.b32.xlu0 %v1583, 96
        %v2035 = vpop.permute.xlu0 %2034
        %2036 = vrot.lane.b32.xlu0 %v1719, 96
        %v2037 = vpop.permute.xlu0 %2036
        %2042 = vrot.lane.b32.xlu0 %v1849, 32
        %v2043 = vpop.permute.xlu0 %2042
        %2044 = vrot.lane.b32.xlu0 %v1985, 32
        %v2045 = vpop.permute.xlu0 %2044
        %2050 = vrot.lane.b32.xlu0 %v1850, 64
        %v2051 = vpop.permute.xlu0 %2050
        %2052 = vrot.lane.b32.xlu0 %v1986, 64
        %v2053 = vpop.permute.xlu0 %2052
        %2058 = vrot.lane.b32.xlu0 %v1851, 96
        %v2059 = vpop.permute.xlu0 %2058
        %2060 = vrot.lane.b32.xlu0 %v1987, 96
        %v2061 = vpop.permute.xlu0 %2060
        %2066 = vrot.lane.b32.xlu0 %v1853, 32
        %v2067 = vpop.permute.xlu0 %2066
        %2068 = vrot.lane.b32.xlu0 %v1989, 32
        %v2069 = vpop.permute.xlu0 %2068
        %2074 = vrot.lane.b32.xlu0 %v1854, 64
        %v2075 = vpop.permute.xlu0 %2074
        %2076 = vrot.lane.b32.xlu0 %v1990, 64
        %v2077 = vpop.permute.xlu0 %2076
        %2082 = vrot.lane.b32.xlu0 %v1855, 96
        %v2083 = vpop.permute.xlu0 %2082
        %2084 = vrot.lane.b32.xlu0 %v1991, 96
        %v2085 = vpop.permute.xlu0 %2084
        %vm2088 = vcmask 261120
        %v2089 = vsel %vm2088, %v1576, %v1995
        %v2090 = vsel %vm2088, %v1712, %v1997
        %vm2091 = vcmask 523264
        %v2092 = vsel %vm2091, %v2089, %v2003
        %v2093 = vsel %vm2091, %v2090, %v2005
        %vm2094 = vcmask 785408
        %v2095 = vsel %vm2094, %v2092, %v2011
        %v2096 = vsel %vm2094, %v2093, %v2013
        %v2097 = vsel %vm2088, %v1580, %v2019
        %v2098 = vsel %vm2088, %v1716, %v2021
        %v2099 = vsel %vm2091, %v2097, %v2027
        %v2100 = vsel %vm2091, %v2098, %v2029
        %v2101 = vsel %vm2094, %v2099, %v2035
        %v2102 = vsel %vm2094, %v2100, %v2037
        %v2103 = vsel %vm2088, %v1848, %v2043
        %v2104 = vsel %vm2088, %v1984, %v2045
        %v2105 = vsel %vm2091, %v2103, %v2051
        %v2106 = vsel %vm2091, %v2104, %v2053
        %v2107 = vsel %vm2094, %v2105, %v2059
        %v2108 = vsel %vm2094, %v2106, %v2061
        %v2109 = vsel %vm2088, %v1852, %v2067
        %v2110 = vsel %vm2088, %v1988, %v2069
        %v2111 = vsel %vm2091, %v2109, %v2075
        %v2112 = vsel %vm2091, %v2110, %v2077
        %v2113 = vsel %vm2094, %v2111, %v2083
        %v2114 = vsel %vm2094, %v2112, %v2085
        %v2115 = vpack.c.bf16 %v2096, %v2095
        %v2116 = vpack.c.bf16 %v2102, %v2101
        %v2117 = vpack.c.bf16 %v2108, %v2107
        %v2118 = vpack.c.bf16 %v2114, %v2113
        %v2119 = vld [vmem:[%s488] sm:$0xff]
        %v2120 = vld [vmem:[%s488 + $0x8] sm:$0xff]
        %v2121 = vld [vmem:[%s488 + $0x10] sm:$0xff]
        %v2122 = vld [vmem:[%s488 + $0x18] sm:$0xff]
        %v2123 = vld [vmem:[%s488 + $0x20] sm:$0xff]
        %v2124 = vld [vmem:[%s488 + $0x28] sm:$0xff]
        %v2125 = vld [vmem:[%s488 + $0x30] sm:$0xff]
        %v2126 = vld [vmem:[%s488 + $0x38] sm:$0xff]
        %v2127 = vpack.c.bf16 %v2120, %v2119
        %v2128 = vpack.c.bf16 %v2122, %v2121
        %v2129 = vpack.c.bf16 %v2124, %v2123
        %v2130 = vpack.c.bf16 %v2126, %v2125
        %v2131 = vld [vmem:[%s5] sm:$0xf]
        %v2132 = vld [vmem:[%s5 + $0x4] sm:$0xf]
        %v2133 = vld [vmem:[%s5 + $0x8] sm:$0xf]
        %v2134 = vld [vmem:[%s9] sm:$0xf]
        %v2135 = vld [vmem:[%s9 + $0x4] sm:$0xf]
        %v2139 = vunpack.c.l.b16 %v2131
        %v2140 = vunpack.c.l.b16 %v2132
        %v2141 = vunpack.c.l.b16 %v2133
        %v2142 = vpack.c.b16 %v2140, %v2139
        %v2143 = vpack.c.b16 %v2141, %v2141
        %vm2145 = vcmask 195584
        %v2147 = vsel %vm2145, %v2127, 0
        %v2150 = vsel %vm2145, %v2128, 0
        %v2153 = vsel %vm2145, %v2129, 0
        %v2156 = vsel %vm2145, %v2130, 0
        %vm2158 = vcmask 1043456
        %v2160 = vsel %vm2158, %v2143, 0
        %2162 = vmatprep.subr.bf16.mxu0 0
        %2163 = vmatpush1.bf16.msra.mxu0 %v2142
        %2164 = vmatprep.subr.bf16.mxu0 0
        %2165 = vmatpush1.bf16.msra.mxu0 %v2160
        %2166 = vmatprep.subr.bf16.mxu0 0
        %2167 = vmatpush1.bf16.msra.mxu0 0
        %2168 = vmatprep.subr.bf16.mxu0 0
        %2169 = vmatpush1.bf16.msra.mxu0 0
        %2170 = vmatprep.subr.bf16.mxu0 0
        %2171 = vmatpush1.bf16.msra.mxu0 0
        %2172 = vmatprep.subr.bf16.mxu0 0
        %2173 = vmatpush1.bf16.msra.mxu0 0
        %2174 = vmatprep.subr.bf16.mxu0 0
        %2175 = vmatpush1.bf16.msra.mxu0 0
        %2176 = vmatprep.subr.bf16.mxu0 0
        %2177 = vmatpush1.bf16.msra.mxu0 0
        %2178 = vmatprep.subr.bf16.mxu0 0
        %2179 = vmatpush1.bf16.msra.mxu0 0
        %2180 = vmatprep.subr.bf16.mxu0 0
        %2181 = vmatpush1.bf16.msra.mxu0 0
        %2182 = vmatprep.subr.bf16.mxu0 0
        %2183 = vmatpush1.bf16.msra.mxu0 0
        %2184 = vmatprep.subr.bf16.mxu0 0
        %2185 = vmatpush1.bf16.msra.mxu0 0
        %2186 = vmatprep.subr.bf16.mxu0 0
        %2187 = vmatpush1.bf16.msra.mxu0 0
        %2188 = vmatprep.subr.bf16.mxu0 0
        %2189 = vmatpush1.bf16.msra.mxu0 0
        %2190 = vmatprep.subr.bf16.mxu0 0
        %2191 = vmatpush1.bf16.msra.mxu0 0
        %2192 = vmatprep.subr.bf16.mxu0 0
        %2193 = vmatpush1.bf16.msra.mxu0 0
        %2194 = vmatprep.mubr.bf16.mxu0 0
        %2195 = vmatmul.mubr.bf16.gmra.mrb[0].mxu0 %v2147
        %v2196 = vpop.f32.mrb[0].mxu0
        %v2197 = vadd.f32 0.0, %v2196
        %v2198 = vpop.f32.mrb[0].mxu0
        %v2199 = vpop.f32.mrb[0].mxu0
        %v2200 = vadd.f32 0.0, %v2199
        %v2201 = vpop.f32.mrb[0].mxu0
        %2202 = vmatprep.mubr.bf16.mxu0 0
        %2203 = vmatmul.mubr.bf16.gmra.mrb[0].mxu0 %v2150
        %v2204 = vpop.f32.mrb[0].mxu0
        %v2205 = vadd.f32 0.0, %v2204
        %v2206 = vpop.f32.mrb[0].mxu0
        %v2207 = vpop.f32.mrb[0].mxu0
        %v2208 = vadd.f32 0.0, %v2207
        %v2209 = vpop.f32.mrb[0].mxu0
        %2210 = vmatprep.mubr.bf16.mxu0 0
        %2211 = vmatmul.mubr.bf16.gmra.mrb[0].mxu0 %v2153
        %v2212 = vpop.f32.mrb[0].mxu0
        %v2213 = vadd.f32 0.0, %v2212
        %v2214 = vpop.f32.mrb[0].mxu0
        %v2215 = vpop.f32.mrb[0].mxu0
        %v2216 = vadd.f32 0.0, %v2215
        %v2217 = vpop.f32.mrb[0].mxu0
        %2218 = vmatprep.mubr.bf16.mxu0 0
        %2219 = vmatmul.mubr.bf16.gmra.mrb[0].mxu0 %v2156
        %v2220 = vpop.f32.mrb[0].mxu0
        %v2221 = vadd.f32 0.0, %v2220
        %v2222 = vpop.f32.mrb[0].mxu0
        %v2223 = vpop.f32.mrb[0].mxu0
        %v2224 = vadd.f32 0.0, %v2223
        %v2225 = vpop.f32.mrb[0].mxu0
        %2226 = vdwg.mxu0
        %v2227 = vpack.c.bf16 %v2197, %v2197
        %v2228 = vpack.c.bf16 %v2200, %v2200
        %v2229 = vpack.c.bf16 %v2205, %v2205
        %v2230 = vpack.c.bf16 %v2208, %v2208
        %v2231 = vpack.c.bf16 %v2213, %v2213
        %v2232 = vpack.c.bf16 %v2216, %v2216
        %v2233 = vpack.c.bf16 %v2221, %v2221
        %v2234 = vpack.c.bf16 %v2224, %v2224
        %v2237 = vunpack.c.l.b16 %v2134
        %v2238 = vunpack.c.l.b16 %v2135
        %v2239 = vpack.c.b16 %v2238, %v2237
        %vm2240 = vcmask 64512
        %v2242 = vsel %vm2240, %v2239, 0
        %v2245 = vsel %vm2158, %v2227, 0
        %2247 = vmatprep.subr.bf16.mxu0 0
        %2248 = vmatpush1.bf16.msra.mxu0 %v2245
        %2249 = vmatprep.subr.bf16.mxu0 0
        %2250 = vmatpush1.bf16.msra.mxu0 0
        %2251 = vmatprep.subr.bf16.mxu0 0
        %2252 = vmatpush1.bf16.msra.mxu0 0
        %2253 = vmatprep.subr.bf16.mxu0 0
        %2254 = vmatpush1.bf16.msra.mxu0 0
        %2255 = vmatprep.subr.bf16.mxu0 0
        %2256 = vmatpush1.bf16.msra.mxu0 0
        %2257 = vmatprep.subr.bf16.mxu0 0
        %2258 = vmatpush1.bf16.msra.mxu0 0
        %2259 = vmatprep.subr.bf16.mxu0 0
        %2260 = vmatpush1.bf16.msra.mxu0 0
        %2261 = vmatprep.subr.bf16.mxu0 0
        %2262 = vmatpush1.bf16.msra.mxu0 0
        %2263 = vmatprep.subr.bf16.mxu0 0
        %2264 = vmatpush1.bf16.msra.mxu0 0
        %2265 = vmatprep.subr.bf16.mxu0 0
        %2266 = vmatpush1.bf16.msra.mxu0 0
        %2267 = vmatprep.subr.bf16.mxu0 0
        %2268 = vmatpush1.bf16.msra.mxu0 0
        %2269 = vmatprep.subr.bf16.mxu0 0
        %2270 = vmatpush1.bf16.msra.mxu0 0
        %2271 = vmatprep.subr.bf16.mxu0 0
        %2272 = vmatpush1.bf16.msra.mxu0 0
        %2273 = vmatprep.subr.bf16.mxu0 0
        %2274 = vmatpush1.bf16.msra.mxu0 0
        %2275 = vmatprep.subr.bf16.mxu0 0
        %2276 = vmatpush1.bf16.msra.mxu0 0
        %2277 = vmatprep.subr.bf16.mxu0 0
        %2278 = vmatpush1.bf16.msra.mxu0 0
        %2279 = vmatprep.mubr.bf16.mxu0 0
        %2280 = vmatmul.mubr.bf16.gmra.mrb[0].mxu0 %v2242
        %v2281 = vpop.f32.mrb[0].mxu0
        %v2282 = vadd.f32 0.0, %v2281
        %v2283 = vpop.f32.mrb[0].mxu0
        %v2284 = vpop.f32.mrb[0].mxu0
        %v2285 = vadd.f32 0.0, %v2284
        %v2286 = vpop.f32.mrb[0].mxu0
        %2287 = vdwg.mxu0
        %v2289 = vsel %vm2158, %v2228, 0
        %2291 = vmatprep.subr.bf16.mxu0 0
        %2292 = vmatpush1.bf16.msra.mxu0 %v2289
        %2293 = vmatprep.subr.bf16.mxu0 0
        %2294 = vmatpush1.bf16.msra.mxu0 0
        %2295 = vmatprep.subr.bf16.mxu0 0
        %2296 = vmatpush1.bf16.msra.mxu0 0
        %2297 = vmatprep.subr.bf16.mxu0 0
        %2298 = vmatpush1.bf16.msra.mxu0 0
        %2299 = vmatprep.subr.bf16.mxu0 0
        %2300 = vmatpush1.bf16.msra.mxu0 0
        %2301 = vmatprep.subr.bf16.mxu0 0
        %2302 = vmatpush1.bf16.msra.mxu0 0
        %2303 = vmatprep.subr.bf16.mxu0 0
        %2304 = vmatpush1.bf16.msra.mxu0 0
        %2305 = vmatprep.subr.bf16.mxu0 0
        %2306 = vmatpush1.bf16.msra.mxu0 0
        %2307 = vmatprep.subr.bf16.mxu0 0
        %2308 = vmatpush1.bf16.msra.mxu0 0
        %2309 = vmatprep.subr.bf16.mxu0 0
        %2310 = vmatpush1.bf16.msra.mxu0 0
        %2311 = vmatprep.subr.bf16.mxu0 0
        %2312 = vmatpush1.bf16.msra.mxu0 0
        %2313 = vmatprep.subr.bf16.mxu0 0
        %2314 = vmatpush1.bf16.msra.mxu0 0
        %2315 = vmatprep.subr.bf16.mxu0 0
        %2316 = vmatpush1.bf16.msra.mxu0 0
        %2317 = vmatprep.subr.bf16.mxu0 0
        %2318 = vmatpush1.bf16.msra.mxu0 0
        %2319 = vmatprep.subr.bf16.mxu0 0
        %2320 = vmatpush1.bf16.msra.mxu0 0
        %2321 = vmatprep.subr.bf16.mxu0 0
        %2322 = vmatpush1.bf16.msra.mxu0 0
        %2323 = vmatprep.mubr.bf16.mxu0 0
        %2324 = vmatmul.mubr.bf16.gmra.mrb[0].mxu0 %v2242
        %v2325 = vpop.f32.mrb[0].mxu0
        %v2326 = vadd.f32 0.0, %v2325
        %v2327 = vpop.f32.mrb[0].mxu0
        %v2328 = vpop.f32.mrb[0].mxu0
        %v2329 = vadd.f32 0.0, %v2328
        %v2330 = vpop.f32.mrb[0].mxu0
        %2331 = vdwg.mxu0
        %v2333 = vsel %vm2158, %v2229, 0
        %2335 = vmatprep.subr.bf16.mxu0 0
        %2336 = vmatpush1.bf16.msra.mxu0 %v2333
        %2337 = vmatprep.subr.bf16.mxu0 0
        %2338 = vmatpush1.bf16.msra.mxu0 0
        %2339 = vmatprep.subr.bf16.mxu0 0
        %2340 = vmatpush1.bf16.msra.mxu0 0
        %2341 = vmatprep.subr.bf16.mxu0 0
        %2342 = vmatpush1.bf16.msra.mxu0 0
        %2343 = vmatprep.subr.bf16.mxu0 0
        %2344 = vmatpush1.bf16.msra.mxu0 0
        %2345 = vmatprep.subr.bf16.mxu0 0
        %2346 = vmatpush1.bf16.msra.mxu0 0
        %2347 = vmatprep.subr.bf16.mxu0 0
        %2348 = vmatpush1.bf16.msra.mxu0 0
        %2349 = vmatprep.subr.bf16.mxu0 0
        %2350 = vmatpush1.bf16.msra.mxu0 0
        %2351 = vmatprep.subr.bf16.mxu0 0
        %2352 = vmatpush1.bf16.msra.mxu0 0
        %2353 = vmatprep.subr.bf16.mxu0 0
        %2354 = vmatpush1.bf16.msra.mxu0 0
        %2355 = vmatprep.subr.bf16.mxu0 0
        %2356 = vmatpush1.bf16.msra.mxu0 0
        %2357 = vmatprep.subr.bf16.mxu0 0
        %2358 = vmatpush1.bf16.msra.mxu0 0
        %2359 = vmatprep.subr.bf16.mxu0 0
        %2360 = vmatpush1.bf16.msra.mxu0 0
        %2361 = vmatprep.subr.bf16.mxu0 0
        %2362 = vmatpush1.bf16.msra.mxu0 0
        %2363 = vmatprep.subr.bf16.mxu0 0
        %2364 = vmatpush1.bf16.msra.mxu0 0
        %2365 = vmatprep.subr.bf16.mxu0 0
        %2366 = vmatpush1.bf16.msra.mxu0 0
        %2367 = vmatprep.mubr.bf16.mxu0 0
        %2368 = vmatmul.mubr.bf16.gmra.mrb[0].mxu0 %v2242
        %v2369 = vpop.f32.mrb[0].mxu0
        %v2370 = vadd.f32 0.0, %v2369
        %v2371 = vpop.f32.mrb[0].mxu0
        %v2372 = vpop.f32.mrb[0].mxu0
        %v2373 = vadd.f32 0.0, %v2372
        %v2374 = vpop.f32.mrb[0].mxu0
        %2375 = vdwg.mxu0
        %v2377 = vsel %vm2158, %v2230, 0
        %2379 = vmatprep.subr.bf16.mxu0 0
        %2380 = vmatpush1.bf16.msra.mxu0 %v2377
        %2381 = vmatprep.subr.bf16.mxu0 0
        %2382 = vmatpush1.bf16.msra.mxu0 0
        %2383 = vmatprep.subr.bf16.mxu0 0
        %2384 = vmatpush1.bf16.msra.mxu0 0
        %2385 = vmatprep.subr.bf16.mxu0 0
        %2386 = vmatpush1.bf16.msra.mxu0 0
        %2387 = vmatprep.subr.bf16.mxu0 0
        %2388 = vmatpush1.bf16.msra.mxu0 0
        %2389 = vmatprep.subr.bf16.mxu0 0
        %2390 = vmatpush1.bf16.msra.mxu0 0
        %2391 = vmatprep.subr.bf16.mxu0 0
        %2392 = vmatpush1.bf16.msra.mxu0 0
        %2393 = vmatprep.subr.bf16.mxu0 0
        %2394 = vmatpush1.bf16.msra.mxu0 0
        %2395 = vmatprep.subr.bf16.mxu0 0
        %2396 = vmatpush1.bf16.msra.mxu0 0
        %2397 = vmatprep.subr.bf16.mxu0 0
        %2398 = vmatpush1.bf16.msra.mxu0 0
        %2399 = vmatprep.subr.bf16.mxu0 0
        %2400 = vmatpush1.bf16.msra.mxu0 0
        %2401 = vmatprep.subr.bf16.mxu0 0
        %2402 = vmatpush1.bf16.msra.mxu0 0
        %2403 = vmatprep.subr.bf16.mxu0 0
        %2404 = vmatpush1.bf16.msra.mxu0 0
        %2405 = vmatprep.subr.bf16.mxu0 0
        %2406 = vmatpush1.bf16.msra.mxu0 0
        %2407 = vmatprep.subr.bf16.mxu0 0
        %2408 = vmatpush1.bf16.msra.mxu0 0
        %2409 = vmatprep.subr.bf16.mxu0 0
        %2410 = vmatpush1.bf16.msra.mxu0 0
        %2411 = vmatprep.mubr.bf16.mxu0 0
        %2412 = vmatmul.mubr.bf16.gmra.mrb[0].mxu0 %v2242
        %v2413 = vpop.f32.mrb[0].mxu0
        %v2414 = vadd.f32 0.0, %v2413
        %v2415 = vpop.f32.mrb[0].mxu0
        %v2416 = vpop.f32.mrb[0].mxu0
        %v2417 = vadd.f32 0.0, %v2416
        %v2418 = vpop.f32.mrb[0].mxu0
        %2419 = vdwg.mxu0
        %v2421 = vsel %vm2158, %v2231, 0
        %2423 = vmatprep.subr.bf16.mxu0 0
        %2424 = vmatpush1.bf16.msra.mxu0 %v2421
        %2425 = vmatprep.subr.bf16.mxu0 0
        %2426 = vmatpush1.bf16.msra.mxu0 0
        %2427 = vmatprep.subr.bf16.mxu0 0
        %2428 = vmatpush1.bf16.msra.mxu0 0
        %2429 = vmatprep.subr.bf16.mxu0 0
        %2430 = vmatpush1.bf16.msra.mxu0 0
        %2431 = vmatprep.subr.bf16.mxu0 0
        %2432 = vmatpush1.bf16.msra.mxu0 0
        %2433 = vmatprep.subr.bf16.mxu0 0
        %2434 = vmatpush1.bf16.msra.mxu0 0
        %2435 = vmatprep.subr.bf16.mxu0 0
        %2436 = vmatpush1.bf16.msra.mxu0 0
        %2437 = vmatprep.subr.bf16.mxu0 0
        %2438 = vmatpush1.bf16.msra.mxu0 0
        %2439 = vmatprep.subr.bf16.mxu0 0
        %2440 = vmatpush1.bf16.msra.mxu0 0
        %2441 = vmatprep.subr.bf16.mxu0 0
        %2442 = vmatpush1.bf16.msra.mxu0 0
        %2443 = vmatprep.subr.bf16.mxu0 0
        %2444 = vmatpush1.bf16.msra.mxu0 0
        %2445 = vmatprep.subr.bf16.mxu0 0
        %2446 = vmatpush1.bf16.msra.mxu0 0
        %2447 = vmatprep.subr.bf16.mxu0 0
        %2448 = vmatpush1.bf16.msra.mxu0 0
        %2449 = vmatprep.subr.bf16.mxu0 0
        %2450 = vmatpush1.bf16.msra.mxu0 0
        %2451 = vmatprep.subr.bf16.mxu0 0
        %2452 = vmatpush1.bf16.msra.mxu0 0
        %2453 = vmatprep.subr.bf16.mxu0 0
        %2454 = vmatpush1.bf16.msra.mxu0 0
        %2455 = vmatprep.mubr.bf16.mxu0 0
        %2456 = vmatmul.mubr.bf16.gmra.mrb[0].mxu0 %v2242
        %v2457 = vpop.f32.mrb[0].mxu0
        %v2458 = vadd.f32 0.0, %v2457
        %v2459 = vpop.f32.mrb[0].mxu0
        %v2460 = vpop.f32.mrb[0].mxu0
        %v2461 = vadd.f32 0.0, %v2460
        %v2462 = vpop.f32.mrb[0].mxu0
        %2463 = vdwg.mxu0
        %v2465 = vsel %vm2158, %v2232, 0
        %2467 = vmatprep.subr.bf16.mxu0 0
        %2468 = vmatpush1.bf16.msra.mxu0 %v2465
        %2469 = vmatprep.subr.bf16.mxu0 0
        %2470 = vmatpush1.bf16.msra.mxu0 0
        %2471 = vmatprep.subr.bf16.mxu0 0
        %2472 = vmatpush1.bf16.msra.mxu0 0
        %2473 = vmatprep.subr.bf16.mxu0 0
        %2474 = vmatpush1.bf16.msra.mxu0 0
        %2475 = vmatprep.subr.bf16.mxu0 0
        %2476 = vmatpush1.bf16.msra.mxu0 0
        %2477 = vmatprep.subr.bf16.mxu0 0
        %2478 = vmatpush1.bf16.msra.mxu0 0
        %2479 = vmatprep.subr.bf16.mxu0 0
        %2480 = vmatpush1.bf16.msra.mxu0 0
        %2481 = vmatprep.subr.bf16.mxu0 0
        %2482 = vmatpush1.bf16.msra.mxu0 0
        %2483 = vmatprep.subr.bf16.mxu0 0
        %2484 = vmatpush1.bf16.msra.mxu0 0
        %2485 = vmatprep.subr.bf16.mxu0 0
        %2486 = vmatpush1.bf16.msra.mxu0 0
        %2487 = vmatprep.subr.bf16.mxu0 0
        %2488 = vmatpush1.bf16.msra.mxu0 0
        %2489 = vmatprep.subr.bf16.mxu0 0
        %2490 = vmatpush1.bf16.msra.mxu0 0
        %2491 = vmatprep.subr.bf16.mxu0 0
        %2492 = vmatpush1.bf16.msra.mxu0 0
        %2493 = vmatprep.subr.bf16.mxu0 0
        %2494 = vmatpush1.bf16.msra.mxu0 0
        %2495 = vmatprep.subr.bf16.mxu0 0
        %2496 = vmatpush1.bf16.msra.mxu0 0
        %2497 = vmatprep.subr.bf16.mxu0 0
        %2498 = vmatpush1.bf16.msra.mxu0 0
        %2499 = vmatprep.mubr.bf16.mxu0 0
        %2500 = vmatmul.mubr.bf16.gmra.mrb[0].mxu0 %v2242
        %v2501 = vpop.f32.mrb[0].mxu0
        %v2502 = vadd.f32 0.0, %v2501
        %v2503 = vpop.f32.mrb[0].mxu0
        %v2504 = vpop.f32.mrb[0].mxu0
        %v2505 = vadd.f32 0.0, %v2504
        %v2506 = vpop.f32.mrb[0].mxu0
        %2507 = vdwg.mxu0
        %v2509 = vsel %vm2158, %v2233, 0
        %2511 = vmatprep.subr.bf16.mxu0 0
        %2512 = vmatpush1.bf16.msra.mxu0 %v2509
        %2513 = vmatprep.subr.bf16.mxu0 0
        %2514 = vmatpush1.bf16.msra.mxu0 0
        %2515 = vmatprep.subr.bf16.mxu0 0
        %2516 = vmatpush1.bf16.msra.mxu0 0
        %2517 = vmatprep.subr.bf16.mxu0 0
        %2518 = vmatpush1.bf16.msra.mxu0 0
        %2519 = vmatprep.subr.bf16.mxu0 0
        %2520 = vmatpush1.bf16.msra.mxu0 0
        %2521 = vmatprep.subr.bf16.mxu0 0
        %2522 = vmatpush1.bf16.msra.mxu0 0
        %2523 = vmatprep.subr.bf16.mxu0 0
        %2524 = vmatpush1.bf16.msra.mxu0 0
        %2525 = vmatprep.subr.bf16.mxu0 0
        %2526 = vmatpush1.bf16.msra.mxu0 0
        %2527 = vmatprep.subr.bf16.mxu0 0
        %2528 = vmatpush1.bf16.msra.mxu0 0
        %2529 = vmatprep.subr.bf16.mxu0 0
        %2530 = vmatpush1.bf16.msra.mxu0 0
        %2531 = vmatprep.subr.bf16.mxu0 0
        %2532 = vmatpush1.bf16.msra.mxu0 0
        %2533 = vmatprep.subr.bf16.mxu0 0
        %2534 = vmatpush1.bf16.msra.mxu0 0
        %2535 = vmatprep.subr.bf16.mxu0 0
        %2536 = vmatpush1.bf16.msra.mxu0 0
        %2537 = vmatprep.subr.bf16.mxu0 0
        %2538 = vmatpush1.bf16.msra.mxu0 0
        %2539 = vmatprep.subr.bf16.mxu0 0
        %2540 = vmatpush1.bf16.msra.mxu0 0
        %2541 = vmatprep.subr.bf16.mxu0 0
        %2542 = vmatpush1.bf16.msra.mxu0 0
        %2543 = vmatprep.mubr.bf16.mxu0 0
        %2544 = vmatmul.mubr.bf16.gmra.mrb[0].mxu0 %v2242
        %v2545 = vpop.f32.mrb[0].mxu0
        %v2546 = vadd.f32 0.0, %v2545
        %v2547 = vpop.f32.mrb[0].mxu0
        %v2548 = vpop.f32.mrb[0].mxu0
        %v2549 = vadd.f32 0.0, %v2548
        %v2550 = vpop.f32.mrb[0].mxu0
        %2551 = vdwg.mxu0
        %v2553 = vsel %vm2158, %v2234, 0
        %2555 = vmatprep.subr.bf16.mxu0 0
        %2556 = vmatpush1.bf16.msra.mxu0 %v2553
        %2557 = vmatprep.subr.bf16.mxu0 0
        %2558 = vmatpush1.bf16.msra.mxu0 0
        %2559 = vmatprep.subr.bf16.mxu0 0
        %2560 = vmatpush1.bf16.msra.mxu0 0
        %2561 = vmatprep.subr.bf16.mxu0 0
        %2562 = vmatpush1.bf16.msra.mxu0 0
        %2563 = vmatprep.subr.bf16.mxu0 0
        %2564 = vmatpush1.bf16.msra.mxu0 0
        %2565 = vmatprep.subr.bf16.mxu0 0
        %2566 = vmatpush1.bf16.msra.mxu0 0
        %2567 = vmatprep.subr.bf16.mxu0 0
        %2568 = vmatpush1.bf16.msra.mxu0 0
        %2569 = vmatprep.subr.bf16.mxu0 0
        %2570 = vmatpush1.bf16.msra.mxu0 0
        %2571 = vmatprep.subr.bf16.mxu0 0
        %2572 = vmatpush1.bf16.msra.mxu0 0
        %2573 = vmatprep.subr.bf16.mxu0 0
        %2574 = vmatpush1.bf16.msra.mxu0 0
        %2575 = vmatprep.subr.bf16.mxu0 0
        %2576 = vmatpush1.bf16.msra.mxu0 0
        %2577 = vmatprep.subr.bf16.mxu0 0
        %2578 = vmatpush1.bf16.msra.mxu0 0
        %2579 = vmatprep.subr.bf16.mxu0 0
        %2580 = vmatpush1.bf16.msra.mxu0 0
        %2581 = vmatprep.subr.bf16.mxu0 0
        %2582 = vmatpush1.bf16.msra.mxu0 0
        %2583 = vmatprep.subr.bf16.mxu0 0
        %2584 = vmatpush1.bf16.msra.mxu0 0
        %2585 = vmatprep.subr.bf16.mxu0 0
        %2586 = vmatpush1.bf16.msra.mxu0 0
        %2587 = vmatprep.mubr.bf16.mxu0 0
        %2588 = vmatmul.mubr.bf16.gmra.mrb[0].mxu0 %v2242
        %v2589 = vpop.f32.mrb[0].mxu0
        %v2590 = vadd.f32 0.0, %v2589
        %v2591 = vpop.f32.mrb[0].mxu0
        %v2592 = vpop.f32.mrb[0].mxu0
        %v2593 = vadd.f32 0.0, %v2592
        %v2594 = vpop.f32.mrb[0].mxu0
        %2595 = vdwg.mxu0
        %v2596 = vcombine.low %v2282, %v2370
        %v2597 = vcombine.high %v2282, %v2370
        %v2599 = vunpack.c.l.s4 1983009808
        %v2600 = vunpack.c.0.s8 %v2599
        %v2601 = vlaneseq
        %v2602 = vshrl.u32 %v2601, 7
        %v2603 = vsub.s32 %v2600, %v2602
        %v2604 = vrot.slane %v2596, %v2603
        %v2606 = vunpack.c.l.s4 1983009808
        %v2607 = vunpack.c.0.s8 %v2606
        %v2608 = vlaneseq
        %v2609 = vshrl.u32 %v2608, 7
        %v2610 = vsub.s32 %v2607, %v2609
        %v2611 = vrot.slane %v2597, %v2610
        %v2612 = vcombine.low %v2326, %v2414
        %v2613 = vcombine.high %v2326, %v2414
        %v2615 = vunpack.c.l.s4 1983009808
        %v2616 = vunpack.c.0.s8 %v2615
        %v2617 = vlaneseq
        %v2618 = vshrl.u32 %v2617, 7
        %v2619 = vsub.s32 %v2616, %v2618
        %v2620 = vrot.slane %v2612, %v2619
        %v2622 = vunpack.c.l.s4 1983009808
        %v2623 = vunpack.c.0.s8 %v2622
        %v2624 = vlaneseq
        %v2625 = vshrl.u32 %v2624, 7
        %v2626 = vsub.s32 %v2623, %v2625
        %v2627 = vrot.slane %v2613, %v2626
        %v2628 = vcombine.low %v2458, %v2546
        %v2629 = vcombine.high %v2458, %v2546
        %v2631 = vunpack.c.l.s4 1983009808
        %v2632 = vunpack.c.0.s8 %v2631
        %v2633 = vlaneseq
        %v2634 = vshrl.u32 %v2633, 7
        %v2635 = vsub.s32 %v2632, %v2634
        %v2636 = vrot.slane %v2628, %v2635
        %v2638 = vunpack.c.l.s4 1983009808
        %v2639 = vunpack.c.0.s8 %v2638
        %v2640 = vlaneseq
        %v2641 = vshrl.u32 %v2640, 7
        %v2642 = vsub.s32 %v2639, %v2641
        %v2643 = vrot.slane %v2629, %v2642
        %v2644 = vcombine.low %v2502, %v2590
        %v2645 = vcombine.high %v2502, %v2590
        %v2647 = vunpack.c.l.s4 1983009808
        %v2648 = vunpack.c.0.s8 %v2647
        %v2649 = vlaneseq
        %v2650 = vshrl.u32 %v2649, 7
        %v2651 = vsub.s32 %v2648, %v2650
        %v2652 = vrot.slane %v2644, %v2651
        %v2654 = vunpack.c.l.s4 1983009808
        %v2655 = vunpack.c.0.s8 %v2654
        %v2656 = vlaneseq
        %v2657 = vshrl.u32 %v2656, 7
        %v2658 = vsub.s32 %v2655, %v2657
        %v2659 = vrot.slane %v2645, %v2658
        %v2660 = vcombine.low %v2604, %v2620
        %v2661 = vcombine.high %v2604, %v2620
        %v2663 = vunpack.c.l.s4 1934713408
        %v2664 = vunpack.c.0.s8 %v2663
        %v2665 = vlaneseq
        %v2666 = vshrl.u32 %v2665, 7
        %v2667 = vsub.s32 %v2664, %v2666
        %v2668 = vrot.slane %v2660, %v2667
        %v2670 = vunpack.c.l.s4 1934713408
        %v2671 = vunpack.c.0.s8 %v2670
        %v2672 = vlaneseq
        %v2673 = vshrl.u32 %v2672, 7
        %v2674 = vsub.s32 %v2671, %v2673
        %v2675 = vrot.slane %v2661, %v2674
        %v2676 = vcombine.low %v2611, %v2627
        %v2677 = vcombine.high %v2611, %v2627
        %v2679 = vunpack.c.l.s4 1934713408
        %v2680 = vunpack.c.0.s8 %v2679
        %v2681 = vlaneseq
        %v2682 = vshrl.u32 %v2681, 7
        %v2683 = vsub.s32 %v2680, %v2682
        %v2684 = vrot.slane %v2676, %v2683
        %v2686 = vunpack.c.l.s4 1934713408
        %v2687 = vunpack.c.0.s8 %v2686
        %v2688 = vlaneseq
        %v2689 = vshrl.u32 %v2688, 7
        %v2690 = vsub.s32 %v2687, %v2689
        %v2691 = vrot.slane %v2677, %v2690
        %v2692 = vcombine.low %v2636, %v2652
        %v2693 = vcombine.high %v2636, %v2652
        %v2695 = vunpack.c.l.s4 1934713408
        %v2696 = vunpack.c.0.s8 %v2695
        %v2697 = vlaneseq
        %v2698 = vshrl.u32 %v2697, 7
        %v2699 = vsub.s32 %v2696, %v2698
        %v2700 = vrot.slane %v2692, %v2699
        %v2702 = vunpack.c.l.s4 1934713408
        %v2703 = vunpack.c.0.s8 %v2702
        %v2704 = vlaneseq
        %v2705 = vshrl.u32 %v2704, 7
        %v2706 = vsub.s32 %v2703, %v2705
        %v2707 = vrot.slane %v2693, %v2706
        %v2708 = vcombine.low %v2643, %v2659
        %v2709 = vcombine.high %v2643, %v2659
        %v2711 = vunpack.c.l.s4 1934713408
        %v2712 = vunpack.c.0.s8 %v2711
        %v2713 = vlaneseq
        %v2714 = vshrl.u32 %v2713, 7
        %v2715 = vsub.s32 %v2712, %v2714
        %v2716 = vrot.slane %v2708, %v2715
        %v2718 = vunpack.c.l.s4 1934713408
        %v2719 = vunpack.c.0.s8 %v2718
        %v2720 = vlaneseq
        %v2721 = vshrl.u32 %v2720, 7
        %v2722 = vsub.s32 %v2719, %v2721
        %v2723 = vrot.slane %v2709, %v2722
        %v2724 = vcombine.low %v2668, %v2700
        %v2725 = vcombine.high %v2668, %v2700
        %v2726 = vcombine.low %v2675, %v2707
        %v2727 = vcombine.high %v2675, %v2707
        %v2728 = vcombine.low %v2684, %v2716
        %v2729 = vcombine.high %v2684, %v2716
        %v2730 = vcombine.low %v2691, %v2723
        %v2731 = vcombine.high %v2691, %v2723
        %v2732 = vcombine.low %v2285, %v2373
        %v2733 = vcombine.high %v2285, %v2373
        %v2735 = vunpack.c.l.s4 1983009808
        %v2736 = vunpack.c.0.s8 %v2735
        %v2737 = vlaneseq
        %v2738 = vshrl.u32 %v2737, 7
        %v2739 = vsub.s32 %v2736, %v2738
        %v2740 = vrot.slane %v2732, %v2739
        %v2742 = vunpack.c.l.s4 1983009808
        %v2743 = vunpack.c.0.s8 %v2742
        %v2744 = vlaneseq
        %v2745 = vshrl.u32 %v2744, 7
        %v2746 = vsub.s32 %v2743, %v2745
        %v2747 = vrot.slane %v2733, %v2746
        %v2748 = vcombine.low %v2329, %v2417
        %v2749 = vcombine.high %v2329, %v2417
        %v2751 = vunpack.c.l.s4 1983009808
        %v2752 = vunpack.c.0.s8 %v2751
        %v2753 = vlaneseq
        %v2754 = vshrl.u32 %v2753, 7
        %v2755 = vsub.s32 %v2752, %v2754
        %v2756 = vrot.slane %v2748, %v2755
        %v2758 = vunpack.c.l.s4 1983009808
        %v2759 = vunpack.c.0.s8 %v2758
        %v2760 = vlaneseq
        %v2761 = vshrl.u32 %v2760, 7
        %v2762 = vsub.s32 %v2759, %v2761
        %v2763 = vrot.slane %v2749, %v2762
        %v2764 = vcombine.low %v2461, %v2549
        %v2765 = vcombine.high %v2461, %v2549
        %v2767 = vunpack.c.l.s4 1983009808
        %v2768 = vunpack.c.0.s8 %v2767
        %v2769 = vlaneseq
        %v2770 = vshrl.u32 %v2769, 7
        %v2771 = vsub.s32 %v2768, %v2770
        %v2772 = vrot.slane %v2764, %v2771
        %v2774 = vunpack.c.l.s4 1983009808
        %v2775 = vunpack.c.0.s8 %v2774
        %v2776 = vlaneseq
        %v2777 = vshrl.u32 %v2776, 7
        %v2778 = vsub.s32 %v2775, %v2777
        %v2779 = vrot.slane %v2765, %v2778
        %v2780 = vcombine.low %v2505, %v2593
        %v2781 = vcombine.high %v2505, %v2593
        %v2783 = vunpack.c.l.s4 1983009808
        %v2784 = vunpack.c.0.s8 %v2783
        %v2785 = vlaneseq
        %v2786 = vshrl.u32 %v2785, 7
        %v2787 = vsub.s32 %v2784, %v2786
        %v2788 = vrot.slane %v2780, %v2787
        %v2790 = vunpack.c.l.s4 1983009808
        %v2791 = vunpack.c.0.s8 %v2790
        %v2792 = vlaneseq
        %v2793 = vshrl.u32 %v2792, 7
        %v2794 = vsub.s32 %v2791, %v2793
        %v2795 = vrot.slane %v2781, %v2794
        %v2796 = vcombine.low %v2740, %v2756
        %v2797 = vcombine.high %v2740, %v2756
        %v2799 = vunpack.c.l.s4 1934713408
        %v2800 = vunpack.c.0.s8 %v2799
        %v2801 = vlaneseq
        %v2802 = vshrl.u32 %v2801, 7
        %v2803 = vsub.s32 %v2800, %v2802
        %v2804 = vrot.slane %v2796, %v2803
        %v2806 = vunpack.c.l.s4 1934713408
        %v2807 = vunpack.c.0.s8 %v2806
        %v2808 = vlaneseq
        %v2809 = vshrl.u32 %v2808, 7
        %v2810 = vsub.s32 %v2807, %v2809
        %v2811 = vrot.slane %v2797, %v2810
        %v2812 = vcombine.low %v2747, %v2763
        %v2813 = vcombine.high %v2747, %v2763
        %v2815 = vunpack.c.l.s4 1934713408
        %v2816 = vunpack.c.0.s8 %v2815
        %v2817 = vlaneseq
        %v2818 = vshrl.u32 %v2817, 7
        %v2819 = vsub.s32 %v2816, %v2818
        %v2820 = vrot.slane %v2812, %v2819
        %v2822 = vunpack.c.l.s4 1934713408
        %v2823 = vunpack.c.0.s8 %v2822
        %v2824 = vlaneseq
        %v2825 = vshrl.u32 %v2824, 7
        %v2826 = vsub.s32 %v2823, %v2825
        %v2827 = vrot.slane %v2813, %v2826
        %v2828 = vcombine.low %v2772, %v2788
        %v2829 = vcombine.high %v2772, %v2788
        %v2831 = vunpack.c.l.s4 1934713408
        %v2832 = vunpack.c.0.s8 %v2831
        %v2833 = vlaneseq
        %v2834 = vshrl.u32 %v2833, 7
        %v2835 = vsub.s32 %v2832, %v2834
        %v2836 = vrot.slane %v2828, %v2835
        %v2838 = vunpack.c.l.s4 1934713408
        %v2839 = vunpack.c.0.s8 %v2838
        %v2840 = vlaneseq
        %v2841 = vshrl.u32 %v2840, 7
        %v2842 = vsub.s32 %v2839, %v2841
        %v2843 = vrot.slane %v2829, %v2842
        %v2844 = vcombine.low %v2779, %v2795
        %v2845 = vcombine.high %v2779, %v2795
        %v2847 = vunpack.c.l.s4 1934713408
        %v2848 = vunpack.c.0.s8 %v2847
        %v2849 = vlaneseq
        %v2850 = vshrl.u32 %v2849, 7
        %v2851 = vsub.s32 %v2848, %v2850
        %v2852 = vrot.slane %v2844, %v2851
        %v2854 = vunpack.c.l.s4 1934713408
        %v2855 = vunpack.c.0.s8 %v2854
        %v2856 = vlaneseq
        %v2857 = vshrl.u32 %v2856, 7
        %v2858 = vsub.s32 %v2855, %v2857
        %v2859 = vrot.slane %v2845, %v2858
        %v2860 = vcombine.low %v2804, %v2836
        %v2861 = vcombine.high %v2804, %v2836
        %v2862 = vcombine.low %v2811, %v2843
        %v2863 = vcombine.high %v2811, %v2843
        %v2864 = vcombine.low %v2820, %v2852
        %v2865 = vcombine.high %v2820, %v2852
        %v2866 = vcombine.low %v2827, %v2859
        %v2867 = vcombine.high %v2827, %v2859
        %2869 = vrot.lane.b32.xlu0 %v2725, 32
        %v2870 = vpop.permute.xlu0 %2869
        %2873 = vrot.lane.b32.xlu0 %v2726, 64
        %v2874 = vpop.permute.xlu0 %2873
        %2877 = vrot.lane.b32.xlu0 %v2727, 96
        %v2878 = vpop.permute.xlu0 %2877
        %2881 = vrot.lane.b32.xlu0 %v2729, 32
        %v2882 = vpop.permute.xlu0 %2881
        %2885 = vrot.lane.b32.xlu0 %v2730, 64
        %v2886 = vpop.permute.xlu0 %2885
        %2889 = vrot.lane.b32.xlu0 %v2731, 96
        %v2890 = vpop.permute.xlu0 %2889
        %2893 = vrot.lane.b32.xlu0 %v2861, 32
        %v2894 = vpop.permute.xlu0 %2893
        %2897 = vrot.lane.b32.xlu0 %v2862, 64
        %v2898 = vpop.permute.xlu0 %2897
        %2901 = vrot.lane.b32.xlu0 %v2863, 96
        %v2902 = vpop.permute.xlu0 %2901
        %2905 = vrot.lane.b32.xlu0 %v2865, 32
        %v2906 = vpop.permute.xlu0 %2905
        %2909 = vrot.lane.b32.xlu0 %v2866, 64
        %v2910 = vpop.permute.xlu0 %2909
        %2913 = vrot.lane.b32.xlu0 %v2867, 96
        %v2914 = vpop.permute.xlu0 %2913
        %v2916 = vsel %vm2088, %v2724, %v2870
        %v2917 = vsel %vm2091, %v2916, %v2874
        %v2918 = vsel %vm2094, %v2917, %v2878
        %v2919 = vsel %vm2088, %v2728, %v2882
        %v2920 = vsel %vm2091, %v2919, %v2886
        %v2921 = vsel %vm2094, %v2920, %v2890
        %v2922 = vsel %vm2088, %v2860, %v2894
        %v2923 = vsel %vm2091, %v2922, %v2898
        %v2924 = vsel %vm2094, %v2923, %v2902
        %v2925 = vsel %vm2088, %v2864, %v2906
        %v2926 = vsel %vm2091, %v2925, %v2910
        %v2927 = vsel %vm2094, %v2926, %v2914
        %v2928 = vpack.c.bf16 %v2918, %v2918
        %v2929 = vpack.c.bf16 %v2921, %v2921
        %v2930 = vpack.c.bf16 %v2924, %v2924
        %v2931 = vpack.c.bf16 %v2927, %v2927
        %v2933 = vsel %vm2158, %v2928, 0
        %v2936 = vsel %vm2158, %v2929, 0
        %v2939 = vsel %vm2158, %v2930, 0
        %v2942 = vsel %vm2158, %v2931, 0
        %2944 = vmatprep.subr.bf16.mxu0 %v2936
        %2945 = vmatpush1.bf16.msra.mxu0 %v2933
        %2946 = vmatprep.subr.bf16.mxu0 0
        %2947 = vmatpush1.bf16.msra.mxu0 0
        %2948 = vmatprep.subr.bf16.mxu0 0
        %2949 = vmatpush1.bf16.msra.mxu0 0
        %2950 = vmatprep.subr.bf16.mxu0 0
        %2951 = vmatpush1.bf16.msra.mxu0 0
        %2952 = vmatprep.subr.bf16.mxu0 0
        %2953 = vmatpush1.bf16.msra.mxu0 0
        %2954 = vmatprep.subr.bf16.mxu0 0
        %2955 = vmatpush1.bf16.msra.mxu0 0
        %2956 = vmatprep.subr.bf16.mxu0 0
        %2957 = vmatpush1.bf16.msra.mxu0 0
        %2958 = vmatprep.subr.bf16.mxu0 0
        %2959 = vmatpush1.bf16.msra.mxu0 0
        %2960 = vmatprep.subr.bf16.mxu0 0
        %2961 = vmatpush1.bf16.msra.mxu0 0
        %2962 = vmatprep.subr.bf16.mxu0 0
        %2963 = vmatpush1.bf16.msra.mxu0 0
        %2964 = vmatprep.subr.bf16.mxu0 0
        %2965 = vmatpush1.bf16.msra.mxu0 0
        %2966 = vmatprep.subr.bf16.mxu0 0
        %2967 = vmatpush1.bf16.msra.mxu0 0
        %2968 = vmatprep.subr.bf16.mxu0 0
        %2969 = vmatpush1.bf16.msra.mxu0 0
        %2970 = vmatprep.subr.bf16.mxu0 0
        %2971 = vmatpush1.bf16.msra.mxu0 0
        %2972 = vmatprep.subr.bf16.mxu0 0
        %2973 = vmatpush1.bf16.msra.mxu0 0
        %2974 = vmatprep.subr.bf16.mxu0 0
        %2975 = vmatpush1.bf16.msra.mxu0 0
        %2976 = vmatprep.mubr.bf16.mxu0 0
        %2977 = vmatmul.mubr.bf16.gmra.mrb[0].mxu0 %v2242
        %v2978 = vpop.f32.mrb[0].mxu0
        %v2979 = vadd.f32 0.0, %v2978
        %v2980 = vpop.f32.mrb[0].mxu0
        %v2981 = vadd.f32 0.0, %v2980
        %v2982 = vpop.f32.mrb[0].mxu0
        %v2983 = vadd.f32 0.0, %v2982
        %v2984 = vpop.f32.mrb[0].mxu0
        %v2985 = vadd.f32 0.0, %v2984
        %2986 = vdwg.mxu0
        %2987 = vmatprep.subr.bf16.mxu0 %v2942
        %2988 = vmatpush1.bf16.msra.mxu0 %v2939
        %2989 = vmatprep.subr.bf16.mxu0 0
        %2990 = vmatpush1.bf16.msra.mxu0 0
        %2991 = vmatprep.subr.bf16.mxu0 0
        %2992 = vmatpush1.bf16.msra.mxu0 0
        %2993 = vmatprep.subr.bf16.mxu0 0
        %2994 = vmatpush1.bf16.msra.mxu0 0
        %2995 = vmatprep.subr.bf16.mxu0 0
        %2996 = vmatpush1.bf16.msra.mxu0 0
        %2997 = vmatprep.subr.bf16.mxu0 0
        %2998 = vmatpush1.bf16.msra.mxu0 0
        %2999 = vmatprep.subr.bf16.mxu0 0
        %3000 = vmatpush1.bf16.msra.mxu0 0
        %3001 = vmatprep.subr.bf16.mxu0 0
        %3002 = vmatpush1.bf16.msra.mxu0 0
        %3003 = vmatprep.subr.bf16.mxu0 0
        %3004 = vmatpush1.bf16.msra.mxu0 0
        %3005 = vmatprep.subr.bf16.mxu0 0
        %3006 = vmatpush1.bf16.msra.mxu0 0
        %3007 = vmatprep.subr.bf16.mxu0 0
        %3008 = vmatpush1.bf16.msra.mxu0 0
        %3009 = vmatprep.subr.bf16.mxu0 0
        %3010 = vmatpush1.bf16.msra.mxu0 0
        %3011 = vmatprep.subr.bf16.mxu0 0
        %3012 = vmatpush1.bf16.msra.mxu0 0
        %3013 = vmatprep.subr.bf16.mxu0 0
        %3014 = vmatpush1.bf16.msra.mxu0 0
        %3015 = vmatprep.subr.bf16.mxu0 0
        %3016 = vmatpush1.bf16.msra.mxu0 0
        %3017 = vmatprep.subr.bf16.mxu0 0
        %3018 = vmatpush1.bf16.msra.mxu0 0
        %3019 = vmatprep.mubr.bf16.mxu0 0
        %3020 = vmatmul.mubr.bf16.gmra.mrb[0].mxu0 %v2242
        %v3021 = vpop.f32.mrb[0].mxu0
        %v3022 = vadd.f32 0.0, %v3021
        %v3023 = vpop.f32.mrb[0].mxu0
        %v3024 = vadd.f32 0.0, %v3023
        %v3025 = vpop.f32.mrb[0].mxu0
        %v3026 = vadd.f32 0.0, %v3025
        %v3027 = vpop.f32.mrb[0].mxu0
        %v3028 = vadd.f32 0.0, %v3027
        %3029 = vdwg.mxu0
        %3030 = vmatprep.subr.bf16.mxu0 %v2116
        %3031 = vmatpush1.bf16.msra.mxu0 %v2115
        %3032 = vmatprep.subr.bf16.mxu0 0
        %3033 = vmatpush1.bf16.msra.mxu0 0
        %3034 = vmatprep.subr.bf16.mxu0 0
        %3035 = vmatpush1.bf16.msra.mxu0 0
        %3036 = vmatprep.subr.bf16.mxu0 0
        %3037 = vmatpush1.bf16.msra.mxu0 0
        %3038 = vmatprep.subr.bf16.mxu0 0
        %3039 = vmatpush1.bf16.msra.mxu0 0
        %3040 = vmatprep.subr.bf16.mxu0 0
        %3041 = vmatpush1.bf16.msra.mxu0 0
        %3042 = vmatprep.subr.bf16.mxu0 0
        %3043 = vmatpush1.bf16.msra.mxu0 0
        %3044 = vmatprep.subr.bf16.mxu0 0
        %3045 = vmatpush1.bf16.msra.mxu0 0
        %3046 = vmatprep.subr.bf16.mxu0 0
        %3047 = vmatpush1.bf16.msra.mxu0 0
        %3048 = vmatprep.subr.bf16.mxu0 0
        %3049 = vmatpush1.bf16.msra.mxu0 0
        %3050 = vmatprep.subr.bf16.mxu0 0
        %3051 = vmatpush1.bf16.msra.mxu0 0
        %3052 = vmatprep.subr.bf16.mxu0 0
        %3053 = vmatpush1.bf16.msra.mxu0 0
        %3054 = vmatprep.subr.bf16.mxu0 0
        %3055 = vmatpush1.bf16.msra.mxu0 0
        %3056 = vmatprep.subr.bf16.mxu0 0
        %3057 = vmatpush1.bf16.msra.mxu0 0
        %3058 = vmatprep.subr.bf16.mxu0 0
        %3059 = vmatpush1.bf16.msra.mxu0 0
        %3060 = vmatprep.subr.bf16.mxu0 0
        %3061 = vmatpush1.bf16.msra.mxu0 0
        %3062 = vmatprep.mubr.bf16.mxu0 0
        %3063 = vmatmul.mubr.bf16.gmra.mrb[0].mxu0 %v790
        %v3064 = vpop.f32.mrb[0].mxu0
        %v3065 = vadd.f32 %v2979, %v3064
        %v3066 = vpop.f32.mrb[0].mxu0
        %v3067 = vadd.f32 %v2981, %v3066
        %v3068 = vpop.f32.mrb[0].mxu0
        %v3069 = vadd.f32 %v2983, %v3068
        %v3070 = vpop.f32.mrb[0].mxu0
        %v3071 = vadd.f32 %v2985, %v3070
        %3072 = vdwg.mxu0
        %3073 = vmatprep.subr.bf16.mxu0 %v2118
        %3074 = vmatpush1.bf16.msra.mxu0 %v2117
        %3075 = vmatprep.subr.bf16.mxu0 0
        %3076 = vmatpush1.bf16.msra.mxu0 0
        %3077 = vmatprep.subr.bf16.mxu0 0
        %3078 = vmatpush1.bf16.msra.mxu0 0
        %3079 = vmatprep.subr.bf16.mxu0 0
        %3080 = vmatpush1.bf16.msra.mxu0 0
        %3081 = vmatprep.subr.bf16.mxu0 0
        %3082 = vmatpush1.bf16.msra.mxu0 0
        %3083 = vmatprep.subr.bf16.mxu0 0
        %3084 = vmatpush1.bf16.msra.mxu0 0
        %3085 = vmatprep.subr.bf16.mxu0 0
        %3086 = vmatpush1.bf16.msra.mxu0 0
        %3087 = vmatprep.subr.bf16.mxu0 0
        %3088 = vmatpush1.bf16.msra.mxu0 0
        %3089 = vmatprep.subr.bf16.mxu0 0
        %3090 = vmatpush1.bf16.msra.mxu0 0
        %3091 = vmatprep.subr.bf16.mxu0 0
        %3092 = vmatpush1.bf16.msra.mxu0 0
        %3093 = vmatprep.subr.bf16.mxu0 0
        %3094 = vmatpush1.bf16.msra.mxu0 0
        %3095 = vmatprep.subr.bf16.mxu0 0
        %3096 = vmatpush1.bf16.msra.mxu0 0
        %3097 = vmatprep.subr.bf16.mxu0 0
        %3098 = vmatpush1.bf16.msra.mxu0 0
        %3099 = vmatprep.subr.bf16.mxu0 0
        %3100 = vmatpush1.bf16.msra.mxu0 0
        %3101 = vmatprep.subr.bf16.mxu0 0
        %3102 = vmatpush1.bf16.msra.mxu0 0
        %3103 = vmatprep.subr.bf16.mxu0 0
        %3104 = vmatpush1.bf16.msra.mxu0 0
        %3105 = vmatprep.mubr.bf16.mxu0 0
        %3106 = vmatmul.mubr.bf16.gmra.mrb[0].mxu0 %v790
        %v3107 = vpop.f32.mrb[0].mxu0
        %v3108 = vadd.f32 %v3022, %v3107
        %v3109 = vpop.f32.mrb[0].mxu0
        %v3110 = vadd.f32 %v3024, %v3109
        %v3111 = vpop.f32.mrb[0].mxu0
        %v3112 = vadd.f32 %v3026, %v3111
        %v3113 = vpop.f32.mrb[0].mxu0
        %v3114 = vadd.f32 %v3028, %v3113
        %3115 = vdwg.mxu0
        %v3116 = vld [vmem:[%s493] sm:$0xff]
        %v3117 = vld [vmem:[%s493 + $0x8] sm:$0xff]
        %v3118 = vld [vmem:[%s493 + $0x10] sm:$0xff]
        %v3119 = vld [vmem:[%s493 + $0x18] sm:$0xff]
        %v3120 = vld [vmem:[%s493 + $0x20] sm:$0xff]
        %v3121 = vld [vmem:[%s493 + $0x28] sm:$0xff]
        %v3122 = vld [vmem:[%s493 + $0x30] sm:$0xff]
        %v3123 = vld [vmem:[%s493 + $0x38] sm:$0xff]
        %v3124 = vpack.c.bf16 %v3117, %v3116
        %v3125 = vpack.c.bf16 %v3119, %v3118
        %v3126 = vpack.c.bf16 %v3121, %v3120
        %v3127 = vpack.c.bf16 %v3123, %v3122
        %v3128 = vld [vmem:[%s6] sm:$0xf]
        %v3129 = vld [vmem:[%s6 + $0x4] sm:$0xf]
        %v3130 = vld [vmem:[%s6 + $0x8] sm:$0xf]
        %v3131 = vld [vmem:[%s6 + $0xc] sm:$0xf]
        %v3132 = vld [vmem:[%s10] sm:$0xf]
        %v3133 = vld [vmem:[%s10 + $0x4] sm:$0xf]
        %v3138 = vunpack.c.l.b16 %v3128
        %v3139 = vunpack.c.l.b16 %v3129
        %v3140 = vunpack.c.l.b16 %v3130
        %v3141 = vunpack.c.l.b16 %v3131
        %v3142 = vpack.c.b16 %v3139, %v3138
        %v3143 = vpack.c.b16 %v3141, %v3140
        %v3147 = vsel %vm2088, %v3124, 0
        %v3150 = vsel %vm2088, %v3125, 0
        %v3153 = vsel %vm2088, %v3126, 0
        %v3156 = vsel %vm2088, %v3127, 0
        %3158 = vmatprep.subr.bf16.mxu0 0
        %3159 = vmatpush1.bf16.msra.mxu0 %v3142
        %3160 = vmatprep.subr.bf16.mxu0 0
        %3161 = vmatpush1.bf16.msra.mxu0 %v3143
        %3162 = vmatprep.subr.bf16.mxu0 0
        %3163 = vmatpush1.bf16.msra.mxu0 0
        %3164 = vmatprep.subr.bf16.mxu0 0
        %3165 = vmatpush1.bf16.msra.mxu0 0
        %3166 = vmatprep.subr.bf16.mxu0 0
        %3167 = vmatpush1.bf16.msra.mxu0 0
        %3168 = vmatprep.subr.bf16.mxu0 0
        %3169 = vmatpush1.bf16.msra.mxu0 0
        %3170 = vmatprep.subr.bf16.mxu0 0
        %3171 = vmatpush1.bf16.msra.mxu0 0
        %3172 = vmatprep.subr.bf16.mxu0 0
        %3173 = vmatpush1.bf16.msra.mxu0 0
        %3174 = vmatprep.subr.bf16.mxu0 0
        %3175 = vmatpush1.bf16.msra.mxu0 0
        %3176 = vmatprep.subr.bf16.mxu0 0
        %3177 = vmatpush1.bf16.msra.mxu0 0
        %3178 = vmatprep.subr.bf16.mxu0 0
        %3179 = vmatpush1.bf16.msra.mxu0 0
        %3180 = vmatprep.subr.bf16.mxu0 0
        %3181 = vmatpush1.bf16.msra.mxu0 0
        %3182 = vmatprep.subr.bf16.mxu0 0
        %3183 = vmatpush1.bf16.msra.mxu0 0
        %3184 = vmatprep.subr.bf16.mxu0 0
        %3185 = vmatpush1.bf16.msra.mxu0 0
        %3186 = vmatprep.subr.bf16.mxu0 0
        %3187 = vmatpush1.bf16.msra.mxu0 0
        %3188 = vmatprep.subr.bf16.mxu0 0
        %3189 = vmatpush1.bf16.msra.mxu0 0
        %3190 = vmatprep.mubr.bf16.mxu0 0
        %3191 = vmatmul.mubr.bf16.gmra.mrb[0].mxu0 %v3147
        %v3192 = vpop.f32.mrb[0].mxu0
        %v3193 = vadd.f32 0.0, %v3192
        %v3194 = vpop.f32.mrb[0].mxu0
        %v3195 = vpop.f32.mrb[0].mxu0
        %v3196 = vadd.f32 0.0, %v3195
        %v3197 = vpop.f32.mrb[0].mxu0
        %3198 = vmatprep.mubr.bf16.mxu0 0
        %3199 = vmatmul.mubr.bf16.gmra.mrb[0].mxu0 %v3150
        %v3200 = vpop.f32.mrb[0].mxu0
        %v3201 = vadd.f32 0.0, %v3200
        %v3202 = vpop.f32.mrb[0].mxu0
        %v3203 = vpop.f32.mrb[0].mxu0
        %v3204 = vadd.f32 0.0, %v3203
        %v3205 = vpop.f32.mrb[0].mxu0
        %3206 = vmatprep.mubr.bf16.mxu0 0
        %3207 = vmatmul.mubr.bf16.gmra.mrb[0].mxu0 %v3153
        %v3208 = vpop.f32.mrb[0].mxu0
        %v3209 = vadd.f32 0.0, %v3208
        %v3210 = vpop.f32.mrb[0].mxu0
        %v3211 = vpop.f32.mrb[0].mxu0
        %v3212 = vadd.f32 0.0, %v3211
        %v3213 = vpop.f32.mrb[0].mxu0
        %3214 = vmatprep.mubr.bf16.mxu0 0
        %3215 = vmatmul.mubr.bf16.gmra.mrb[0].mxu0 %v3156
        %v3216 = vpop.f32.mrb[0].mxu0
        %v3217 = vadd.f32 0.0, %v3216
        %v3218 = vpop.f32.mrb[0].mxu0
        %v3219 = vpop.f32.mrb[0].mxu0
        %v3220 = vadd.f32 0.0, %v3219
        %v3221 = vpop.f32.mrb[0].mxu0
        %3222 = vdwg.mxu0
        %v3223 = vpack.c.bf16 %v3193, %v3193
        %v3224 = vpack.c.bf16 %v3196, %v3196
        %v3225 = vpack.c.bf16 %v3201, %v3201
        %v3226 = vpack.c.bf16 %v3204, %v3204
        %v3227 = vpack.c.bf16 %v3209, %v3209
        %v3228 = vpack.c.bf16 %v3212, %v3212
        %v3229 = vpack.c.bf16 %v3217, %v3217
        %v3230 = vpack.c.bf16 %v3220, %v3220
        %v3233 = vunpack.c.l.b16 %v3132
        %v3234 = vunpack.c.l.b16 %v3133
        %v3235 = vpack.c.b16 %v3234, %v3233
        %v3237 = vsel %vm2240, %v3235, 0
        %v3240 = vsel %vm2158, %v3223, 0
        %3242 = vmatprep.subr.bf16.mxu0 0
        %3243 = vmatpush1.bf16.msra.mxu0 %v3240
        %3244 = vmatprep.subr.bf16.mxu0 0
        %3245 = vmatpush1.bf16.msra.mxu0 0
        %3246 = vmatprep.subr.bf16.mxu0 0
        %3247 = vmatpush1.bf16.msra.mxu0 0
        %3248 = vmatprep.subr.bf16.mxu0 0
        %3249 = vmatpush1.bf16.msra.mxu0 0
        %3250 = vmatprep.subr.bf16.mxu0 0
        %3251 = vmatpush1.bf16.msra.mxu0 0
        %3252 = vmatprep.subr.bf16.mxu0 0
        %3253 = vmatpush1.bf16.msra.mxu0 0
        %3254 = vmatprep.subr.bf16.mxu0 0
        %3255 = vmatpush1.bf16.msra.mxu0 0
        %3256 = vmatprep.subr.bf16.mxu0 0
        %3257 = vmatpush1.bf16.msra.mxu0 0
        %3258 = vmatprep.subr.bf16.mxu0 0
        %3259 = vmatpush1.bf16.msra.mxu0 0
        %3260 = vmatprep.subr.bf16.mxu0 0
        %3261 = vmatpush1.bf16.msra.mxu0 0
        %3262 = vmatprep.subr.bf16.mxu0 0
        %3263 = vmatpush1.bf16.msra.mxu0 0
        %3264 = vmatprep.subr.bf16.mxu0 0
        %3265 = vmatpush1.bf16.msra.mxu0 0
        %3266 = vmatprep.subr.bf16.mxu0 0
        %3267 = vmatpush1.bf16.msra.mxu0 0
        %3268 = vmatprep.subr.bf16.mxu0 0
        %3269 = vmatpush1.bf16.msra.mxu0 0
        %3270 = vmatprep.subr.bf16.mxu0 0
        %3271 = vmatpush1.bf16.msra.mxu0 0
        %3272 = vmatprep.subr.bf16.mxu0 0
        %3273 = vmatpush1.bf16.msra.mxu0 0
        %3274 = vmatprep.mubr.bf16.mxu0 0
        %3275 = vmatmul.mubr.bf16.gmra.mrb[0].mxu0 %v3237
        %v3276 = vpop.f32.mrb[0].mxu0
        %v3277 = vadd.f32 0.0, %v3276
        %v3278 = vpop.f32.mrb[0].mxu0
        %v3279 = vpop.f32.mrb[0].mxu0
        %v3280 = vadd.f32 0.0, %v3279
        %v3281 = vpop.f32.mrb[0].mxu0
        %3282 = vdwg.mxu0
        %v3284 = vsel %vm2158, %v3224, 0
        %3286 = vmatprep.subr.bf16.mxu0 0
        %3287 = vmatpush1.bf16.msra.mxu0 %v3284
        %3288 = vmatprep.subr.bf16.mxu0 0
        %3289 = vmatpush1.bf16.msra.mxu0 0
        %3290 = vmatprep.subr.bf16.mxu0 0
        %3291 = vmatpush1.bf16.msra.mxu0 0
        %3292 = vmatprep.subr.bf16.mxu0 0
        %3293 = vmatpush1.bf16.msra.mxu0 0
        %3294 = vmatprep.subr.bf16.mxu0 0
        %3295 = vmatpush1.bf16.msra.mxu0 0
        %3296 = vmatprep.subr.bf16.mxu0 0
        %3297 = vmatpush1.bf16.msra.mxu0 0
        %3298 = vmatprep.subr.bf16.mxu0 0
        %3299 = vmatpush1.bf16.msra.mxu0 0
        %3300 = vmatprep.subr.bf16.mxu0 0
        %3301 = vmatpush1.bf16.msra.mxu0 0
        %3302 = vmatprep.subr.bf16.mxu0 0
        %3303 = vmatpush1.bf16.msra.mxu0 0
        %3304 = vmatprep.subr.bf16.mxu0 0
        %3305 = vmatpush1.bf16.msra.mxu0 0
        %3306 = vmatprep.subr.bf16.mxu0 0
        %3307 = vmatpush1.bf16.msra.mxu0 0
        %3308 = vmatprep.subr.bf16.mxu0 0
        %3309 = vmatpush1.bf16.msra.mxu0 0
        %3310 = vmatprep.subr.bf16.mxu0 0
        %3311 = vmatpush1.bf16.msra.mxu0 0
        %3312 = vmatprep.subr.bf16.mxu0 0
        %3313 = vmatpush1.bf16.msra.mxu0 0
        %3314 = vmatprep.subr.bf16.mxu0 0
        %3315 = vmatpush1.bf16.msra.mxu0 0
        %3316 = vmatprep.subr.bf16.mxu0 0
        %3317 = vmatpush1.bf16.msra.mxu0 0
        %3318 = vmatprep.mubr.bf16.mxu0 0
        %3319 = vmatmul.mubr.bf16.gmra.mrb[0].mxu0 %v3237
        %v3320 = vpop.f32.mrb[0].mxu0
        %v3321 = vadd.f32 0.0, %v3320
        %v3322 = vpop.f32.mrb[0].mxu0
        %v3323 = vpop.f32.mrb[0].mxu0
        %v3324 = vadd.f32 0.0, %v3323
        %v3325 = vpop.f32.mrb[0].mxu0
        %3326 = vdwg.mxu0
        %v3328 = vsel %vm2158, %v3225, 0
        %3330 = vmatprep.subr.bf16.mxu0 0
        %3331 = vmatpush1.bf16.msra.mxu0 %v3328
        %3332 = vmatprep.subr.bf16.mxu0 0
        %3333 = vmatpush1.bf16.msra.mxu0 0
        %3334 = vmatprep.subr.bf16.mxu0 0
        %3335 = vmatpush1.bf16.msra.mxu0 0
        %3336 = vmatprep.subr.bf16.mxu0 0
        %3337 = vmatpush1.bf16.msra.mxu0 0
        %3338 = vmatprep.subr.bf16.mxu0 0
        %3339 = vmatpush1.bf16.msra.mxu0 0
        %3340 = vmatprep.subr.bf16.mxu0 0
        %3341 = vmatpush1.bf16.msra.mxu0 0
        %3342 = vmatprep.subr.bf16.mxu0 0
        %3343 = vmatpush1.bf16.msra.mxu0 0
        %3344 = vmatprep.subr.bf16.mxu0 0
        %3345 = vmatpush1.bf16.msra.mxu0 0
        %3346 = vmatprep.subr.bf16.mxu0 0
        %3347 = vmatpush1.bf16.msra.mxu0 0
        %3348 = vmatprep.subr.bf16.mxu0 0
        %3349 = vmatpush1.bf16.msra.mxu0 0
        %3350 = vmatprep.subr.bf16.mxu0 0
        %3351 = vmatpush1.bf16.msra.mxu0 0
        %3352 = vmatprep.subr.bf16.mxu0 0
        %3353 = vmatpush1.bf16.msra.mxu0 0
        %3354 = vmatprep.subr.bf16.mxu0 0
        %3355 = vmatpush1.bf16.msra.mxu0 0
        %3356 = vmatprep.subr.bf16.mxu0 0
        %3357 = vmatpush1.bf16.msra.mxu0 0
        %3358 = vmatprep.subr.bf16.mxu0 0
        %3359 = vmatpush1.bf16.msra.mxu0 0
        %3360 = vmatprep.subr.bf16.mxu0 0
        %3361 = vmatpush1.bf16.msra.mxu0 0
        %3362 = vmatprep.mubr.bf16.mxu0 0
        %3363 = vmatmul.mubr.bf16.gmra.mrb[0].mxu0 %v3237
        %v3364 = vpop.f32.mrb[0].mxu0
        %v3365 = vadd.f32 0.0, %v3364
        %v3366 = vpop.f32.mrb[0].mxu0
        %v3367 = vpop.f32.mrb[0].mxu0
        %v3368 = vadd.f32 0.0, %v3367
        %v3369 = vpop.f32.mrb[0].mxu0
        %3370 = vdwg.mxu0
        %v3372 = vsel %vm2158, %v3226, 0
        %3374 = vmatprep.subr.bf16.mxu0 0
        %3375 = vmatpush1.bf16.msra.mxu0 %v3372
        %3376 = vmatprep.subr.bf16.mxu0 0
        %3377 = vmatpush1.bf16.msra.mxu0 0
        %3378 = vmatprep.subr.bf16.mxu0 0
        %3379 = vmatpush1.bf16.msra.mxu0 0
        %3380 = vmatprep.subr.bf16.mxu0 0
        %3381 = vmatpush1.bf16.msra.mxu0 0
        %3382 = vmatprep.subr.bf16.mxu0 0
        %3383 = vmatpush1.bf16.msra.mxu0 0
        %3384 = vmatprep.subr.bf16.mxu0 0
        %3385 = vmatpush1.bf16.msra.mxu0 0
        %3386 = vmatprep.subr.bf16.mxu0 0
        %3387 = vmatpush1.bf16.msra.mxu0 0
        %3388 = vmatprep.subr.bf16.mxu0 0
        %3389 = vmatpush1.bf16.msra.mxu0 0
        %3390 = vmatprep.subr.bf16.mxu0 0
        %3391 = vmatpush1.bf16.msra.mxu0 0
        %3392 = vmatprep.subr.bf16.mxu0 0
        %3393 = vmatpush1.bf16.msra.mxu0 0
        %3394 = vmatprep.subr.bf16.mxu0 0
        %3395 = vmatpush1.bf16.msra.mxu0 0
        %3396 = vmatprep.subr.bf16.mxu0 0
        %3397 = vmatpush1.bf16.msra.mxu0 0
        %3398 = vmatprep.subr.bf16.mxu0 0
        %3399 = vmatpush1.bf16.msra.mxu0 0
        %3400 = vmatprep.subr.bf16.mxu0 0
        %3401 = vmatpush1.bf16.msra.mxu0 0
        %3402 = vmatprep.subr.bf16.mxu0 0
        %3403 = vmatpush1.bf16.msra.mxu0 0
        %3404 = vmatprep.subr.bf16.mxu0 0
        %3405 = vmatpush1.bf16.msra.mxu0 0
        %3406 = vmatprep.mubr.bf16.mxu0 0
        %3407 = vmatmul.mubr.bf16.gmra.mrb[0].mxu0 %v3237
        %v3408 = vpop.f32.mrb[0].mxu0
        %v3409 = vadd.f32 0.0, %v3408
        %v3410 = vpop.f32.mrb[0].mxu0
        %v3411 = vpop.f32.mrb[0].mxu0
        %v3412 = vadd.f32 0.0, %v3411
        %v3413 = vpop.f32.mrb[0].mxu0
        %3414 = vdwg.mxu0
        %v3416 = vsel %vm2158, %v3227, 0
        %3418 = vmatprep.subr.bf16.mxu0 0
        %3419 = vmatpush1.bf16.msra.mxu0 %v3416
        %3420 = vmatprep.subr.bf16.mxu0 0
        %3421 = vmatpush1.bf16.msra.mxu0 0
        %3422 = vmatprep.subr.bf16.mxu0 0
        %3423 = vmatpush1.bf16.msra.mxu0 0
        %3424 = vmatprep.subr.bf16.mxu0 0
        %3425 = vmatpush1.bf16.msra.mxu0 0
        %3426 = vmatprep.subr.bf16.mxu0 0
        %3427 = vmatpush1.bf16.msra.mxu0 0
        %3428 = vmatprep.subr.bf16.mxu0 0
        %3429 = vmatpush1.bf16.msra.mxu0 0
        %3430 = vmatprep.subr.bf16.mxu0 0
        %3431 = vmatpush1.bf16.msra.mxu0 0
        %3432 = vmatprep.subr.bf16.mxu0 0
        %3433 = vmatpush1.bf16.msra.mxu0 0
        %3434 = vmatprep.subr.bf16.mxu0 0
        %3435 = vmatpush1.bf16.msra.mxu0 0
        %3436 = vmatprep.subr.bf16.mxu0 0
        %3437 = vmatpush1.bf16.msra.mxu0 0
        %3438 = vmatprep.subr.bf16.mxu0 0
        %3439 = vmatpush1.bf16.msra.mxu0 0
        %3440 = vmatprep.subr.bf16.mxu0 0
        %3441 = vmatpush1.bf16.msra.mxu0 0
        %3442 = vmatprep.subr.bf16.mxu0 0
        %3443 = vmatpush1.bf16.msra.mxu0 0
        %3444 = vmatprep.subr.bf16.mxu0 0
        %3445 = vmatpush1.bf16.msra.mxu0 0
        %3446 = vmatprep.subr.bf16.mxu0 0
        %3447 = vmatpush1.bf16.msra.mxu0 0
        %3448 = vmatprep.subr.bf16.mxu0 0
        %3449 = vmatpush1.bf16.msra.mxu0 0
        %3450 = vmatprep.mubr.bf16.mxu0 0
        %3451 = vmatmul.mubr.bf16.gmra.mrb[0].mxu0 %v3237
        %v3452 = vpop.f32.mrb[0].mxu0
        %v3453 = vadd.f32 0.0, %v3452
        %v3454 = vpop.f32.mrb[0].mxu0
        %v3455 = vpop.f32.mrb[0].mxu0
        %v3456 = vadd.f32 0.0, %v3455
        %v3457 = vpop.f32.mrb[0].mxu0
        %3458 = vdwg.mxu0
        %v3460 = vsel %vm2158, %v3228, 0
        %3462 = vmatprep.subr.bf16.mxu0 0
        %3463 = vmatpush1.bf16.msra.mxu0 %v3460
        %3464 = vmatprep.subr.bf16.mxu0 0
        %3465 = vmatpush1.bf16.msra.mxu0 0
        %3466 = vmatprep.subr.bf16.mxu0 0
        %3467 = vmatpush1.bf16.msra.mxu0 0
        %3468 = vmatprep.subr.bf16.mxu0 0
        %3469 = vmatpush1.bf16.msra.mxu0 0
        %3470 = vmatprep.subr.bf16.mxu0 0
        %3471 = vmatpush1.bf16.msra.mxu0 0
        %3472 = vmatprep.subr.bf16.mxu0 0
        %3473 = vmatpush1.bf16.msra.mxu0 0
        %3474 = vmatprep.subr.bf16.mxu0 0
        %3475 = vmatpush1.bf16.msra.mxu0 0
        %3476 = vmatprep.subr.bf16.mxu0 0
        %3477 = vmatpush1.bf16.msra.mxu0 0
        %3478 = vmatprep.subr.bf16.mxu0 0
        %3479 = vmatpush1.bf16.msra.mxu0 0
        %3480 = vmatprep.subr.bf16.mxu0 0
        %3481 = vmatpush1.bf16.msra.mxu0 0
        %3482 = vmatprep.subr.bf16.mxu0 0
        %3483 = vmatpush1.bf16.msra.mxu0 0
        %3484 = vmatprep.subr.bf16.mxu0 0
        %3485 = vmatpush1.bf16.msra.mxu0 0
        %3486 = vmatprep.subr.bf16.mxu0 0
        %3487 = vmatpush1.bf16.msra.mxu0 0
        %3488 = vmatprep.subr.bf16.mxu0 0
        %3489 = vmatpush1.bf16.msra.mxu0 0
        %3490 = vmatprep.subr.bf16.mxu0 0
        %3491 = vmatpush1.bf16.msra.mxu0 0
        %3492 = vmatprep.subr.bf16.mxu0 0
        %3493 = vmatpush1.bf16.msra.mxu0 0
        %3494 = vmatprep.mubr.bf16.mxu0 0
        %3495 = vmatmul.mubr.bf16.gmra.mrb[0].mxu0 %v3237
        %v3496 = vpop.f32.mrb[0].mxu0
        %v3497 = vadd.f32 0.0, %v3496
        %v3498 = vpop.f32.mrb[0].mxu0
        %v3499 = vpop.f32.mrb[0].mxu0
        %v3500 = vadd.f32 0.0, %v3499
        %v3501 = vpop.f32.mrb[0].mxu0
        %3502 = vdwg.mxu0
        %v3504 = vsel %vm2158, %v3229, 0
        %3506 = vmatprep.subr.bf16.mxu0 0
        %3507 = vmatpush1.bf16.msra.mxu0 %v3504
        %3508 = vmatprep.subr.bf16.mxu0 0
        %3509 = vmatpush1.bf16.msra.mxu0 0
        %3510 = vmatprep.subr.bf16.mxu0 0
        %3511 = vmatpush1.bf16.msra.mxu0 0
        %3512 = vmatprep.subr.bf16.mxu0 0
        %3513 = vmatpush1.bf16.msra.mxu0 0
        %3514 = vmatprep.subr.bf16.mxu0 0
        %3515 = vmatpush1.bf16.msra.mxu0 0
        %3516 = vmatprep.subr.bf16.mxu0 0
        %3517 = vmatpush1.bf16.msra.mxu0 0
        %3518 = vmatprep.subr.bf16.mxu0 0
        %3519 = vmatpush1.bf16.msra.mxu0 0
        %3520 = vmatprep.subr.bf16.mxu0 0
        %3521 = vmatpush1.bf16.msra.mxu0 0
        %3522 = vmatprep.subr.bf16.mxu0 0
        %3523 = vmatpush1.bf16.msra.mxu0 0
        %3524 = vmatprep.subr.bf16.mxu0 0
        %3525 = vmatpush1.bf16.msra.mxu0 0
        %3526 = vmatprep.subr.bf16.mxu0 0
        %3527 = vmatpush1.bf16.msra.mxu0 0
        %3528 = vmatprep.subr.bf16.mxu0 0
        %3529 = vmatpush1.bf16.msra.mxu0 0
        %3530 = vmatprep.subr.bf16.mxu0 0
        %3531 = vmatpush1.bf16.msra.mxu0 0
        %3532 = vmatprep.subr.bf16.mxu0 0
        %3533 = vmatpush1.bf16.msra.mxu0 0
        %3534 = vmatprep.subr.bf16.mxu0 0
        %3535 = vmatpush1.bf16.msra.mxu0 0
        %3536 = vmatprep.subr.bf16.mxu0 0
        %3537 = vmatpush1.bf16.msra.mxu0 0
        %3538 = vmatprep.mubr.bf16.mxu0 0
        %3539 = vmatmul.mubr.bf16.gmra.mrb[0].mxu0 %v3237
        %v3540 = vpop.f32.mrb[0].mxu0
        %v3541 = vadd.f32 0.0, %v3540
        %v3542 = vpop.f32.mrb[0].mxu0
        %v3543 = vpop.f32.mrb[0].mxu0
        %v3544 = vadd.f32 0.0, %v3543
        %v3545 = vpop.f32.mrb[0].mxu0
        %3546 = vdwg.mxu0
        %v3548 = vsel %vm2158, %v3230, 0
        %3550 = vmatprep.subr.bf16.mxu0 0
        %3551 = vmatpush1.bf16.msra.mxu0 %v3548
        %3552 = vmatprep.subr.bf16.mxu0 0
        %3553 = vmatpush1.bf16.msra.mxu0 0
        %3554 = vmatprep.subr.bf16.mxu0 0
        %3555 = vmatpush1.bf16.msra.mxu0 0
        %3556 = vmatprep.subr.bf16.mxu0 0
        %3557 = vmatpush1.bf16.msra.mxu0 0
        %3558 = vmatprep.subr.bf16.mxu0 0
        %3559 = vmatpush1.bf16.msra.mxu0 0
        %3560 = vmatprep.subr.bf16.mxu0 0
        %3561 = vmatpush1.bf16.msra.mxu0 0
        %3562 = vmatprep.subr.bf16.mxu0 0
        %3563 = vmatpush1.bf16.msra.mxu0 0
        %3564 = vmatprep.subr.bf16.mxu0 0
        %3565 = vmatpush1.bf16.msra.mxu0 0
        %3566 = vmatprep.subr.bf16.mxu0 0
        %3567 = vmatpush1.bf16.msra.mxu0 0
        %3568 = vmatprep.subr.bf16.mxu0 0
        %3569 = vmatpush1.bf16.msra.mxu0 0
        %3570 = vmatprep.subr.bf16.mxu0 0
        %3571 = vmatpush1.bf16.msra.mxu0 0
        %3572 = vmatprep.subr.bf16.mxu0 0
        %3573 = vmatpush1.bf16.msra.mxu0 0
        %3574 = vmatprep.subr.bf16.mxu0 0
        %3575 = vmatpush1.bf16.msra.mxu0 0
        %3576 = vmatprep.subr.bf16.mxu0 0
        %3577 = vmatpush1.bf16.msra.mxu0 0
        %3578 = vmatprep.subr.bf16.mxu0 0
        %3579 = vmatpush1.bf16.msra.mxu0 0
        %3580 = vmatprep.subr.bf16.mxu0 0
        %3581 = vmatpush1.bf16.msra.mxu0 0
        %3582 = vmatprep.mubr.bf16.mxu0 0
        %3583 = vmatmul.mubr.bf16.gmra.mrb[0].mxu0 %v3237
        %v3584 = vpop.f32.mrb[0].mxu0
        %v3585 = vadd.f32 0.0, %v3584
        %v3586 = vpop.f32.mrb[0].mxu0
        %v3587 = vpop.f32.mrb[0].mxu0
        %v3588 = vadd.f32 0.0, %v3587
        %v3589 = vpop.f32.mrb[0].mxu0
        %3590 = vdwg.mxu0
        %v3591 = vcombine.low %v3277, %v3365
        %v3592 = vcombine.high %v3277, %v3365
        %v3594 = vunpack.c.l.s4 1983009808
        %v3595 = vunpack.c.0.s8 %v3594
        %v3596 = vlaneseq
        %v3597 = vshrl.u32 %v3596, 7
        %v3598 = vsub.s32 %v3595, %v3597
        %v3599 = vrot.slane %v3591, %v3598
        %v3601 = vunpack.c.l.s4 1983009808
        %v3602 = vunpack.c.0.s8 %v3601
        %v3603 = vlaneseq
        %v3604 = vshrl.u32 %v3603, 7
        %v3605 = vsub.s32 %v3602, %v3604
        %v3606 = vrot.slane %v3592, %v3605
        %v3607 = vcombine.low %v3321, %v3409
        %v3608 = vcombine.high %v3321, %v3409
        %v3610 = vunpack.c.l.s4 1983009808
        %v3611 = vunpack.c.0.s8 %v3610
        %v3612 = vlaneseq
        %v3613 = vshrl.u32 %v3612, 7
        %v3614 = vsub.s32 %v3611, %v3613
        %v3615 = vrot.slane %v3607, %v3614
        %v3617 = vunpack.c.l.s4 1983009808
        %v3618 = vunpack.c.0.s8 %v3617
        %v3619 = vlaneseq
        %v3620 = vshrl.u32 %v3619, 7
        %v3621 = vsub.s32 %v3618, %v3620
        %v3622 = vrot.slane %v3608, %v3621
        %v3623 = vcombine.low %v3453, %v3541
        %v3624 = vcombine.high %v3453, %v3541
        %v3626 = vunpack.c.l.s4 1983009808
        %v3627 = vunpack.c.0.s8 %v3626
        %v3628 = vlaneseq
        %v3629 = vshrl.u32 %v3628, 7
        %v3630 = vsub.s32 %v3627, %v3629
        %v3631 = vrot.slane %v3623, %v3630
        %v3633 = vunpack.c.l.s4 1983009808
        %v3634 = vunpack.c.0.s8 %v3633
        %v3635 = vlaneseq
        %v3636 = vshrl.u32 %v3635, 7
        %v3637 = vsub.s32 %v3634, %v3636
        %v3638 = vrot.slane %v3624, %v3637
        %v3639 = vcombine.low %v3497, %v3585
        %v3640 = vcombine.high %v3497, %v3585
        %v3642 = vunpack.c.l.s4 1983009808
        %v3643 = vunpack.c.0.s8 %v3642
        %v3644 = vlaneseq
        %v3645 = vshrl.u32 %v3644, 7
        %v3646 = vsub.s32 %v3643, %v3645
        %v3647 = vrot.slane %v3639, %v3646
        %v3649 = vunpack.c.l.s4 1983009808
        %v3650 = vunpack.c.0.s8 %v3649
        %v3651 = vlaneseq
        %v3652 = vshrl.u32 %v3651, 7
        %v3653 = vsub.s32 %v3650, %v3652
        %v3654 = vrot.slane %v3640, %v3653
        %v3655 = vcombine.low %v3599, %v3615
        %v3656 = vcombine.high %v3599, %v3615
        %v3658 = vunpack.c.l.s4 1934713408
        %v3659 = vunpack.c.0.s8 %v3658
        %v3660 = vlaneseq
        %v3661 = vshrl.u32 %v3660, 7
        %v3662 = vsub.s32 %v3659, %v3661
        %v3663 = vrot.slane %v3655, %v3662
        %v3665 = vunpack.c.l.s4 1934713408
        %v3666 = vunpack.c.0.s8 %v3665
        %v3667 = vlaneseq
        %v3668 = vshrl.u32 %v3667, 7
        %v3669 = vsub.s32 %v3666, %v3668
        %v3670 = vrot.slane %v3656, %v3669
        %v3671 = vcombine.low %v3606, %v3622
        %v3672 = vcombine.high %v3606, %v3622
        %v3674 = vunpack.c.l.s4 1934713408
        %v3675 = vunpack.c.0.s8 %v3674
        %v3676 = vlaneseq
        %v3677 = vshrl.u32 %v3676, 7
        %v3678 = vsub.s32 %v3675, %v3677
        %v3679 = vrot.slane %v3671, %v3678
        %v3681 = vunpack.c.l.s4 1934713408
        %v3682 = vunpack.c.0.s8 %v3681
        %v3683 = vlaneseq
        %v3684 = vshrl.u32 %v3683, 7
        %v3685 = vsub.s32 %v3682, %v3684
        %v3686 = vrot.slane %v3672, %v3685
        %v3687 = vcombine.low %v3631, %v3647
        %v3688 = vcombine.high %v3631, %v3647
        %v3690 = vunpack.c.l.s4 1934713408
        %v3691 = vunpack.c.0.s8 %v3690
        %v3692 = vlaneseq
        %v3693 = vshrl.u32 %v3692, 7
        %v3694 = vsub.s32 %v3691, %v3693
        %v3695 = vrot.slane %v3687, %v3694
        %v3697 = vunpack.c.l.s4 1934713408
        %v3698 = vunpack.c.0.s8 %v3697
        %v3699 = vlaneseq
        %v3700 = vshrl.u32 %v3699, 7
        %v3701 = vsub.s32 %v3698, %v3700
        %v3702 = vrot.slane %v3688, %v3701
        %v3703 = vcombine.low %v3638, %v3654
        %v3704 = vcombine.high %v3638, %v3654
        %v3706 = vunpack.c.l.s4 1934713408
        %v3707 = vunpack.c.0.s8 %v3706
        %v3708 = vlaneseq
        %v3709 = vshrl.u32 %v3708, 7
        %v3710 = vsub.s32 %v3707, %v3709
        %v3711 = vrot.slane %v3703, %v3710
        %v3713 = vunpack.c.l.s4 1934713408
        %v3714 = vunpack.c.0.s8 %v3713
        %v3715 = vlaneseq
        %v3716 = vshrl.u32 %v3715, 7
        %v3717 = vsub.s32 %v3714, %v3716
        %v3718 = vrot.slane %v3704, %v3717
        %v3719 = vcombine.low %v3663, %v3695
        %v3720 = vcombine.high %v3663, %v3695
        %v3721 = vcombine.low %v3670, %v3702
        %v3722 = vcombine.high %v3670, %v3702
        %v3723 = vcombine.low %v3679, %v3711
        %v3724 = vcombine.high %v3679, %v3711
        %v3725 = vcombine.low %v3686, %v3718
        %v3726 = vcombine.high %v3686, %v3718
        %v3727 = vcombine.low %v3280, %v3368
        %v3728 = vcombine.high %v3280, %v3368
        %v3730 = vunpack.c.l.s4 1983009808
        %v3731 = vunpack.c.0.s8 %v3730
        %v3732 = vlaneseq
        %v3733 = vshrl.u32 %v3732, 7
        %v3734 = vsub.s32 %v3731, %v3733
        %v3735 = vrot.slane %v3727, %v3734
        %v3737 = vunpack.c.l.s4 1983009808
        %v3738 = vunpack.c.0.s8 %v3737
        %v3739 = vlaneseq
        %v3740 = vshrl.u32 %v3739, 7
        %v3741 = vsub.s32 %v3738, %v3740
        %v3742 = vrot.slane %v3728, %v3741
        %v3743 = vcombine.low %v3324, %v3412
        %v3744 = vcombine.high %v3324, %v3412
        %v3746 = vunpack.c.l.s4 1983009808
        %v3747 = vunpack.c.0.s8 %v3746
        %v3748 = vlaneseq
        %v3749 = vshrl.u32 %v3748, 7
        %v3750 = vsub.s32 %v3747, %v3749
        %v3751 = vrot.slane %v3743, %v3750
        %v3753 = vunpack.c.l.s4 1983009808
        %v3754 = vunpack.c.0.s8 %v3753
        %v3755 = vlaneseq
        %v3756 = vshrl.u32 %v3755, 7
        %v3757 = vsub.s32 %v3754, %v3756
        %v3758 = vrot.slane %v3744, %v3757
        %v3759 = vcombine.low %v3456, %v3544
        %v3760 = vcombine.high %v3456, %v3544
        %v3762 = vunpack.c.l.s4 1983009808
        %v3763 = vunpack.c.0.s8 %v3762
        %v3764 = vlaneseq
        %v3765 = vshrl.u32 %v3764, 7
        %v3766 = vsub.s32 %v3763, %v3765
        %v3767 = vrot.slane %v3759, %v3766
        %v3769 = vunpack.c.l.s4 1983009808
        %v3770 = vunpack.c.0.s8 %v3769
        %v3771 = vlaneseq
        %v3772 = vshrl.u32 %v3771, 7
        %v3773 = vsub.s32 %v3770, %v3772
        %v3774 = vrot.slane %v3760, %v3773
        %v3775 = vcombine.low %v3500, %v3588
        %v3776 = vcombine.high %v3500, %v3588
        %v3778 = vunpack.c.l.s4 1983009808
        %v3779 = vunpack.c.0.s8 %v3778
        %v3780 = vlaneseq
        %v3781 = vshrl.u32 %v3780, 7
        %v3782 = vsub.s32 %v3779, %v3781
        %v3783 = vrot.slane %v3775, %v3782
        %v3785 = vunpack.c.l.s4 1983009808
        %v3786 = vunpack.c.0.s8 %v3785
        %v3787 = vlaneseq
        %v3788 = vshrl.u32 %v3787, 7
        %v3789 = vsub.s32 %v3786, %v3788
        %v3790 = vrot.slane %v3776, %v3789
        %v3791 = vcombine.low %v3735, %v3751
        %v3792 = vcombine.high %v3735, %v3751
        %v3794 = vunpack.c.l.s4 1934713408
        %v3795 = vunpack.c.0.s8 %v3794
        %v3796 = vlaneseq
        %v3797 = vshrl.u32 %v3796, 7
        %v3798 = vsub.s32 %v3795, %v3797
        %v3799 = vrot.slane %v3791, %v3798
        %v3801 = vunpack.c.l.s4 1934713408
        %v3802 = vunpack.c.0.s8 %v3801
        %v3803 = vlaneseq
        %v3804 = vshrl.u32 %v3803, 7
        %v3805 = vsub.s32 %v3802, %v3804
        %v3806 = vrot.slane %v3792, %v3805
        %v3807 = vcombine.low %v3742, %v3758
        %v3808 = vcombine.high %v3742, %v3758
        %v3810 = vunpack.c.l.s4 1934713408
        %v3811 = vunpack.c.0.s8 %v3810
        %v3812 = vlaneseq
        %v3813 = vshrl.u32 %v3812, 7
        %v3814 = vsub.s32 %v3811, %v3813
        %v3815 = vrot.slane %v3807, %v3814
        %v3817 = vunpack.c.l.s4 1934713408
        %v3818 = vunpack.c.0.s8 %v3817
        %v3819 = vlaneseq
        %v3820 = vshrl.u32 %v3819, 7
        %v3821 = vsub.s32 %v3818, %v3820
        %v3822 = vrot.slane %v3808, %v3821
        %v3823 = vcombine.low %v3767, %v3783
        %v3824 = vcombine.high %v3767, %v3783
        %v3826 = vunpack.c.l.s4 1934713408
        %v3827 = vunpack.c.0.s8 %v3826
        %v3828 = vlaneseq
        %v3829 = vshrl.u32 %v3828, 7
        %v3830 = vsub.s32 %v3827, %v3829
        %v3831 = vrot.slane %v3823, %v3830
        %v3833 = vunpack.c.l.s4 1934713408
        %v3834 = vunpack.c.0.s8 %v3833
        %v3835 = vlaneseq
        %v3836 = vshrl.u32 %v3835, 7
        %v3837 = vsub.s32 %v3834, %v3836
        %v3838 = vrot.slane %v3824, %v3837
        %v3839 = vcombine.low %v3774, %v3790
        %v3840 = vcombine.high %v3774, %v3790
        %v3842 = vunpack.c.l.s4 1934713408
        %v3843 = vunpack.c.0.s8 %v3842
        %v3844 = vlaneseq
        %v3845 = vshrl.u32 %v3844, 7
        %v3846 = vsub.s32 %v3843, %v3845
        %v3847 = vrot.slane %v3839, %v3846
        %v3849 = vunpack.c.l.s4 1934713408
        %v3850 = vunpack.c.0.s8 %v3849
        %v3851 = vlaneseq
        %v3852 = vshrl.u32 %v3851, 7
        %v3853 = vsub.s32 %v3850, %v3852
        %v3854 = vrot.slane %v3840, %v3853
        %v3855 = vcombine.low %v3799, %v3831
        %v3856 = vcombine.high %v3799, %v3831
        %v3857 = vcombine.low %v3806, %v3838
        %v3858 = vcombine.high %v3806, %v3838
        %v3859 = vcombine.low %v3815, %v3847
        %v3860 = vcombine.high %v3815, %v3847
        %v3861 = vcombine.low %v3822, %v3854
        %v3862 = vcombine.high %v3822, %v3854
        %3864 = vrot.lane.b32.xlu0 %v3720, 32
        %v3865 = vpop.permute.xlu0 %3864
        %3868 = vrot.lane.b32.xlu0 %v3721, 64
        %v3869 = vpop.permute.xlu0 %3868
        %3872 = vrot.lane.b32.xlu0 %v3722, 96
        %v3873 = vpop.permute.xlu0 %3872
        %3876 = vrot.lane.b32.xlu0 %v3724, 32
        %v3877 = vpop.permute.xlu0 %3876
        %3880 = vrot.lane.b32.xlu0 %v3725, 64
        %v3881 = vpop.permute.xlu0 %3880
        %3884 = vrot.lane.b32.xlu0 %v3726, 96
        %v3885 = vpop.permute.xlu0 %3884
        %3888 = vrot.lane.b32.xlu0 %v3856, 32
        %v3889 = vpop.permute.xlu0 %3888
        %3892 = vrot.lane.b32.xlu0 %v3857, 64
        %v3893 = vpop.permute.xlu0 %3892
        %3896 = vrot.lane.b32.xlu0 %v3858, 96
        %v3897 = vpop.permute.xlu0 %3896
        %3900 = vrot.lane.b32.xlu0 %v3860, 32
        %v3901 = vpop.permute.xlu0 %3900
        %3904 = vrot.lane.b32.xlu0 %v3861, 64
        %v3905 = vpop.permute.xlu0 %3904
        %3908 = vrot.lane.b32.xlu0 %v3862, 96
        %v3909 = vpop.permute.xlu0 %3908
        %v3911 = vsel %vm2088, %v3719, %v3865
        %v3912 = vsel %vm2091, %v3911, %v3869
        %v3913 = vsel %vm2094, %v3912, %v3873
        %v3914 = vsel %vm2088, %v3723, %v3877
        %v3915 = vsel %vm2091, %v3914, %v3881
        %v3916 = vsel %vm2094, %v3915, %v3885
        %v3917 = vsel %vm2088, %v3855, %v3889
        %v3918 = vsel %vm2091, %v3917, %v3893
        %v3919 = vsel %vm2094, %v3918, %v3897
        %v3920 = vsel %vm2088, %v3859, %v3901
        %v3921 = vsel %vm2091, %v3920, %v3905
        %v3922 = vsel %vm2094, %v3921, %v3909
        %v3923 = vpack.c.bf16 %v3913, %v3913
        %v3924 = vpack.c.bf16 %v3916, %v3916
        %v3925 = vpack.c.bf16 %v3919, %v3919
        %v3926 = vpack.c.bf16 %v3922, %v3922
        %v3928 = vsel %vm2158, %v3923, 0
        %v3931 = vsel %vm2158, %v3924, 0
        %v3934 = vsel %vm2158, %v3925, 0
        %v3937 = vsel %vm2158, %v3926, 0
        %3939 = vmatprep.subr.bf16.mxu0 %v3931
        %3940 = vmatpush1.bf16.msra.mxu0 %v3928
        %3941 = vmatprep.subr.bf16.mxu0 0
        %3942 = vmatpush1.bf16.msra.mxu0 0
        %3943 = vmatprep.subr.bf16.mxu0 0
        %3944 = vmatpush1.bf16.msra.mxu0 0
        %3945 = vmatprep.subr.bf16.mxu0 0
        %3946 = vmatpush1.bf16.msra.mxu0 0
        %3947 = vmatprep.subr.bf16.mxu0 0
        %3948 = vmatpush1.bf16.msra.mxu0 0
        %3949 = vmatprep.subr.bf16.mxu0 0
        %3950 = vmatpush1.bf16.msra.mxu0 0
        %3951 = vmatprep.subr.bf16.mxu0 0
        %3952 = vmatpush1.bf16.msra.mxu0 0
        %3953 = vmatprep.subr.bf16.mxu0 0
        %3954 = vmatpush1.bf16.msra.mxu0 0
        %3955 = vmatprep.subr.bf16.mxu0 0
        %3956 = vmatpush1.bf16.msra.mxu0 0
        %3957 = vmatprep.subr.bf16.mxu0 0
        %3958 = vmatpush1.bf16.msra.mxu0 0
        %3959 = vmatprep.subr.bf16.mxu0 0
        %3960 = vmatpush1.bf16.msra.mxu0 0
        %3961 = vmatprep.subr.bf16.mxu0 0
        %3962 = vmatpush1.bf16.msra.mxu0 0
        %3963 = vmatprep.subr.bf16.mxu0 0
        %3964 = vmatpush1.bf16.msra.mxu0 0
        %3965 = vmatprep.subr.bf16.mxu0 0
        %3966 = vmatpush1.bf16.msra.mxu0 0
        %3967 = vmatprep.subr.bf16.mxu0 0
        %3968 = vmatpush1.bf16.msra.mxu0 0
        %3969 = vmatprep.subr.bf16.mxu0 0
        %3970 = vmatpush1.bf16.msra.mxu0 0
        %3971 = vmatprep.mubr.bf16.mxu0 0
        %3972 = vmatmul.mubr.bf16.gmra.mrb[0].mxu0 %v3237
        %v3973 = vpop.f32.mrb[0].mxu0
        %v3974 = vadd.f32 0.0, %v3973
        %v3975 = vpop.f32.mrb[0].mxu0
        %v3976 = vadd.f32 0.0, %v3975
        %v3977 = vpop.f32.mrb[0].mxu0
        %v3978 = vadd.f32 0.0, %v3977
        %v3979 = vpop.f32.mrb[0].mxu0
        %v3980 = vadd.f32 0.0, %v3979
        %3981 = vdwg.mxu0
        %3982 = vmatprep.subr.bf16.mxu0 %v3937
        %3983 = vmatpush1.bf16.msra.mxu0 %v3934
        %3984 = vmatprep.subr.bf16.mxu0 0
        %3985 = vmatpush1.bf16.msra.mxu0 0
        %3986 = vmatprep.subr.bf16.mxu0 0
        %3987 = vmatpush1.bf16.msra.mxu0 0
        %3988 = vmatprep.subr.bf16.mxu0 0
        %3989 = vmatpush1.bf16.msra.mxu0 0
        %3990 = vmatprep.subr.bf16.mxu0 0
        %3991 = vmatpush1.bf16.msra.mxu0 0
        %3992 = vmatprep.subr.bf16.mxu0 0
        %3993 = vmatpush1.bf16.msra.mxu0 0
        %3994 = vmatprep.subr.bf16.mxu0 0
        %3995 = vmatpush1.bf16.msra.mxu0 0
        %3996 = vmatprep.subr.bf16.mxu0 0
        %3997 = vmatpush1.bf16.msra.mxu0 0
        %3998 = vmatprep.subr.bf16.mxu0 0
        %3999 = vmatpush1.bf16.msra.mxu0 0
        %4000 = vmatprep.subr.bf16.mxu0 0
        %4001 = vmatpush1.bf16.msra.mxu0 0
        %4002 = vmatprep.subr.bf16.mxu0 0
        %4003 = vmatpush1.bf16.msra.mxu0 0
        %4004 = vmatprep.subr.bf16.mxu0 0
        %4005 = vmatpush1.bf16.msra.mxu0 0
        %4006 = vmatprep.subr.bf16.mxu0 0
        %4007 = vmatpush1.bf16.msra.mxu0 0
        %4008 = vmatprep.subr.bf16.mxu0 0
        %4009 = vmatpush1.bf16.msra.mxu0 0
        %4010 = vmatprep.subr.bf16.mxu0 0
        %4011 = vmatpush1.bf16.msra.mxu0 0
        %4012 = vmatprep.subr.bf16.mxu0 0
        %4013 = vmatpush1.bf16.msra.mxu0 0
        %4014 = vmatprep.mubr.bf16.mxu0 0
        %4015 = vmatmul.mubr.bf16.gmra.mrb[0].mxu0 %v3237
        %v4016 = vpop.f32.mrb[0].mxu0
        %v4017 = vadd.f32 0.0, %v4016
        %v4018 = vpop.f32.mrb[0].mxu0
        %v4019 = vadd.f32 0.0, %v4018
        %v4020 = vpop.f32.mrb[0].mxu0
        %v4021 = vadd.f32 0.0, %v4020
        %v4022 = vpop.f32.mrb[0].mxu0
        %v4023 = vadd.f32 0.0, %v4022
        %4024 = vdwg.mxu0
        %v4025 = vadd.f32 %v3065, %v3974
        %v4026 = vadd.f32 %v3067, %v3976
        %v4027 = vadd.f32 %v3108, %v4017
        %v4028 = vadd.f32 %v3110, %v4019
        %v4029 = vadd.f32 %v3069, %v3978
        %v4030 = vadd.f32 %v3071, %v3980
        %v4031 = vadd.f32 %v3112, %v4021
        %v4032 = vadd.f32 %v3114, %v4023
        %v4033 = vld [vmem:[%s498] sm:$0xff]
        %v4034 = vld [vmem:[%s498 + $0x8] sm:$0xff]
        %v4035 = vpack.c.bf16 %v4034, %v4033
        %v4036 = vld [vmem:[%s7] sm:$0xf]
        %v4037 = vld [vmem:[%s7 + $0x4] sm:$0xf]
        %v4038 = vld [vmem:[%s7 + $0x8] sm:$0xf]
        %v4039 = vld [vmem:[%s7 + $0xc] sm:$0xf]
        %v4040 = vld [vmem:[%s11] sm:$0xf]
        %v4041 = vld [vmem:[%s11 + $0x4] sm:$0xf]
        %v4046 = vunpack.c.l.b16 %v4036
        %v4047 = vunpack.c.l.b16 %v4037
        %v4048 = vunpack.c.l.b16 %v4038
        %v4049 = vunpack.c.l.b16 %v4039
        %v4050 = vpack.c.b16 %v4047, %v4046
        %v4051 = vpack.c.b16 %v4049, %v4048
        %v4055 = vsel %vm2088, %v4035, 0
        %4057 = vmatprep.subr.bf16.mxu0 0
        %4058 = vmatpush1.bf16.msra.mxu0 %v4050
        %4059 = vmatprep.subr.bf16.mxu0 0
        %4060 = vmatpush1.bf16.msra.mxu0 %v4051
        %4061 = vmatprep.subr.bf16.mxu0 0
        %4062 = vmatpush1.bf16.msra.mxu0 0
        %4063 = vmatprep.subr.bf16.mxu0 0
        %4064 = vmatpush1.bf16.msra.mxu0 0
        %4065 = vmatprep.subr.bf16.mxu0 0
        %4066 = vmatpush1.bf16.msra.mxu0 0
        %4067 = vmatprep.subr.bf16.mxu0 0
        %4068 = vmatpush1.bf16.msra.mxu0 0
        %4069 = vmatprep.subr.bf16.mxu0 0
        %4070 = vmatpush1.bf16.msra.mxu0 0
        %4071 = vmatprep.subr.bf16.mxu0 0
        %4072 = vmatpush1.bf16.msra.mxu0 0
        %4073 = vmatprep.subr.bf16.mxu0 0
        %4074 = vmatpush1.bf16.msra.mxu0 0
        %4075 = vmatprep.subr.bf16.mxu0 0
        %4076 = vmatpush1.bf16.msra.mxu0 0
        %4077 = vmatprep.subr.bf16.mxu0 0
        %4078 = vmatpush1.bf16.msra.mxu0 0
        %4079 = vmatprep.subr.bf16.mxu0 0
        %4080 = vmatpush1.bf16.msra.mxu0 0
        %4081 = vmatprep.subr.bf16.mxu0 0
        %4082 = vmatpush1.bf16.msra.mxu0 0
        %4083 = vmatprep.subr.bf16.mxu0 0
        %4084 = vmatpush1.bf16.msra.mxu0 0
        %4085 = vmatprep.subr.bf16.mxu0 0
        %4086 = vmatpush1.bf16.msra.mxu0 0
        %4087 = vmatprep.subr.bf16.mxu0 0
        %4088 = vmatpush1.bf16.msra.mxu0 0
        %4089 = vmatprep.mubr.bf16.mxu0 0
        %4090 = vmatmul.mubr.bf16.gmra.mrb[0].mxu0 %v4055
        %v4091 = vpop.f32.mrb[0].mxu0
        %v4092 = vadd.f32 0.0, %v4091
        %v4093 = vpop.f32.mrb[0].mxu0
        %v4094 = vpop.f32.mrb[0].mxu0
        %v4095 = vadd.f32 0.0, %v4094
        %v4096 = vpop.f32.mrb[0].mxu0
        %4097 = vdwg.mxu0
        %v4100 = vcombine.high %v4092, %v4092
        %v4101 = vcombine.high %v4095, %v4095
        %v4104 = vpack.c.bf16 %v4092, %v4092
        %v4105 = vpack.c.bf16 %v4100, %v4100
        %v4106 = vpack.c.bf16 %v4095, %v4095
        %v4107 = vpack.c.bf16 %v4101, %v4101
        %v4110 = vunpack.c.l.b16 %v4040
        %v4111 = vunpack.c.l.b16 %v4041
        %v4112 = vpack.c.b16 %v4111, %v4110
        %vm4113 = vcmask 31744
        %v4115 = vsel %vm4113, %v4112, 0
        %vm4117 = vcmask 1041408
        %v4119 = vsel %vm4117, %v4104, 0
        %4121 = vmatprep.subr.bf16.mxu0 0
        %4122 = vmatpush1.bf16.msra.mxu0 %v4119
        %4123 = vmatprep.subr.bf16.mxu0 0
        %4124 = vmatpush1.bf16.msra.mxu0 0
        %4125 = vmatprep.subr.bf16.mxu0 0
        %4126 = vmatpush1.bf16.msra.mxu0 0
        %4127 = vmatprep.subr.bf16.mxu0 0
        %4128 = vmatpush1.bf16.msra.mxu0 0
        %4129 = vmatprep.subr.bf16.mxu0 0
        %4130 = vmatpush1.bf16.msra.mxu0 0
        %4131 = vmatprep.subr.bf16.mxu0 0
        %4132 = vmatpush1.bf16.msra.mxu0 0
        %4133 = vmatprep.subr.bf16.mxu0 0
        %4134 = vmatpush1.bf16.msra.mxu0 0
        %4135 = vmatprep.subr.bf16.mxu0 0
        %4136 = vmatpush1.bf16.msra.mxu0 0
        %4137 = vmatprep.subr.bf16.mxu0 0
        %4138 = vmatpush1.bf16.msra.mxu0 0
        %4139 = vmatprep.subr.bf16.mxu0 0
        %4140 = vmatpush1.bf16.msra.mxu0 0
        %4141 = vmatprep.subr.bf16.mxu0 0
        %4142 = vmatpush1.bf16.msra.mxu0 0
        %4143 = vmatprep.subr.bf16.mxu0 0
        %4144 = vmatpush1.bf16.msra.mxu0 0
        %4145 = vmatprep.subr.bf16.mxu0 0
        %4146 = vmatpush1.bf16.msra.mxu0 0
        %4147 = vmatprep.subr.bf16.mxu0 0
        %4148 = vmatpush1.bf16.msra.mxu0 0
        %4149 = vmatprep.subr.bf16.mxu0 0
        %4150 = vmatpush1.bf16.msra.mxu0 0
        %4151 = vmatprep.subr.bf16.mxu0 0
        %4152 = vmatpush1.bf16.msra.mxu0 0
        %4153 = vmatprep.mubr.bf16.mxu0 0
        %4154 = vmatmul.mubr.bf16.gmra.mrb[0].mxu0 %v4115
        %v4155 = vpop.f32.mrb[0].mxu0
        %v4156 = vadd.f32 0.0, %v4155
        %v4157 = vpop.f32.mrb[0].mxu0
        %v4158 = vpop.f32.mrb[0].mxu0
        %v4159 = vadd.f32 0.0, %v4158
        %v4160 = vpop.f32.mrb[0].mxu0
        %4161 = vdwg.mxu0
        %v4163 = vsel %vm4117, %v4105, 0
        %4165 = vmatprep.subr.bf16.mxu0 0
        %4166 = vmatpush1.bf16.msra.mxu0 %v4163
        %4167 = vmatprep.subr.bf16.mxu0 0
        %4168 = vmatpush1.bf16.msra.mxu0 0
        %4169 = vmatprep.subr.bf16.mxu0 0
        %4170 = vmatpush1.bf16.msra.mxu0 0
        %4171 = vmatprep.subr.bf16.mxu0 0
        %4172 = vmatpush1.bf16.msra.mxu0 0
        %4173 = vmatprep.subr.bf16.mxu0 0
        %4174 = vmatpush1.bf16.msra.mxu0 0
        %4175 = vmatprep.subr.bf16.mxu0 0
        %4176 = vmatpush1.bf16.msra.mxu0 0
        %4177 = vmatprep.subr.bf16.mxu0 0
        %4178 = vmatpush1.bf16.msra.mxu0 0
        %4179 = vmatprep.subr.bf16.mxu0 0
        %4180 = vmatpush1.bf16.msra.mxu0 0
        %4181 = vmatprep.subr.bf16.mxu0 0
        %4182 = vmatpush1.bf16.msra.mxu0 0
        %4183 = vmatprep.subr.bf16.mxu0 0
        %4184 = vmatpush1.bf16.msra.mxu0 0
        %4185 = vmatprep.subr.bf16.mxu0 0
        %4186 = vmatpush1.bf16.msra.mxu0 0
        %4187 = vmatprep.subr.bf16.mxu0 0
        %4188 = vmatpush1.bf16.msra.mxu0 0
        %4189 = vmatprep.subr.bf16.mxu0 0
        %4190 = vmatpush1.bf16.msra.mxu0 0
        %4191 = vmatprep.subr.bf16.mxu0 0
        %4192 = vmatpush1.bf16.msra.mxu0 0
        %4193 = vmatprep.subr.bf16.mxu0 0
        %4194 = vmatpush1.bf16.msra.mxu0 0
        %4195 = vmatprep.subr.bf16.mxu0 0
        %4196 = vmatpush1.bf16.msra.mxu0 0
        %4197 = vmatprep.mubr.bf16.mxu0 0
        %4198 = vmatmul.mubr.bf16.gmra.mrb[0].mxu0 %v4115
        %v4199 = vpop.f32.mrb[0].mxu0
        %v4200 = vadd.f32 0.0, %v4199
        %v4201 = vpop.f32.mrb[0].mxu0
        %v4202 = vpop.f32.mrb[0].mxu0
        %v4203 = vadd.f32 0.0, %v4202
        %v4204 = vpop.f32.mrb[0].mxu0
        %4205 = vdwg.mxu0
        %v4207 = vsel %vm4117, %v4106, 0
        %4209 = vmatprep.subr.bf16.mxu0 0
        %4210 = vmatpush1.bf16.msra.mxu0 %v4207
        %4211 = vmatprep.subr.bf16.mxu0 0
        %4212 = vmatpush1.bf16.msra.mxu0 0
        %4213 = vmatprep.subr.bf16.mxu0 0
        %4214 = vmatpush1.bf16.msra.mxu0 0
        %4215 = vmatprep.subr.bf16.mxu0 0
        %4216 = vmatpush1.bf16.msra.mxu0 0
        %4217 = vmatprep.subr.bf16.mxu0 0
        %4218 = vmatpush1.bf16.msra.mxu0 0
        %4219 = vmatprep.subr.bf16.mxu0 0
        %4220 = vmatpush1.bf16.msra.mxu0 0
        %4221 = vmatprep.subr.bf16.mxu0 0
        %4222 = vmatpush1.bf16.msra.mxu0 0
        %4223 = vmatprep.subr.bf16.mxu0 0
        %4224 = vmatpush1.bf16.msra.mxu0 0
        %4225 = vmatprep.subr.bf16.mxu0 0
        %4226 = vmatpush1.bf16.msra.mxu0 0
        %4227 = vmatprep.subr.bf16.mxu0 0
        %4228 = vmatpush1.bf16.msra.mxu0 0
        %4229 = vmatprep.subr.bf16.mxu0 0
        %4230 = vmatpush1.bf16.msra.mxu0 0
        %4231 = vmatprep.subr.bf16.mxu0 0
        %4232 = vmatpush1.bf16.msra.mxu0 0
        %4233 = vmatprep.subr.bf16.mxu0 0
        %4234 = vmatpush1.bf16.msra.mxu0 0
        %4235 = vmatprep.subr.bf16.mxu0 0
        %4236 = vmatpush1.bf16.msra.mxu0 0
        %4237 = vmatprep.subr.bf16.mxu0 0
        %4238 = vmatpush1.bf16.msra.mxu0 0
        %4239 = vmatprep.subr.bf16.mxu0 0
        %4240 = vmatpush1.bf16.msra.mxu0 0
        %4241 = vmatprep.mubr.bf16.mxu0 0
        %4242 = vmatmul.mubr.bf16.gmra.mrb[0].mxu0 %v4115
        %v4243 = vpop.f32.mrb[0].mxu0
        %v4244 = vadd.f32 0.0, %v4243
        %v4245 = vpop.f32.mrb[0].mxu0
        %v4246 = vpop.f32.mrb[0].mxu0
        %v4247 = vadd.f32 0.0, %v4246
        %v4248 = vpop.f32.mrb[0].mxu0
        %4249 = vdwg.mxu0
        %v4251 = vsel %vm4117, %v4107, 0
        %4253 = vmatprep.subr.bf16.mxu0 0
        %4254 = vmatpush1.bf16.msra.mxu0 %v4251
        %4255 = vmatprep.subr.bf16.mxu0 0
        %4256 = vmatpush1.bf16.msra.mxu0 0
        %4257 = vmatprep.subr.bf16.mxu0 0
        %4258 = vmatpush1.bf16.msra.mxu0 0
        %4259 = vmatprep.subr.bf16.mxu0 0
        %4260 = vmatpush1.bf16.msra.mxu0 0
        %4261 = vmatprep.subr.bf16.mxu0 0
        %4262 = vmatpush1.bf16.msra.mxu0 0
        %4263 = vmatprep.subr.bf16.mxu0 0
        %4264 = vmatpush1.bf16.msra.mxu0 0
        %4265 = vmatprep.subr.bf16.mxu0 0
        %4266 = vmatpush1.bf16.msra.mxu0 0
        %4267 = vmatprep.subr.bf16.mxu0 0
        %4268 = vmatpush1.bf16.msra.mxu0 0
        %4269 = vmatprep.subr.bf16.mxu0 0
        %4270 = vmatpush1.bf16.msra.mxu0 0
        %4271 = vmatprep.subr.bf16.mxu0 0
        %4272 = vmatpush1.bf16.msra.mxu0 0
        %4273 = vmatprep.subr.bf16.mxu0 0
        %4274 = vmatpush1.bf16.msra.mxu0 0
        %4275 = vmatprep.subr.bf16.mxu0 0
        %4276 = vmatpush1.bf16.msra.mxu0 0
        %4277 = vmatprep.subr.bf16.mxu0 0
        %4278 = vmatpush1.bf16.msra.mxu0 0
        %4279 = vmatprep.subr.bf16.mxu0 0
        %4280 = vmatpush1.bf16.msra.mxu0 0
        %4281 = vmatprep.subr.bf16.mxu0 0
        %4282 = vmatpush1.bf16.msra.mxu0 0
        %4283 = vmatprep.subr.bf16.mxu0 0
        %4284 = vmatpush1.bf16.msra.mxu0 0
        %4285 = vmatprep.mubr.bf16.mxu0 0
        %4286 = vmatmul.mubr.bf16.gmra.mrb[0].mxu0 %v4115
        %v4287 = vpop.f32.mrb[0].mxu0
        %v4288 = vadd.f32 0.0, %v4287
        %v4289 = vpop.f32.mrb[0].mxu0
        %v4290 = vpop.f32.mrb[0].mxu0
        %v4291 = vadd.f32 0.0, %v4290
        %v4292 = vpop.f32.mrb[0].mxu0
        %4293 = vdwg.mxu0
        %v4294 = vcombine.low %v4156, %v4244
        %v4295 = vcombine.high %v4156, %v4244
        %v4297 = vunpack.c.l.s4 1983009808
        %v4298 = vunpack.c.0.s8 %v4297
        %v4299 = vlaneseq
        %v4300 = vshrl.u32 %v4299, 7
        %v4301 = vsub.s32 %v4298, %v4300
        %v4302 = vrot.slane %v4294, %v4301
        %v4304 = vunpack.c.l.s4 1983009808
        %v4305 = vunpack.c.0.s8 %v4304
        %v4306 = vlaneseq
        %v4307 = vshrl.u32 %v4306, 7
        %v4308 = vsub.s32 %v4305, %v4307
        %v4309 = vrot.slane %v4295, %v4308
        %v4310 = vcombine.low %v4200, %v4288
        %v4311 = vcombine.high %v4200, %v4288
        %v4313 = vunpack.c.l.s4 1983009808
        %v4314 = vunpack.c.0.s8 %v4313
        %v4315 = vlaneseq
        %v4316 = vshrl.u32 %v4315, 7
        %v4317 = vsub.s32 %v4314, %v4316
        %v4318 = vrot.slane %v4310, %v4317
        %v4320 = vunpack.c.l.s4 1983009808
        %v4321 = vunpack.c.0.s8 %v4320
        %v4322 = vlaneseq
        %v4323 = vshrl.u32 %v4322, 7
        %v4324 = vsub.s32 %v4321, %v4323
        %v4325 = vrot.slane %v4311, %v4324
        %v4326 = vcombine.low %v4302, %v4318
        %v4327 = vcombine.high %v4302, %v4318
        %v4329 = vunpack.c.l.s4 1934713408
        %v4330 = vunpack.c.0.s8 %v4329
        %v4331 = vlaneseq
        %v4332 = vshrl.u32 %v4331, 7
        %v4333 = vsub.s32 %v4330, %v4332
        %v4334 = vrot.slane %v4326, %v4333
        %v4336 = vunpack.c.l.s4 1934713408
        %v4337 = vunpack.c.0.s8 %v4336
        %v4338 = vlaneseq
        %v4339 = vshrl.u32 %v4338, 7
        %v4340 = vsub.s32 %v4337, %v4339
        %v4341 = vrot.slane %v4327, %v4340
        %v4342 = vcombine.low %v4309, %v4325
        %v4343 = vcombine.high %v4309, %v4325
        %v4345 = vunpack.c.l.s4 1934713408
        %v4346 = vunpack.c.0.s8 %v4345
        %v4347 = vlaneseq
        %v4348 = vshrl.u32 %v4347, 7
        %v4349 = vsub.s32 %v4346, %v4348
        %v4350 = vrot.slane %v4342, %v4349
        %v4352 = vunpack.c.l.s4 1934713408
        %v4353 = vunpack.c.0.s8 %v4352
        %v4354 = vlaneseq
        %v4355 = vshrl.u32 %v4354, 7
        %v4356 = vsub.s32 %v4353, %v4355
        %v4357 = vrot.slane %v4343, %v4356
        %v4358 = vcombine.high %v4334, 0.0
        %v4359 = vcombine.high %v4341, 0.0
        %v4360 = vcombine.high %v4350, 0.0
        %v4361 = vcombine.high %v4357, 0.0
        %v4362 = vcombine.low %v4159, %v4247
        %v4363 = vcombine.high %v4159, %v4247
        %v4365 = vunpack.c.l.s4 1983009808
        %v4366 = vunpack.c.0.s8 %v4365
        %v4367 = vlaneseq
        %v4368 = vshrl.u32 %v4367, 7
        %v4369 = vsub.s32 %v4366, %v4368
        %v4370 = vrot.slane %v4362, %v4369
        %v4372 = vunpack.c.l.s4 1983009808
        %v4373 = vunpack.c.0.s8 %v4372
        %v4374 = vlaneseq
        %v4375 = vshrl.u32 %v4374, 7
        %v4376 = vsub.s32 %v4373, %v4375
        %v4377 = vrot.slane %v4363, %v4376
        %v4378 = vcombine.low %v4203, %v4291
        %v4379 = vcombine.high %v4203, %v4291
        %v4381 = vunpack.c.l.s4 1983009808
        %v4382 = vunpack.c.0.s8 %v4381
        %v4383 = vlaneseq
        %v4384 = vshrl.u32 %v4383, 7
        %v4385 = vsub.s32 %v4382, %v4384
        %v4386 = vrot.slane %v4378, %v4385
        %v4388 = vunpack.c.l.s4 1983009808
        %v4389 = vunpack.c.0.s8 %v4388
        %v4390 = vlaneseq
        %v4391 = vshrl.u32 %v4390, 7
        %v4392 = vsub.s32 %v4389, %v4391
        %v4393 = vrot.slane %v4379, %v4392
        %v4394 = vcombine.low %v4370, %v4386
        %v4395 = vcombine.high %v4370, %v4386
        %v4397 = vunpack.c.l.s4 1934713408
        %v4398 = vunpack.c.0.s8 %v4397
        %v4399 = vlaneseq
        %v4400 = vshrl.u32 %v4399, 7
        %v4401 = vsub.s32 %v4398, %v4400
        %v4402 = vrot.slane %v4394, %v4401
        %v4404 = vunpack.c.l.s4 1934713408
        %v4405 = vunpack.c.0.s8 %v4404
        %v4406 = vlaneseq
        %v4407 = vshrl.u32 %v4406, 7
        %v4408 = vsub.s32 %v4405, %v4407
        %v4409 = vrot.slane %v4395, %v4408
        %v4410 = vcombine.low %v4377, %v4393
        %v4411 = vcombine.high %v4377, %v4393
        %v4413 = vunpack.c.l.s4 1934713408
        %v4414 = vunpack.c.0.s8 %v4413
        %v4415 = vlaneseq
        %v4416 = vshrl.u32 %v4415, 7
        %v4417 = vsub.s32 %v4414, %v4416
        %v4418 = vrot.slane %v4410, %v4417
        %v4420 = vunpack.c.l.s4 1934713408
        %v4421 = vunpack.c.0.s8 %v4420
        %v4422 = vlaneseq
        %v4423 = vshrl.u32 %v4422, 7
        %v4424 = vsub.s32 %v4421, %v4423
        %v4425 = vrot.slane %v4411, %v4424
        %v4426 = vcombine.high %v4402, 0.0
        %v4427 = vcombine.high %v4409, 0.0
        %v4428 = vcombine.high %v4418, 0.0
        %v4429 = vcombine.high %v4425, 0.0
        %4431 = vrot.lane.b32.xlu0 %v4358, 32
        %v4432 = vpop.permute.xlu0 %4431
        %4435 = vrot.lane.b32.xlu0 %v4341, 64
        %v4436 = vpop.permute.xlu0 %4435
        %4439 = vrot.lane.b32.xlu0 %v4359, 96
        %v4440 = vpop.permute.xlu0 %4439
        %4443 = vrot.lane.b32.xlu0 %v4360, 32
        %v4444 = vpop.permute.xlu0 %4443
        %4447 = vrot.lane.b32.xlu0 %v4357, 64
        %v4448 = vpop.permute.xlu0 %4447
        %4451 = vrot.lane.b32.xlu0 %v4361, 96
        %v4452 = vpop.permute.xlu0 %4451
        %4455 = vrot.lane.b32.xlu0 %v4426, 32
        %v4456 = vpop.permute.xlu0 %4455
        %4459 = vrot.lane.b32.xlu0 %v4409, 64
        %v4460 = vpop.permute.xlu0 %4459
        %4463 = vrot.lane.b32.xlu0 %v4427, 96
        %v4464 = vpop.permute.xlu0 %4463
        %4467 = vrot.lane.b32.xlu0 %v4428, 32
        %v4468 = vpop.permute.xlu0 %4467
        %4471 = vrot.lane.b32.xlu0 %v4425, 64
        %v4472 = vpop.permute.xlu0 %4471
        %4475 = vrot.lane.b32.xlu0 %v4429, 96
        %v4476 = vpop.permute.xlu0 %4475
        %v4478 = vsel %vm2088, %v4334, %v4432
        %v4479 = vsel %vm2091, %v4478, %v4436
        %v4480 = vsel %vm2094, %v4479, %v4440
        %v4481 = vsel %vm2088, %v4350, %v4444
        %v4482 = vsel %vm2091, %v4481, %v4448
        %v4483 = vsel %vm2094, %v4482, %v4452
        %v4484 = vsel %vm2088, %v4402, %v4456
        %v4485 = vsel %vm2091, %v4484, %v4460
        %v4486 = vsel %vm2094, %v4485, %v4464
        %v4487 = vsel %vm2088, %v4418, %v4468
        %v4488 = vsel %vm2091, %v4487, %v4472
        %v4489 = vsel %vm2094, %v4488, %v4476
        %v4490 = vpack.c.bf16 %v4480, %v4480
        %v4491 = vpack.c.bf16 %v4483, %v4483
        %v4492 = vpack.c.bf16 %v4486, %v4486
        %v4493 = vpack.c.bf16 %v4489, %v4489
        %v4495 = vsel %vm4117, %v4490, 0
        %v4498 = vsel %vm4117, %v4491, 0
        %v4501 = vsel %vm4117, %v4492, 0
        %v4504 = vsel %vm4117, %v4493, 0
        %4506 = vmatprep.subr.bf16.mxu0 %v4498
        %4507 = vmatpush1.bf16.msra.mxu0 %v4495
        %4508 = vmatprep.subr.bf16.mxu0 0
        %4509 = vmatpush1.bf16.msra.mxu0 0
        %4510 = vmatprep.subr.bf16.mxu0 0
        %4511 = vmatpush1.bf16.msra.mxu0 0
        %4512 = vmatprep.subr.bf16.mxu0 0
        %4513 = vmatpush1.bf16.msra.mxu0 0
        %4514 = vmatprep.subr.bf16.mxu0 0
        %4515 = vmatpush1.bf16.msra.mxu0 0
        %4516 = vmatprep.subr.bf16.mxu0 0
        %4517 = vmatpush1.bf16.msra.mxu0 0
        %4518 = vmatprep.subr.bf16.mxu0 0
        %4519 = vmatpush1.bf16.msra.mxu0 0
        %4520 = vmatprep.subr.bf16.mxu0 0
        %4521 = vmatpush1.bf16.msra.mxu0 0
        %4522 = vmatprep.subr.bf16.mxu0 0
        %4523 = vmatpush1.bf16.msra.mxu0 0
        %4524 = vmatprep.subr.bf16.mxu0 0
        %4525 = vmatpush1.bf16.msra.mxu0 0
        %4526 = vmatprep.subr.bf16.mxu0 0
        %4527 = vmatpush1.bf16.msra.mxu0 0
        %4528 = vmatprep.subr.bf16.mxu0 0
        %4529 = vmatpush1.bf16.msra.mxu0 0
        %4530 = vmatprep.subr.bf16.mxu0 0
        %4531 = vmatpush1.bf16.msra.mxu0 0
        %4532 = vmatprep.subr.bf16.mxu0 0
        %4533 = vmatpush1.bf16.msra.mxu0 0
        %4534 = vmatprep.subr.bf16.mxu0 0
        %4535 = vmatpush1.bf16.msra.mxu0 0
        %4536 = vmatprep.subr.bf16.mxu0 0
        %4537 = vmatpush1.bf16.msra.mxu0 0
        %4538 = vmatprep.mubr.bf16.mxu0 0
        %4539 = vmatmul.mubr.bf16.gmra.mrb[0].mxu0 %v4115
        %v4540 = vpop.f32.mrb[0].mxu0
        %v4541 = vadd.f32 0.0, %v4540
        %v4542 = vpop.f32.mrb[0].mxu0
        %v4543 = vadd.f32 0.0, %v4542
        %v4544 = vpop.f32.mrb[0].mxu0
        %v4545 = vadd.f32 0.0, %v4544
        %v4546 = vpop.f32.mrb[0].mxu0
        %v4547 = vadd.f32 0.0, %v4546
        %4548 = vdwg.mxu0
        %4549 = vmatprep.subr.bf16.mxu0 %v4504
        %4550 = vmatpush1.bf16.msra.mxu0 %v4501
        %4551 = vmatprep.subr.bf16.mxu0 0
        %4552 = vmatpush1.bf16.msra.mxu0 0
        %4553 = vmatprep.subr.bf16.mxu0 0
        %4554 = vmatpush1.bf16.msra.mxu0 0
        %4555 = vmatprep.subr.bf16.mxu0 0
        %4556 = vmatpush1.bf16.msra.mxu0 0
        %4557 = vmatprep.subr.bf16.mxu0 0
        %4558 = vmatpush1.bf16.msra.mxu0 0
        %4559 = vmatprep.subr.bf16.mxu0 0
        %4560 = vmatpush1.bf16.msra.mxu0 0
        %4561 = vmatprep.subr.bf16.mxu0 0
        %4562 = vmatpush1.bf16.msra.mxu0 0
        %4563 = vmatprep.subr.bf16.mxu0 0
        %4564 = vmatpush1.bf16.msra.mxu0 0
        %4565 = vmatprep.subr.bf16.mxu0 0
        %4566 = vmatpush1.bf16.msra.mxu0 0
        %4567 = vmatprep.subr.bf16.mxu0 0
        %4568 = vmatpush1.bf16.msra.mxu0 0
        %4569 = vmatprep.subr.bf16.mxu0 0
        %4570 = vmatpush1.bf16.msra.mxu0 0
        %4571 = vmatprep.subr.bf16.mxu0 0
        %4572 = vmatpush1.bf16.msra.mxu0 0
        %4573 = vmatprep.subr.bf16.mxu0 0
        %4574 = vmatpush1.bf16.msra.mxu0 0
        %4575 = vmatprep.subr.bf16.mxu0 0
        %4576 = vmatpush1.bf16.msra.mxu0 0
        %4577 = vmatprep.subr.bf16.mxu0 0
        %4578 = vmatpush1.bf16.msra.mxu0 0
        %4579 = vmatprep.subr.bf16.mxu0 0
        %4580 = vmatpush1.bf16.msra.mxu0 0
        %4581 = vmatprep.mubr.bf16.mxu0 0
        %4582 = vmatmul.mubr.bf16.gmra.mrb[0].mxu0 %v4115
        %v4583 = vpop.f32.mrb[0].mxu0
        %v4584 = vadd.f32 0.0, %v4583
        %v4585 = vpop.f32.mrb[0].mxu0
        %v4586 = vadd.f32 0.0, %v4585
        %v4587 = vpop.f32.mrb[0].mxu0
        %v4588 = vadd.f32 0.0, %v4587
        %v4589 = vpop.f32.mrb[0].mxu0
        %v4590 = vadd.f32 0.0, %v4589
        %4591 = vdwg.mxu0
        %v4592 = vadd.f32 %v4025, %v4541
        %v4593 = vadd.f32 %v4026, %v4543
        %v4594 = vadd.f32 %v4027, %v4584
        %v4595 = vadd.f32 %v4028, %v4586
        %v4596 = vadd.f32 %v4029, %v4545
        %v4597 = vadd.f32 %v4030, %v4547
        %v4598 = vadd.f32 %v4031, %v4588
        %v4599 = vadd.f32 %v4032, %v4590
        %v4600 = vld [vmem:[%s12] sm:$0xf]
        %v4602 = vlaneseq
        %v4603 = vshrl.u32 %v4602, 7
        %v4604 = vsub.s32 0, %v4603
        %v4605 = vrot.slane %v4600, %v4604
        %v4606 = vlaneseq
        %v4607 = vshrl.u32 %v4606, 7
        %v4608 = vsub.s32 1, %v4607
        %v4609 = vrot.slane %v4600, %v4608
        %v4610 = vlaneseq
        %v4611 = vshrl.u32 %v4610, 7
        %v4612 = vsub.s32 2, %v4611
        %v4613 = vrot.slane %v4600, %v4612
        %v4614 = vlaneseq
        %v4615 = vshrl.u32 %v4614, 7
        %v4616 = vsub.s32 3, %v4615
        %v4617 = vrot.slane %v4600, %v4616
        %v4622 = vadd.f32 %v4592, %v4605
        %v4623 = vadd.f32 %v4593, %v4609
        %v4624 = vadd.f32 %v4594, %v4613
        %v4625 = vadd.f32 %v4595, %v4617
        %v4626 = vadd.f32 %v4596, %v4605
        %v4627 = vadd.f32 %v4597, %v4609
        %v4628 = vadd.f32 %v4598, %v4613
        %v4629 = vadd.f32 %v4599, %v4617
        %v4630 = vmax.f32 %v4622, 0.0
        %v4631 = vmax.f32 %v4623, 0.0
        %v4632 = vmax.f32 %v4624, 0.0
        %v4633 = vmax.f32 %v4625, 0.0
        %v4634 = vmax.f32 %v4626, 0.0
        %v4635 = vmax.f32 %v4627, 0.0
        %v4636 = vmax.f32 %v4628, 0.0
        %v4637 = vmax.f32 %v4629, 0.0
        %4638 = vst [vmem:[%s478] sm:$0xff] %v4630
        %4639 = vst [vmem:[%s478 + $0x8] sm:$0xff] %v4631
        %4640 = vst [vmem:[%s478 + $0x10] sm:$0xff] %v4632
        %4641 = vst [vmem:[%s478 + $0x18] sm:$0xff] %v4633
        %4642 = vst [vmem:[%s478 + $0x20] sm:$0xff] %v4634
        %4643 = vst [vmem:[%s478 + $0x28] sm:$0xff] %v4635
        %4644 = vst [vmem:[%s478 + $0x30] sm:$0xff] %v4636
        %4645 = vst [vmem:[%s478 + $0x38] sm:$0xff] %v4637
        %s4646 = sand.u32 %s328, 1
        %s4647 = scalar_lea.sflag [#allocation3], %s4646
        %s4648 = sand.u32 %s328, 1
        %s4649 = smul.addr %s4648, 64
        %s4650 = scalar_lea.vmem [#allocation2], %s4649
        // Predicated region
        $region73: #{tpu_custom_call.1} parent=71 // pred_check
          %p4651 = pneg %p338
        $region74: #{tpu_custom_call.1} parent=71 // pred_check_branch
          %4653 = sbr.rel (%p4651) target = $region76
        $region75: #{tpu_custom_call.1} parent=71 // pred_region
          %s4655 = ssub.s32 1024, 1024
          %4656 = vsyncadd %s4647, %s4655
          %s4657 = smul.addr %s27, 8
          %s4658 = smul.addr %s4657, 128
          %s4659 = scalar_lea.hbm %s13, %s4658
          %s4660 = sshll.u32 %s4650, 4
          %s4661 = int_to_ptr.vmem [resolvable:$true] %s4660
          %4666 = dma.vmem_to_hbm [thread:$0]  %s4661, 1024, %s4659, %s4647, 512, 512, 32
        $region76: #{tpu_custom_call.1} parent=71 // pred_fallthru
          _
      $region72: #{tpu_custom_call.1} parent=5 // pred_fallthru
        _
      %p4667 = scmp.le.s32.totalorder 2, %s22
      // Predicated region
      $region77: #{tpu_custom_call.1} parent=5 // pred_check
        %p4668 = pneg %p4667
      $region78: #{tpu_custom_call.1} parent=5 // pred_check_branch
        %4670 = sbr.rel (%p4668) target = $region80
      $region79: #{tpu_custom_call.1} parent=5 // pred_region
        %s4671 = ssub.s32 %s22, 2
        // Predicated region
        $region81: #{tpu_custom_call.1} parent=79 // pred_check
          %p4672 = pneg %p344
        $region82: #{tpu_custom_call.1} parent=79 // pred_check_branch
          %4674 = sbr.rel (%p4672) target = $region84
        $region83: #{tpu_custom_call.1} parent=79 // pred_region
          %s4675 = sand.u32 %s329, 1
          %s4676 = scalar_lea.sflag [#allocation3], %s4675
          %s4677 = sand.u32 %s329, 1
          %s4678 = smul.addr %s4677, 64
          %s4679 = scalar_lea.vmem [#allocation2], %s4678
          %4680 = dma.done %s4676, 1024
        $region84: #{tpu_custom_call.1} parent=79 // pred_fallthru
          _
      $region80: #{tpu_custom_call.1} parent=5 // pred_fallthru
        _
    $region6: #{tpu_custom_call.1} parent=1 // loop_footer
      %s26 = sadd.s32 1, %s22
    $region7: #{tpu_custom_call.1} parent=1 // loop_footer_branch
      %21 = sbr.rel target = $region3
    $region8: #{tpu_custom_call.1} parent=1 // loop_exit
      _
    %4681 = vsyncpa [#allocation3], 1
    %s4682 = scalar_lea.sflag [#allocation3], 1
    %4683 = vsyncpa %s4682, 1

</llo_original>
